<compile_context>
chip_gen: v5e
topology: v5e:2x2
jax: 0.10.0
libtpu: 0.0.40
codegen_flags: <defaults>
</compile_context>

<pallas_src>
import functools

import jax
import jax.numpy as jnp
from jax.experimental import pallas as pl
from jax.experimental.pallas import tpu as pltpu

E_PAD = 128  # lane width: every channel dim is padded to one full vreg lane dimension


def _round_up(x, m):
    return (x + m - 1) // m * m


def _context_encoder_kernel(ids_ref,        # [B_pad*L] int32 (SMEM, scalar prefetch)
                            embed_ref,      # [V, E_PAD] f32 (VMEM resident)
                            conv_w_ref,     # [4, 3, E_PAD, E_PAD] bf16 (tap-split layout)
                            conv_b_ref,     # [4, E_PAD] f32
                            trans_w_ref,    # [E_PAD, E_PAD] bf16
                            trans_b_ref,    # [1, E_PAD] f32
                            out_ref,        # [1, B_blk, E_PAD] f32 block
                            x_ref,          # [T, E_PAD] f32 scratch (batched zero-halo slab)
                            *, L, B_blk, S, T, lens):
    E = x_ref.shape[-1]
    R = B_blk * S                     # matmul M dimension (valid rows live at [b*S, b*S+out_len))
    half = R // 2
    g = pl.program_id(0)
    ids_base = g * (B_blk * L)

    # --- zero the whole slab once per step (left halos, right halos, inter-element gaps, tail) ---
    x_ref[...] = jnp.zeros((T, E), jnp.float32)

    # --- embedding gather: dynamic row reads from the VMEM-resident table (no DMA descriptors) ---
    for b in range(B_blk):
        for l in range(L):
            tok = ids_ref[ids_base + b * L + l]
            x_ref[pl.ds(b * S + 2 + l, 1), :] = embed_ref[pl.ds(tok, 1), :]

    # --- even/odd row-selection matrices for MaxPool compaction (built once per step, VPU) ---
    rid = jax.lax.broadcasted_iota(jnp.int32, (half, R), 0)
    cid = jax.lax.broadcasted_iota(jnp.int32, (half, R), 1)
    sel_even = (cid == 2 * rid).astype(jnp.bfloat16)          # [R/2, R], picks rows 0,2,4,...
    sel_odd = (cid == 2 * rid + 1).astype(jnp.bfloat16)       # [R/2, R], picks rows 1,3,5,...

    # --- 4 x [Conv1d(E,E,k=3,pad=2) + ReLU (+ MaxPool1d(2,2) for layers 0..2)], all batched ---
    y = None
    for layer in range(4):
        out_len = lens[layer] + 2                              # L_in + 2*pad - k + 1
        xb = x_ref[...].astype(jnp.bfloat16)                   # matmul operand; VPU math stays f32
        # tap-split conv: three accumulating K=128 matmuls, M = R = B_blk*S
        y = jnp.dot(xb[0:R, :], conv_w_ref[layer, 0], preferred_element_type=jnp.float32)
        y = y + jnp.dot(xb[1:R + 1, :], conv_w_ref[layer, 1], preferred_element_type=jnp.float32)
        y = y + jnp.dot(xb[2:R + 2, :], conv_w_ref[layer, 2], preferred_element_type=jnp.float32)
        y = jnp.maximum(y + conv_b_ref[layer][None, :], 0.0)   # bias + ReLU (f32), [R, E]
        # element b's valid outputs are rows [b*S, b*S+out_len); other rows are ignored garbage.

        if layer == 3:
            break                                              # last layer: no pool, no write-back

        # MaxPool1d(2,2), floor mode: compact even/odd rows with tiny MXU matmuls (no VMEM
        # round-trip of y), then write only pooled rows + a fresh 2-row right halo back.
        yb = y.astype(jnp.bfloat16)
        pooled = jnp.maximum(
            jnp.dot(sel_even, yb, preferred_element_type=jnp.float32),
            jnp.dot(sel_odd, yb, preferred_element_type=jnp.float32))   # [R/2, E] f32
        n = out_len // 2                                       # == lens[layer + 1]
        for b in range(B_blk):
            x_ref[pl.ds(b * S + 2, n), :] = pooled[b * (S // 2): b * (S // 2) + n, :]
            x_ref[pl.ds(b * S + 2 + n, 2), :] = jnp.zeros((2, E), jnp.float32)

    # --- global max over time (valid rows only), Linear, Tanh (lane-dense 128-wide store) ---
    fin_len = lens[3] + 2
    maxes = [jnp.max(y[b * S: b * S + fin_len, :], axis=0, keepdims=True)
             for b in range(B_blk)]
    x_max = jnp.concatenate(maxes, axis=0)                     # [B_blk, E] f32
    o = jnp.dot(x_max.astype(jnp.bfloat16), trans_w_ref[...],
                preferred_element_type=jnp.float32) + trans_b_ref[...]
    out_ref[...] = jnp.tanh(o).reshape(1, B_blk, E)


def prepare_params(embed_table, conv_w, conv_b, trans_w, trans_b):
    """One-time weight padding/casting (hoisted out of the per-call forward)."""
    _, E = embed_table.shape
    pe = E_PAD - E
    assert pe >= 0, "title_emb_dim > 128 would need channel tiling"
    embed_p = jnp.pad(embed_table.astype(jnp.float32), ((0, 0), (0, pe)))
    conv_w_p = jnp.pad(conv_w, ((0, 0), (0, 0), (0, pe), (0, pe))).astype(jnp.bfloat16)
    conv_b_p = jnp.pad(conv_b, ((0, 0), (0, pe))).astype(jnp.float32)
    trans_w_p = jnp.pad(trans_w, ((0, pe), (0, pe))).astype(jnp.bfloat16)
    trans_b_p = jnp.pad(trans_b, (0, pe)).reshape(1, E_PAD).astype(jnp.float32)
    return embed_p, conv_w_p, conv_b_p, trans_w_p, trans_b_p


def context_encoder_forward(ids, params, emb_dim, *, block_batch=16):
    embed_p, conv_w_p, conv_b_p, trans_w_p, trans_b_p = params
    B, L = ids.shape

    # batch block: fill the MXU M dim but keep >=2 grid steps so both v7x TCs stay busy
    B_blk = max(1, min(block_batch, B // 2)) if B >= 2 else 1
    B_pad = _round_up(B, B_blk)
    G = B_pad // B_blk

    S = _round_up(L + 4, 8)            # per-element stride inside the slab (2-row halos each side)
    T = B_blk * S + 8                  # slab rows (+8 zero tail so tap slices never go OOB)
    lens = [L]
    for _ in range(3):
        lens.append((lens[-1] + 2) // 2)   # length after conv(+2) then pool(//2)

    ids_flat = jnp.pad(ids.astype(jnp.int32), ((0, B_pad - B), (0, 0))).reshape(-1)

    grid_spec = pltpu.PrefetchScalarGridSpec(
        num_scalar_prefetch=1,                                     # flattened ids -> SMEM
        grid=(G,),                                                 # one step per batch block
        in_specs=[
            pl.BlockSpec(memory_space=pltpu.MemorySpace.VMEM),     # embedding table (resident)
            pl.BlockSpec(memory_space=pltpu.MemorySpace.VMEM),     # conv weights
            pl.BlockSpec(memory_space=pltpu.MemorySpace.VMEM),     # conv biases
            pl.BlockSpec(memory_space=pltpu.MemorySpace.VMEM),     # trans weight
            pl.BlockSpec(memory_space=pltpu.MemorySpace.VMEM),     # trans bias
        ],
        out_specs=pl.BlockSpec((1, B_blk, E_PAD), lambda g, ids: (g, 0, 0)),
        scratch_shapes=[pltpu.VMEM((T, E_PAD), jnp.float32)],
    )

    out = pl.pallas_call(
        functools.partial(_context_encoder_kernel, L=L, B_blk=B_blk, S=S, T=T,
                          lens=tuple(lens)),
        out_shape=jax.ShapeDtypeStruct((G, B_blk, E_PAD), jnp.float32),
        grid_spec=grid_spec,
        compiler_params=pltpu.CompilerParams(
            dimension_semantics=("parallel",),   # batch-block axis shards across TCs (v7x)
            vmem_limit_bytes=32 * 1024 * 1024,
        ),
    )(ids_flat, embed_p, conv_w_p, conv_b_p, trans_w_p, trans_b_p)

    return out.reshape(B_pad, E_PAD)[:B, :emb_dim]               # strip batch + lane padding


def _reference_forward(ids, embed_table, conv_w, conv_b, trans_w, trans_b):
    # pure-JAX reference mirroring the PyTorch forward semantics and the kernel's bf16
    # matmul-operand / f32-accumulation numerics.
    x = embed_table[ids]                                               # [B, L, E] f32
    for l in range(4):
        cur_len = x.shape[1]
        out_len = cur_len + 2
        x_pad = jnp.pad(x, ((0, 0), (2, 2), (0, 0)))
        xb = x_pad.astype(jnp.bfloat16)
        wb = conv_w[l].astype(jnp.bfloat16)                            # [3, E, E]
        y = sum(jnp.einsum('ble,eo->blo', xb[:, k:k + out_len, :], wb[k],
                           preferred_element_type=jnp.float32)
                for k in range(3)) + conv_b[l][None, None, :]
        y = jnp.maximum(y, 0.0)
        if l <= 2:
            n = out_len // 2
            y = jnp.maximum(y[:, 0:2 * n:2, :], y[:, 1:2 * n:2, :])
        x = y
    x_max = jnp.max(x, axis=1)
    o = jnp.dot(x_max.astype(jnp.bfloat16), trans_w.astype(jnp.bfloat16),
                preferred_element_type=jnp.float32) + trans_b
    return jnp.tanh(o)


if __name__ == "__main__":
    # small, module-consistent sizes (B chosen so the batch-blocked grid has >=2 steps)
    B, L = 16, 8                # batch of titles, padded token length
    VOCAB = 64                  # tokenizer.vocab_size (synthetic)
    E = 32                      # config.title_emb_dim

    key = jax.random.PRNGKey(0)
    k_ids, k_emb, k_cw, k_cb, k_tw, k_tb = jax.random.split(key, 6)

    ids = jax.random.randint(k_ids, (B, L), 0, VOCAB, dtype=jnp.int32)
    embed_table = 0.1 * jax.random.normal(k_emb, (VOCAB, E), jnp.float32)
    conv_w = 0.1 * jax.random.normal(k_cw, (4, 3, E, E), jnp.float32)   # [layer, tap, E_in, E_out]
    conv_b = 0.1 * jax.random.normal(k_cb, (4, E), jnp.float32)
    trans_w = 0.1 * jax.random.normal(k_tw, (E, E), jnp.float32)        # [E_in, E_out]
    trans_b = 0.1 * jax.random.normal(k_tb, (E,), jnp.float32)

    params = prepare_params(embed_table, conv_w, conv_b, trans_w, trans_b)  # once at "init"
    out = context_encoder_forward(ids, params, emb_dim=E)
    out = jax.block_until_ready(out)

    ref = _reference_forward(ids, embed_table, conv_w, conv_b, trans_w, trans_b)
    assert out.shape == (B, E)
    assert jnp.allclose(out, ref, rtol=1e-3, atol=1e-3), "mismatch vs JAX reference"

    print("KERNEL_OK")
</pallas_src>

<mosaic_0001>
module attributes {stable_mosaic.version = 11 : i64} {
  func.func @_context_encoder_kernel(%arg0: i32, %arg1: memref<128xi32, #tpu.memory_space<smem>>, %arg2: memref<64x128xf32, #tpu.memory_space<vmem>>, %arg3: memref<4x3x128x128xbf16, #tpu.memory_space<vmem>>, %arg4: memref<4x128xf32, #tpu.memory_space<vmem>>, %arg5: memref<128x128xbf16, #tpu.memory_space<vmem>>, %arg6: memref<1x128xf32, #tpu.memory_space<vmem>>, %arg7: memref<1x8x128xf32, #tpu.memory_space<vmem>>, %arg8: memref<136x128xf32, #tpu.memory_space<vmem>>) attributes {dimension_semantics = [#tpu.dimension_semantics<parallel>], iteration_bounds = array<i64: 2>, scalar_prefetch = 1 : i64, scratch_operands = 1 : i64, tpu.core_type = #tpu.core_type<tc>, window_params = [{pipeline_mode = #tpu.pipeline_mode<synchronous>, transform_indices = @transform_0, window_bounds = array<i64: 64, 128>}, {pipeline_mode = #tpu.pipeline_mode<synchronous>, transform_indices = @transform_1, window_bounds = array<i64: 4, 3, 128, 128>}, {pipeline_mode = #tpu.pipeline_mode<synchronous>, transform_indices = @transform_2, window_bounds = array<i64: 4, 128>}, {pipeline_mode = #tpu.pipeline_mode<synchronous>, transform_indices = @transform_3, window_bounds = array<i64: 128, 128>}, {pipeline_mode = #tpu.pipeline_mode<synchronous>, transform_indices = @transform_4, window_bounds = array<i64: 1, 128>}, {transform_indices = @transform_5, window_bounds = array<i64: 1, 8, 128>}]} {
    %c64_i32 = arith.constant 64 : i32
    %0 = arith.muli %arg0, %c64_i32 : i32
    %cst = arith.constant 0.000000e+00 : f32
    %1 = vector.broadcast %cst : f32 to vector<136x128xf32>
    %c0 = arith.constant 0 : index
    %c0_0 = arith.constant 0 : index
    %2 = vector.load %arg8[%c0, %c0_0] : memref<136x128xf32, #tpu.memory_space<vmem>>, vector<136x128xf32>
    tpu.vector_store %arg8[%c0, %c0_0], %1 {strides = array<i32>} : memref<136x128xf32, #tpu.memory_space<vmem>>, vector<136x128xf32>,
    %c0_i32 = arith.constant 0 : i32
    %3 = arith.addi %0, %c0_i32 : i32
    %c0_i32_1 = arith.constant 0 : i32
    %4 = arith.addi %3, %c0_i32_1 : i32
    %5 = arith.index_cast %4 : i32 to index
    %6 = memref.load %arg1[%5] : memref<128xi32, #tpu.memory_space<smem>>
    %7 = arith.index_cast %6 : i32 to index
    %c0_2 = arith.constant 0 : index
    %8 = vector.load %arg2[%7, %c0_2] : memref<64x128xf32, #tpu.memory_space<vmem>>, vector<1x128xf32>
    %c2 = arith.constant 2 : index
    %c0_3 = arith.constant 0 : index
    %9 = vector.load %arg8[%c2, %c0_3] : memref<136x128xf32, #tpu.memory_space<vmem>>, vector<1x128xf32>
    tpu.vector_store %arg8[%c2, %c0_3], %8 {strides = array<i32>} : memref<136x128xf32, #tpu.memory_space<vmem>>, vector<1x128xf32>,
    %c0_i32_4 = arith.constant 0 : i32
    %10 = arith.addi %0, %c0_i32_4 : i32
    %c1_i32 = arith.constant 1 : i32
    %11 = arith.addi %10, %c1_i32 : i32
    %12 = arith.index_cast %11 : i32 to index
    %13 = memref.load %arg1[%12] : memref<128xi32, #tpu.memory_space<smem>>
    %14 = arith.index_cast %13 : i32 to index
    %c0_5 = arith.constant 0 : index
    %15 = vector.load %arg2[%14, %c0_5] : memref<64x128xf32, #tpu.memory_space<vmem>>, vector<1x128xf32>
    %c3 = arith.constant 3 : index
    %c0_6 = arith.constant 0 : index
    %16 = vector.load %arg8[%c3, %c0_6] : memref<136x128xf32, #tpu.memory_space<vmem>>, vector<1x128xf32>
    tpu.vector_store %arg8[%c3, %c0_6], %15 {strides = array<i32>} : memref<136x128xf32, #tpu.memory_space<vmem>>, vector<1x128xf32>,
    %c0_i32_7 = arith.constant 0 : i32
    %17 = arith.addi %0, %c0_i32_7 : i32
    %c2_i32 = arith.constant 2 : i32
    %18 = arith.addi %17, %c2_i32 : i32
    %19 = arith.index_cast %18 : i32 to index
    %20 = memref.load %arg1[%19] : memref<128xi32, #tpu.memory_space<smem>>
    %21 = arith.index_cast %20 : i32 to index
    %c0_8 = arith.constant 0 : index
    %22 = vector.load %arg2[%21, %c0_8] : memref<64x128xf32, #tpu.memory_space<vmem>>, vector<1x128xf32>
    %c4 = arith.constant 4 : index
    %c0_9 = arith.constant 0 : index
    %23 = vector.load %arg8[%c4, %c0_9] : memref<136x128xf32, #tpu.memory_space<vmem>>, vector<1x128xf32>
    tpu.vector_store %arg8[%c4, %c0_9], %22 {strides = array<i32>} : memref<136x128xf32, #tpu.memory_space<vmem>>, vector<1x128xf32>,
    %c0_i32_10 = arith.constant 0 : i32
    %24 = arith.addi %0, %c0_i32_10 : i32
    %c3_i32 = arith.constant 3 : i32
    %25 = arith.addi %24, %c3_i32 : i32
    %26 = arith.index_cast %25 : i32 to index
    %27 = memref.load %arg1[%26] : memref<128xi32, #tpu.memory_space<smem>>
    %28 = arith.index_cast %27 : i32 to index
    %c0_11 = arith.constant 0 : index
    %29 = vector.load %arg2[%28, %c0_11] : memref<64x128xf32, #tpu.memory_space<vmem>>, vector<1x128xf32>
    %c5 = arith.constant 5 : index
    %c0_12 = arith.constant 0 : index
    %30 = vector.load %arg8[%c5, %c0_12] : memref<136x128xf32, #tpu.memory_space<vmem>>, vector<1x128xf32>
    tpu.vector_store %arg8[%c5, %c0_12], %29 {strides = array<i32>} : memref<136x128xf32, #tpu.memory_space<vmem>>, vector<1x128xf32>,
    %c0_i32_13 = arith.constant 0 : i32
    %31 = arith.addi %0, %c0_i32_13 : i32
    %c4_i32 = arith.constant 4 : i32
    %32 = arith.addi %31, %c4_i32 : i32
    %33 = arith.index_cast %32 : i32 to index
    %34 = memref.load %arg1[%33] : memref<128xi32, #tpu.memory_space<smem>>
    %35 = arith.index_cast %34 : i32 to index
    %c0_14 = arith.constant 0 : index
    %36 = vector.load %arg2[%35, %c0_14] : memref<64x128xf32, #tpu.memory_space<vmem>>, vector<1x128xf32>
    %c6 = arith.constant 6 : index
    %c0_15 = arith.constant 0 : index
    %37 = vector.load %arg8[%c6, %c0_15] : memref<136x128xf32, #tpu.memory_space<vmem>>, vector<1x128xf32>
    tpu.vector_store %arg8[%c6, %c0_15], %36 {strides = array<i32>} : memref<136x128xf32, #tpu.memory_space<vmem>>, vector<1x128xf32>,
    %c0_i32_16 = arith.constant 0 : i32
    %38 = arith.addi %0, %c0_i32_16 : i32
    %c5_i32 = arith.constant 5 : i32
    %39 = arith.addi %38, %c5_i32 : i32
    %40 = arith.index_cast %39 : i32 to index
    %41 = memref.load %arg1[%40] : memref<128xi32, #tpu.memory_space<smem>>
    %42 = arith.index_cast %41 : i32 to index
    %c0_17 = arith.constant 0 : index
    %43 = vector.load %arg2[%42, %c0_17] : memref<64x128xf32, #tpu.memory_space<vmem>>, vector<1x128xf32>
    %c7 = arith.constant 7 : index
    %c0_18 = arith.constant 0 : index
    %44 = vector.load %arg8[%c7, %c0_18] : memref<136x128xf32, #tpu.memory_space<vmem>>, vector<1x128xf32>
    tpu.vector_store %arg8[%c7, %c0_18], %43 {strides = array<i32>} : memref<136x128xf32, #tpu.memory_space<vmem>>, vector<1x128xf32>,
    %c0_i32_19 = arith.constant 0 : i32
    %45 = arith.addi %0, %c0_i32_19 : i32
    %c6_i32 = arith.constant 6 : i32
    %46 = arith.addi %45, %c6_i32 : i32
    %47 = arith.index_cast %46 : i32 to index
    %48 = memref.load %arg1[%47] : memref<128xi32, #tpu.memory_space<smem>>
    %49 = arith.index_cast %48 : i32 to index
    %c0_20 = arith.constant 0 : index
    %50 = vector.load %arg2[%49, %c0_20] : memref<64x128xf32, #tpu.memory_space<vmem>>, vector<1x128xf32>
    %c8 = arith.constant 8 : index
    %c0_21 = arith.constant 0 : index
    %51 = vector.load %arg8[%c8, %c0_21] : memref<136x128xf32, #tpu.memory_space<vmem>>, vector<1x128xf32>
    tpu.vector_store %arg8[%c8, %c0_21], %50 {strides = array<i32>} : memref<136x128xf32, #tpu.memory_space<vmem>>, vector<1x128xf32>,
    %c0_i32_22 = arith.constant 0 : i32
    %52 = arith.addi %0, %c0_i32_22 : i32
    %c7_i32 = arith.constant 7 : i32
    %53 = arith.addi %52, %c7_i32 : i32
    %54 = arith.index_cast %53 : i32 to index
    %55 = memref.load %arg1[%54] : memref<128xi32, #tpu.memory_space<smem>>
    %56 = arith.index_cast %55 : i32 to index
    %c0_23 = arith.constant 0 : index
    %57 = vector.load %arg2[%56, %c0_23] : memref<64x128xf32, #tpu.memory_space<vmem>>, vector<1x128xf32>
    %c9 = arith.constant 9 : index
    %c0_24 = arith.constant 0 : index
    %58 = vector.load %arg8[%c9, %c0_24] : memref<136x128xf32, #tpu.memory_space<vmem>>, vector<1x128xf32>
    tpu.vector_store %arg8[%c9, %c0_24], %57 {strides = array<i32>} : memref<136x128xf32, #tpu.memory_space<vmem>>, vector<1x128xf32>,
    %c8_i32 = arith.constant 8 : i32
    %59 = arith.addi %0, %c8_i32 : i32
    %c0_i32_25 = arith.constant 0 : i32
    %60 = arith.addi %59, %c0_i32_25 : i32
    %61 = arith.index_cast %60 : i32 to index
    %62 = memref.load %arg1[%61] : memref<128xi32, #tpu.memory_space<smem>>
    %63 = arith.index_cast %62 : i32 to index
    %c0_26 = arith.constant 0 : index
    %64 = vector.load %arg2[%63, %c0_26] : memref<64x128xf32, #tpu.memory_space<vmem>>, vector<1x128xf32>
    %c18 = arith.constant 18 : index
    %c0_27 = arith.constant 0 : index
    %65 = vector.load %arg8[%c18, %c0_27] : memref<136x128xf32, #tpu.memory_space<vmem>>, vector<1x128xf32>
    tpu.vector_store %arg8[%c18, %c0_27], %64 {strides = array<i32>} : memref<136x128xf32, #tpu.memory_space<vmem>>, vector<1x128xf32>,
    %c8_i32_28 = arith.constant 8 : i32
    %66 = arith.addi %0, %c8_i32_28 : i32
    %c1_i32_29 = arith.constant 1 : i32
    %67 = arith.addi %66, %c1_i32_29 : i32
    %68 = arith.index_cast %67 : i32 to index
    %69 = memref.load %arg1[%68] : memref<128xi32, #tpu.memory_space<smem>>
    %70 = arith.index_cast %69 : i32 to index
    %c0_30 = arith.constant 0 : index
    %71 = vector.load %arg2[%70, %c0_30] : memref<64x128xf32, #tpu.memory_space<vmem>>, vector<1x128xf32>
    %c19 = arith.constant 19 : index
    %c0_31 = arith.constant 0 : index
    %72 = vector.load %arg8[%c19, %c0_31] : memref<136x128xf32, #tpu.memory_space<vmem>>, vector<1x128xf32>
    tpu.vector_store %arg8[%c19, %c0_31], %71 {strides = array<i32>} : memref<136x128xf32, #tpu.memory_space<vmem>>, vector<1x128xf32>,
    %c8_i32_32 = arith.constant 8 : i32
    %73 = arith.addi %0, %c8_i32_32 : i32
    %c2_i32_33 = arith.constant 2 : i32
    %74 = arith.addi %73, %c2_i32_33 : i32
    %75 = arith.index_cast %74 : i32 to index
    %76 = memref.load %arg1[%75] : memref<128xi32, #tpu.memory_space<smem>>
    %77 = arith.index_cast %76 : i32 to index
    %c0_34 = arith.constant 0 : index
    %78 = vector.load %arg2[%77, %c0_34] : memref<64x128xf32, #tpu.memory_space<vmem>>, vector<1x128xf32>
    %c20 = arith.constant 20 : index
    %c0_35 = arith.constant 0 : index
    %79 = vector.load %arg8[%c20, %c0_35] : memref<136x128xf32, #tpu.memory_space<vmem>>, vector<1x128xf32>
    tpu.vector_store %arg8[%c20, %c0_35], %78 {strides = array<i32>} : memref<136x128xf32, #tpu.memory_space<vmem>>, vector<1x128xf32>,
    %c8_i32_36 = arith.constant 8 : i32
    %80 = arith.addi %0, %c8_i32_36 : i32
    %c3_i32_37 = arith.constant 3 : i32
    %81 = arith.addi %80, %c3_i32_37 : i32
    %82 = arith.index_cast %81 : i32 to index
    %83 = memref.load %arg1[%82] : memref<128xi32, #tpu.memory_space<smem>>
    %84 = arith.index_cast %83 : i32 to index
    %c0_38 = arith.constant 0 : index
    %85 = vector.load %arg2[%84, %c0_38] : memref<64x128xf32, #tpu.memory_space<vmem>>, vector<1x128xf32>
    %c21 = arith.constant 21 : index
    %c0_39 = arith.constant 0 : index
    %86 = vector.load %arg8[%c21, %c0_39] : memref<136x128xf32, #tpu.memory_space<vmem>>, vector<1x128xf32>
    tpu.vector_store %arg8[%c21, %c0_39], %85 {strides = array<i32>} : memref<136x128xf32, #tpu.memory_space<vmem>>, vector<1x128xf32>,
    %c8_i32_40 = arith.constant 8 : i32
    %87 = arith.addi %0, %c8_i32_40 : i32
    %c4_i32_41 = arith.constant 4 : i32
    %88 = arith.addi %87, %c4_i32_41 : i32
    %89 = arith.index_cast %88 : i32 to index
    %90 = memref.load %arg1[%89] : memref<128xi32, #tpu.memory_space<smem>>
    %91 = arith.index_cast %90 : i32 to index
    %c0_42 = arith.constant 0 : index
    %92 = vector.load %arg2[%91, %c0_42] : memref<64x128xf32, #tpu.memory_space<vmem>>, vector<1x128xf32>
    %c22 = arith.constant 22 : index
    %c0_43 = arith.constant 0 : index
    %93 = vector.load %arg8[%c22, %c0_43] : memref<136x128xf32, #tpu.memory_space<vmem>>, vector<1x128xf32>
    tpu.vector_store %arg8[%c22, %c0_43], %92 {strides = array<i32>} : memref<136x128xf32, #tpu.memory_space<vmem>>, vector<1x128xf32>,
    %c8_i32_44 = arith.constant 8 : i32
    %94 = arith.addi %0, %c8_i32_44 : i32
    %c5_i32_45 = arith.constant 5 : i32
    %95 = arith.addi %94, %c5_i32_45 : i32
    %96 = arith.index_cast %95 : i32 to index
    %97 = memref.load %arg1[%96] : memref<128xi32, #tpu.memory_space<smem>>
    %98 = arith.index_cast %97 : i32 to index
    %c0_46 = arith.constant 0 : index
    %99 = vector.load %arg2[%98, %c0_46] : memref<64x128xf32, #tpu.memory_space<vmem>>, vector<1x128xf32>
    %c23 = arith.constant 23 : index
    %c0_47 = arith.constant 0 : index
    %100 = vector.load %arg8[%c23, %c0_47] : memref<136x128xf32, #tpu.memory_space<vmem>>, vector<1x128xf32>
    tpu.vector_store %arg8[%c23, %c0_47], %99 {strides = array<i32>} : memref<136x128xf32, #tpu.memory_space<vmem>>, vector<1x128xf32>,
    %c8_i32_48 = arith.constant 8 : i32
    %101 = arith.addi %0, %c8_i32_48 : i32
    %c6_i32_49 = arith.constant 6 : i32
    %102 = arith.addi %101, %c6_i32_49 : i32
    %103 = arith.index_cast %102 : i32 to index
    %104 = memref.load %arg1[%103] : memref<128xi32, #tpu.memory_space<smem>>
    %105 = arith.index_cast %104 : i32 to index
    %c0_50 = arith.constant 0 : index
    %106 = vector.load %arg2[%105, %c0_50] : memref<64x128xf32, #tpu.memory_space<vmem>>, vector<1x128xf32>
    %c24 = arith.constant 24 : index
    %c0_51 = arith.constant 0 : index
    %107 = vector.load %arg8[%c24, %c0_51] : memref<136x128xf32, #tpu.memory_space<vmem>>, vector<1x128xf32>
    tpu.vector_store %arg8[%c24, %c0_51], %106 {strides = array<i32>} : memref<136x128xf32, #tpu.memory_space<vmem>>, vector<1x128xf32>,
    %c8_i32_52 = arith.constant 8 : i32
    %108 = arith.addi %0, %c8_i32_52 : i32
    %c7_i32_53 = arith.constant 7 : i32
    %109 = arith.addi %108, %c7_i32_53 : i32
    %110 = arith.index_cast %109 : i32 to index
    %111 = memref.load %arg1[%110] : memref<128xi32, #tpu.memory_space<smem>>
    %112 = arith.index_cast %111 : i32 to index
    %c0_54 = arith.constant 0 : index
    %113 = vector.load %arg2[%112, %c0_54] : memref<64x128xf32, #tpu.memory_space<vmem>>, vector<1x128xf32>
    %c25 = arith.constant 25 : index
    %c0_55 = arith.constant 0 : index
    %114 = vector.load %arg8[%c25, %c0_55] : memref<136x128xf32, #tpu.memory_space<vmem>>, vector<1x128xf32>
    tpu.vector_store %arg8[%c25, %c0_55], %113 {strides = array<i32>} : memref<136x128xf32, #tpu.memory_space<vmem>>, vector<1x128xf32>,
    %c16_i32 = arith.constant 16 : i32
    %115 = arith.addi %0, %c16_i32 : i32
    %c0_i32_56 = arith.constant 0 : i32
    %116 = arith.addi %115, %c0_i32_56 : i32
    %117 = arith.index_cast %116 : i32 to index
    %118 = memref.load %arg1[%117] : memref<128xi32, #tpu.memory_space<smem>>
    %119 = arith.index_cast %118 : i32 to index
    %c0_57 = arith.constant 0 : index
    %120 = vector.load %arg2[%119, %c0_57] : memref<64x128xf32, #tpu.memory_space<vmem>>, vector<1x128xf32>
    %c34 = arith.constant 34 : index
    %c0_58 = arith.constant 0 : index
    %121 = vector.load %arg8[%c34, %c0_58] : memref<136x128xf32, #tpu.memory_space<vmem>>, vector<1x128xf32>
    tpu.vector_store %arg8[%c34, %c0_58], %120 {strides = array<i32>} : memref<136x128xf32, #tpu.memory_space<vmem>>, vector<1x128xf32>,
    %c16_i32_59 = arith.constant 16 : i32
    %122 = arith.addi %0, %c16_i32_59 : i32
    %c1_i32_60 = arith.constant 1 : i32
    %123 = arith.addi %122, %c1_i32_60 : i32
    %124 = arith.index_cast %123 : i32 to index
    %125 = memref.load %arg1[%124] : memref<128xi32, #tpu.memory_space<smem>>
    %126 = arith.index_cast %125 : i32 to index
    %c0_61 = arith.constant 0 : index
    %127 = vector.load %arg2[%126, %c0_61] : memref<64x128xf32, #tpu.memory_space<vmem>>, vector<1x128xf32>
    %c35 = arith.constant 35 : index
    %c0_62 = arith.constant 0 : index
    %128 = vector.load %arg8[%c35, %c0_62] : memref<136x128xf32, #tpu.memory_space<vmem>>, vector<1x128xf32>
    tpu.vector_store %arg8[%c35, %c0_62], %127 {strides = array<i32>} : memref<136x128xf32, #tpu.memory_space<vmem>>, vector<1x128xf32>,
    %c16_i32_63 = arith.constant 16 : i32
    %129 = arith.addi %0, %c16_i32_63 : i32
    %c2_i32_64 = arith.constant 2 : i32
    %130 = arith.addi %129, %c2_i32_64 : i32
    %131 = arith.index_cast %130 : i32 to index
    %132 = memref.load %arg1[%131] : memref<128xi32, #tpu.memory_space<smem>>
    %133 = arith.index_cast %132 : i32 to index
    %c0_65 = arith.constant 0 : index
    %134 = vector.load %arg2[%133, %c0_65] : memref<64x128xf32, #tpu.memory_space<vmem>>, vector<1x128xf32>
    %c36 = arith.constant 36 : index
    %c0_66 = arith.constant 0 : index
    %135 = vector.load %arg8[%c36, %c0_66] : memref<136x128xf32, #tpu.memory_space<vmem>>, vector<1x128xf32>
    tpu.vector_store %arg8[%c36, %c0_66], %134 {strides = array<i32>} : memref<136x128xf32, #tpu.memory_space<vmem>>, vector<1x128xf32>,
    %c16_i32_67 = arith.constant 16 : i32
    %136 = arith.addi %0, %c16_i32_67 : i32
    %c3_i32_68 = arith.constant 3 : i32
    %137 = arith.addi %136, %c3_i32_68 : i32
    %138 = arith.index_cast %137 : i32 to index
    %139 = memref.load %arg1[%138] : memref<128xi32, #tpu.memory_space<smem>>
    %140 = arith.index_cast %139 : i32 to index
    %c0_69 = arith.constant 0 : index
    %141 = vector.load %arg2[%140, %c0_69] : memref<64x128xf32, #tpu.memory_space<vmem>>, vector<1x128xf32>
    %c37 = arith.constant 37 : index
    %c0_70 = arith.constant 0 : index
    %142 = vector.load %arg8[%c37, %c0_70] : memref<136x128xf32, #tpu.memory_space<vmem>>, vector<1x128xf32>
    tpu.vector_store %arg8[%c37, %c0_70], %141 {strides = array<i32>} : memref<136x128xf32, #tpu.memory_space<vmem>>, vector<1x128xf32>,
    %c16_i32_71 = arith.constant 16 : i32
    %143 = arith.addi %0, %c16_i32_71 : i32
    %c4_i32_72 = arith.constant 4 : i32
    %144 = arith.addi %143, %c4_i32_72 : i32
    %145 = arith.index_cast %144 : i32 to index
    %146 = memref.load %arg1[%145] : memref<128xi32, #tpu.memory_space<smem>>
    %147 = arith.index_cast %146 : i32 to index
    %c0_73 = arith.constant 0 : index
    %148 = vector.load %arg2[%147, %c0_73] : memref<64x128xf32, #tpu.memory_space<vmem>>, vector<1x128xf32>
    %c38 = arith.constant 38 : index
    %c0_74 = arith.constant 0 : index
    %149 = vector.load %arg8[%c38, %c0_74] : memref<136x128xf32, #tpu.memory_space<vmem>>, vector<1x128xf32>
    tpu.vector_store %arg8[%c38, %c0_74], %148 {strides = array<i32>} : memref<136x128xf32, #tpu.memory_space<vmem>>, vector<1x128xf32>,
    %c16_i32_75 = arith.constant 16 : i32
    %150 = arith.addi %0, %c16_i32_75 : i32
    %c5_i32_76 = arith.constant 5 : i32
    %151 = arith.addi %150, %c5_i32_76 : i32
    %152 = arith.index_cast %151 : i32 to index
    %153 = memref.load %arg1[%152] : memref<128xi32, #tpu.memory_space<smem>>
    %154 = arith.index_cast %153 : i32 to index
    %c0_77 = arith.constant 0 : index
    %155 = vector.load %arg2[%154, %c0_77] : memref<64x128xf32, #tpu.memory_space<vmem>>, vector<1x128xf32>
    %c39 = arith.constant 39 : index
    %c0_78 = arith.constant 0 : index
    %156 = vector.load %arg8[%c39, %c0_78] : memref<136x128xf32, #tpu.memory_space<vmem>>, vector<1x128xf32>
    tpu.vector_store %arg8[%c39, %c0_78], %155 {strides = array<i32>} : memref<136x128xf32, #tpu.memory_space<vmem>>, vector<1x128xf32>,
    %c16_i32_79 = arith.constant 16 : i32
    %157 = arith.addi %0, %c16_i32_79 : i32
    %c6_i32_80 = arith.constant 6 : i32
    %158 = arith.addi %157, %c6_i32_80 : i32
    %159 = arith.index_cast %158 : i32 to index
    %160 = memref.load %arg1[%159] : memref<128xi32, #tpu.memory_space<smem>>
    %161 = arith.index_cast %160 : i32 to index
    %c0_81 = arith.constant 0 : index
    %162 = vector.load %arg2[%161, %c0_81] : memref<64x128xf32, #tpu.memory_space<vmem>>, vector<1x128xf32>
    %c40 = arith.constant 40 : index
    %c0_82 = arith.constant 0 : index
    %163 = vector.load %arg8[%c40, %c0_82] : memref<136x128xf32, #tpu.memory_space<vmem>>, vector<1x128xf32>
    tpu.vector_store %arg8[%c40, %c0_82], %162 {strides = array<i32>} : memref<136x128xf32, #tpu.memory_space<vmem>>, vector<1x128xf32>,
    %c16_i32_83 = arith.constant 16 : i32
    %164 = arith.addi %0, %c16_i32_83 : i32
    %c7_i32_84 = arith.constant 7 : i32
    %165 = arith.addi %164, %c7_i32_84 : i32
    %166 = arith.index_cast %165 : i32 to index
    %167 = memref.load %arg1[%166] : memref<128xi32, #tpu.memory_space<smem>>
    %168 = arith.index_cast %167 : i32 to index
    %c0_85 = arith.constant 0 : index
    %169 = vector.load %arg2[%168, %c0_85] : memref<64x128xf32, #tpu.memory_space<vmem>>, vector<1x128xf32>
    %c41 = arith.constant 41 : index
    %c0_86 = arith.constant 0 : index
    %170 = vector.load %arg8[%c41, %c0_86] : memref<136x128xf32, #tpu.memory_space<vmem>>, vector<1x128xf32>
    tpu.vector_store %arg8[%c41, %c0_86], %169 {strides = array<i32>} : memref<136x128xf32, #tpu.memory_space<vmem>>, vector<1x128xf32>,
    %c24_i32 = arith.constant 24 : i32
    %171 = arith.addi %0, %c24_i32 : i32
    %c0_i32_87 = arith.constant 0 : i32
    %172 = arith.addi %171, %c0_i32_87 : i32
    %173 = arith.index_cast %172 : i32 to index
    %174 = memref.load %arg1[%173] : memref<128xi32, #tpu.memory_space<smem>>
    %175 = arith.index_cast %174 : i32 to index
    %c0_88 = arith.constant 0 : index
    %176 = vector.load %arg2[%175, %c0_88] : memref<64x128xf32, #tpu.memory_space<vmem>>, vector<1x128xf32>
    %c50 = arith.constant 50 : index
    %c0_89 = arith.constant 0 : index
    %177 = vector.load %arg8[%c50, %c0_89] : memref<136x128xf32, #tpu.memory_space<vmem>>, vector<1x128xf32>
    tpu.vector_store %arg8[%c50, %c0_89], %176 {strides = array<i32>} : memref<136x128xf32, #tpu.memory_space<vmem>>, vector<1x128xf32>,
    %c24_i32_90 = arith.constant 24 : i32
    %178 = arith.addi %0, %c24_i32_90 : i32
    %c1_i32_91 = arith.constant 1 : i32
    %179 = arith.addi %178, %c1_i32_91 : i32
    %180 = arith.index_cast %179 : i32 to index
    %181 = memref.load %arg1[%180] : memref<128xi32, #tpu.memory_space<smem>>
    %182 = arith.index_cast %181 : i32 to index
    %c0_92 = arith.constant 0 : index
    %183 = vector.load %arg2[%182, %c0_92] : memref<64x128xf32, #tpu.memory_space<vmem>>, vector<1x128xf32>
    %c51 = arith.constant 51 : index
    %c0_93 = arith.constant 0 : index
    %184 = vector.load %arg8[%c51, %c0_93] : memref<136x128xf32, #tpu.memory_space<vmem>>, vector<1x128xf32>
    tpu.vector_store %arg8[%c51, %c0_93], %183 {strides = array<i32>} : memref<136x128xf32, #tpu.memory_space<vmem>>, vector<1x128xf32>,
    %c24_i32_94 = arith.constant 24 : i32
    %185 = arith.addi %0, %c24_i32_94 : i32
    %c2_i32_95 = arith.constant 2 : i32
    %186 = arith.addi %185, %c2_i32_95 : i32
    %187 = arith.index_cast %186 : i32 to index
    %188 = memref.load %arg1[%187] : memref<128xi32, #tpu.memory_space<smem>>
    %189 = arith.index_cast %188 : i32 to index
    %c0_96 = arith.constant 0 : index
    %190 = vector.load %arg2[%189, %c0_96] : memref<64x128xf32, #tpu.memory_space<vmem>>, vector<1x128xf32>
    %c52 = arith.constant 52 : index
    %c0_97 = arith.constant 0 : index
    %191 = vector.load %arg8[%c52, %c0_97] : memref<136x128xf32, #tpu.memory_space<vmem>>, vector<1x128xf32>
    tpu.vector_store %arg8[%c52, %c0_97], %190 {strides = array<i32>} : memref<136x128xf32, #tpu.memory_space<vmem>>, vector<1x128xf32>,
    %c24_i32_98 = arith.constant 24 : i32
    %192 = arith.addi %0, %c24_i32_98 : i32
    %c3_i32_99 = arith.constant 3 : i32
    %193 = arith.addi %192, %c3_i32_99 : i32
    %194 = arith.index_cast %193 : i32 to index
    %195 = memref.load %arg1[%194] : memref<128xi32, #tpu.memory_space<smem>>
    %196 = arith.index_cast %195 : i32 to index
    %c0_100 = arith.constant 0 : index
    %197 = vector.load %arg2[%196, %c0_100] : memref<64x128xf32, #tpu.memory_space<vmem>>, vector<1x128xf32>
    %c53 = arith.constant 53 : index
    %c0_101 = arith.constant 0 : index
    %198 = vector.load %arg8[%c53, %c0_101] : memref<136x128xf32, #tpu.memory_space<vmem>>, vector<1x128xf32>
    tpu.vector_store %arg8[%c53, %c0_101], %197 {strides = array<i32>} : memref<136x128xf32, #tpu.memory_space<vmem>>, vector<1x128xf32>,
    %c24_i32_102 = arith.constant 24 : i32
    %199 = arith.addi %0, %c24_i32_102 : i32
    %c4_i32_103 = arith.constant 4 : i32
    %200 = arith.addi %199, %c4_i32_103 : i32
    %201 = arith.index_cast %200 : i32 to index
    %202 = memref.load %arg1[%201] : memref<128xi32, #tpu.memory_space<smem>>
    %203 = arith.index_cast %202 : i32 to index
    %c0_104 = arith.constant 0 : index
    %204 = vector.load %arg2[%203, %c0_104] : memref<64x128xf32, #tpu.memory_space<vmem>>, vector<1x128xf32>
    %c54 = arith.constant 54 : index
    %c0_105 = arith.constant 0 : index
    %205 = vector.load %arg8[%c54, %c0_105] : memref<136x128xf32, #tpu.memory_space<vmem>>, vector<1x128xf32>
    tpu.vector_store %arg8[%c54, %c0_105], %204 {strides = array<i32>} : memref<136x128xf32, #tpu.memory_space<vmem>>, vector<1x128xf32>,
    %c24_i32_106 = arith.constant 24 : i32
    %206 = arith.addi %0, %c24_i32_106 : i32
    %c5_i32_107 = arith.constant 5 : i32
    %207 = arith.addi %206, %c5_i32_107 : i32
    %208 = arith.index_cast %207 : i32 to index
    %209 = memref.load %arg1[%208] : memref<128xi32, #tpu.memory_space<smem>>
    %210 = arith.index_cast %209 : i32 to index
    %c0_108 = arith.constant 0 : index
    %211 = vector.load %arg2[%210, %c0_108] : memref<64x128xf32, #tpu.memory_space<vmem>>, vector<1x128xf32>
    %c55 = arith.constant 55 : index
    %c0_109 = arith.constant 0 : index
    %212 = vector.load %arg8[%c55, %c0_109] : memref<136x128xf32, #tpu.memory_space<vmem>>, vector<1x128xf32>
    tpu.vector_store %arg8[%c55, %c0_109], %211 {strides = array<i32>} : memref<136x128xf32, #tpu.memory_space<vmem>>, vector<1x128xf32>,
    %c24_i32_110 = arith.constant 24 : i32
    %213 = arith.addi %0, %c24_i32_110 : i32
    %c6_i32_111 = arith.constant 6 : i32
    %214 = arith.addi %213, %c6_i32_111 : i32
    %215 = arith.index_cast %214 : i32 to index
    %216 = memref.load %arg1[%215] : memref<128xi32, #tpu.memory_space<smem>>
    %217 = arith.index_cast %216 : i32 to index
    %c0_112 = arith.constant 0 : index
    %218 = vector.load %arg2[%217, %c0_112] : memref<64x128xf32, #tpu.memory_space<vmem>>, vector<1x128xf32>
    %c56 = arith.constant 56 : index
    %c0_113 = arith.constant 0 : index
    %219 = vector.load %arg8[%c56, %c0_113] : memref<136x128xf32, #tpu.memory_space<vmem>>, vector<1x128xf32>
    tpu.vector_store %arg8[%c56, %c0_113], %218 {strides = array<i32>} : memref<136x128xf32, #tpu.memory_space<vmem>>, vector<1x128xf32>,
    %c24_i32_114 = arith.constant 24 : i32
    %220 = arith.addi %0, %c24_i32_114 : i32
    %c7_i32_115 = arith.constant 7 : i32
    %221 = arith.addi %220, %c7_i32_115 : i32
    %222 = arith.index_cast %221 : i32 to index
    %223 = memref.load %arg1[%222] : memref<128xi32, #tpu.memory_space<smem>>
    %224 = arith.index_cast %223 : i32 to index
    %c0_116 = arith.constant 0 : index
    %225 = vector.load %arg2[%224, %c0_116] : memref<64x128xf32, #tpu.memory_space<vmem>>, vector<1x128xf32>
    %c57 = arith.constant 57 : index
    %c0_117 = arith.constant 0 : index
    %226 = vector.load %arg8[%c57, %c0_117] : memref<136x128xf32, #tpu.memory_space<vmem>>, vector<1x128xf32>
    tpu.vector_store %arg8[%c57, %c0_117], %225 {strides = array<i32>} : memref<136x128xf32, #tpu.memory_space<vmem>>, vector<1x128xf32>,
    %c32_i32 = arith.constant 32 : i32
    %227 = arith.addi %0, %c32_i32 : i32
    %c0_i32_118 = arith.constant 0 : i32
    %228 = arith.addi %227, %c0_i32_118 : i32
    %229 = arith.index_cast %228 : i32 to index
    %230 = memref.load %arg1[%229] : memref<128xi32, #tpu.memory_space<smem>>
    %231 = arith.index_cast %230 : i32 to index
    %c0_119 = arith.constant 0 : index
    %232 = vector.load %arg2[%231, %c0_119] : memref<64x128xf32, #tpu.memory_space<vmem>>, vector<1x128xf32>
    %c66 = arith.constant 66 : index
    %c0_120 = arith.constant 0 : index
    %233 = vector.load %arg8[%c66, %c0_120] : memref<136x128xf32, #tpu.memory_space<vmem>>, vector<1x128xf32>
    tpu.vector_store %arg8[%c66, %c0_120], %232 {strides = array<i32>} : memref<136x128xf32, #tpu.memory_space<vmem>>, vector<1x128xf32>,
    %c32_i32_121 = arith.constant 32 : i32
    %234 = arith.addi %0, %c32_i32_121 : i32
    %c1_i32_122 = arith.constant 1 : i32
    %235 = arith.addi %234, %c1_i32_122 : i32
    %236 = arith.index_cast %235 : i32 to index
    %237 = memref.load %arg1[%236] : memref<128xi32, #tpu.memory_space<smem>>
    %238 = arith.index_cast %237 : i32 to index
    %c0_123 = arith.constant 0 : index
    %239 = vector.load %arg2[%238, %c0_123] : memref<64x128xf32, #tpu.memory_space<vmem>>, vector<1x128xf32>
    %c67 = arith.constant 67 : index
    %c0_124 = arith.constant 0 : index
    %240 = vector.load %arg8[%c67, %c0_124] : memref<136x128xf32, #tpu.memory_space<vmem>>, vector<1x128xf32>
    tpu.vector_store %arg8[%c67, %c0_124], %239 {strides = array<i32>} : memref<136x128xf32, #tpu.memory_space<vmem>>, vector<1x128xf32>,
    %c32_i32_125 = arith.constant 32 : i32
    %241 = arith.addi %0, %c32_i32_125 : i32
    %c2_i32_126 = arith.constant 2 : i32
    %242 = arith.addi %241, %c2_i32_126 : i32
    %243 = arith.index_cast %242 : i32 to index
    %244 = memref.load %arg1[%243] : memref<128xi32, #tpu.memory_space<smem>>
    %245 = arith.index_cast %244 : i32 to index
    %c0_127 = arith.constant 0 : index
    %246 = vector.load %arg2[%245, %c0_127] : memref<64x128xf32, #tpu.memory_space<vmem>>, vector<1x128xf32>
    %c68 = arith.constant 68 : index
    %c0_128 = arith.constant 0 : index
    %247 = vector.load %arg8[%c68, %c0_128] : memref<136x128xf32, #tpu.memory_space<vmem>>, vector<1x128xf32>
    tpu.vector_store %arg8[%c68, %c0_128], %246 {strides = array<i32>} : memref<136x128xf32, #tpu.memory_space<vmem>>, vector<1x128xf32>,
    %c32_i32_129 = arith.constant 32 : i32
    %248 = arith.addi %0, %c32_i32_129 : i32
    %c3_i32_130 = arith.constant 3 : i32
    %249 = arith.addi %248, %c3_i32_130 : i32
    %250 = arith.index_cast %249 : i32 to index
    %251 = memref.load %arg1[%250] : memref<128xi32, #tpu.memory_space<smem>>
    %252 = arith.index_cast %251 : i32 to index
    %c0_131 = arith.constant 0 : index
    %253 = vector.load %arg2[%252, %c0_131] : memref<64x128xf32, #tpu.memory_space<vmem>>, vector<1x128xf32>
    %c69 = arith.constant 69 : index
    %c0_132 = arith.constant 0 : index
    %254 = vector.load %arg8[%c69, %c0_132] : memref<136x128xf32, #tpu.memory_space<vmem>>, vector<1x128xf32>
    tpu.vector_store %arg8[%c69, %c0_132], %253 {strides = array<i32>} : memref<136x128xf32, #tpu.memory_space<vmem>>, vector<1x128xf32>,
    %c32_i32_133 = arith.constant 32 : i32
    %255 = arith.addi %0, %c32_i32_133 : i32
    %c4_i32_134 = arith.constant 4 : i32
    %256 = arith.addi %255, %c4_i32_134 : i32
    %257 = arith.index_cast %256 : i32 to index
    %258 = memref.load %arg1[%257] : memref<128xi32, #tpu.memory_space<smem>>
    %259 = arith.index_cast %258 : i32 to index
    %c0_135 = arith.constant 0 : index
    %260 = vector.load %arg2[%259, %c0_135] : memref<64x128xf32, #tpu.memory_space<vmem>>, vector<1x128xf32>
    %c70 = arith.constant 70 : index
    %c0_136 = arith.constant 0 : index
    %261 = vector.load %arg8[%c70, %c0_136] : memref<136x128xf32, #tpu.memory_space<vmem>>, vector<1x128xf32>
    tpu.vector_store %arg8[%c70, %c0_136], %260 {strides = array<i32>} : memref<136x128xf32, #tpu.memory_space<vmem>>, vector<1x128xf32>,
    %c32_i32_137 = arith.constant 32 : i32
    %262 = arith.addi %0, %c32_i32_137 : i32
    %c5_i32_138 = arith.constant 5 : i32
    %263 = arith.addi %262, %c5_i32_138 : i32
    %264 = arith.index_cast %263 : i32 to index
    %265 = memref.load %arg1[%264] : memref<128xi32, #tpu.memory_space<smem>>
    %266 = arith.index_cast %265 : i32 to index
    %c0_139 = arith.constant 0 : index
    %267 = vector.load %arg2[%266, %c0_139] : memref<64x128xf32, #tpu.memory_space<vmem>>, vector<1x128xf32>
    %c71 = arith.constant 71 : index
    %c0_140 = arith.constant 0 : index
    %268 = vector.load %arg8[%c71, %c0_140] : memref<136x128xf32, #tpu.memory_space<vmem>>, vector<1x128xf32>
    tpu.vector_store %arg8[%c71, %c0_140], %267 {strides = array<i32>} : memref<136x128xf32, #tpu.memory_space<vmem>>, vector<1x128xf32>,
    %c32_i32_141 = arith.constant 32 : i32
    %269 = arith.addi %0, %c32_i32_141 : i32
    %c6_i32_142 = arith.constant 6 : i32
    %270 = arith.addi %269, %c6_i32_142 : i32
    %271 = arith.index_cast %270 : i32 to index
    %272 = memref.load %arg1[%271] : memref<128xi32, #tpu.memory_space<smem>>
    %273 = arith.index_cast %272 : i32 to index
    %c0_143 = arith.constant 0 : index
    %274 = vector.load %arg2[%273, %c0_143] : memref<64x128xf32, #tpu.memory_space<vmem>>, vector<1x128xf32>
    %c72 = arith.constant 72 : index
    %c0_144 = arith.constant 0 : index
    %275 = vector.load %arg8[%c72, %c0_144] : memref<136x128xf32, #tpu.memory_space<vmem>>, vector<1x128xf32>
    tpu.vector_store %arg8[%c72, %c0_144], %274 {strides = array<i32>} : memref<136x128xf32, #tpu.memory_space<vmem>>, vector<1x128xf32>,
    %c32_i32_145 = arith.constant 32 : i32
    %276 = arith.addi %0, %c32_i32_145 : i32
    %c7_i32_146 = arith.constant 7 : i32
    %277 = arith.addi %276, %c7_i32_146 : i32
    %278 = arith.index_cast %277 : i32 to index
    %279 = memref.load %arg1[%278] : memref<128xi32, #tpu.memory_space<smem>>
    %280 = arith.index_cast %279 : i32 to index
    %c0_147 = arith.constant 0 : index
    %281 = vector.load %arg2[%280, %c0_147] : memref<64x128xf32, #tpu.memory_space<vmem>>, vector<1x128xf32>
    %c73 = arith.constant 73 : index
    %c0_148 = arith.constant 0 : index
    %282 = vector.load %arg8[%c73, %c0_148] : memref<136x128xf32, #tpu.memory_space<vmem>>, vector<1x128xf32>
    tpu.vector_store %arg8[%c73, %c0_148], %281 {strides = array<i32>} : memref<136x128xf32, #tpu.memory_space<vmem>>, vector<1x128xf32>,
    %c40_i32 = arith.constant 40 : i32
    %283 = arith.addi %0, %c40_i32 : i32
    %c0_i32_149 = arith.constant 0 : i32
    %284 = arith.addi %283, %c0_i32_149 : i32
    %285 = arith.index_cast %284 : i32 to index
    %286 = memref.load %arg1[%285] : memref<128xi32, #tpu.memory_space<smem>>
    %287 = arith.index_cast %286 : i32 to index
    %c0_150 = arith.constant 0 : index
    %288 = vector.load %arg2[%287, %c0_150] : memref<64x128xf32, #tpu.memory_space<vmem>>, vector<1x128xf32>
    %c82 = arith.constant 82 : index
    %c0_151 = arith.constant 0 : index
    %289 = vector.load %arg8[%c82, %c0_151] : memref<136x128xf32, #tpu.memory_space<vmem>>, vector<1x128xf32>
    tpu.vector_store %arg8[%c82, %c0_151], %288 {strides = array<i32>} : memref<136x128xf32, #tpu.memory_space<vmem>>, vector<1x128xf32>,
    %c40_i32_152 = arith.constant 40 : i32
    %290 = arith.addi %0, %c40_i32_152 : i32
    %c1_i32_153 = arith.constant 1 : i32
    %291 = arith.addi %290, %c1_i32_153 : i32
    %292 = arith.index_cast %291 : i32 to index
    %293 = memref.load %arg1[%292] : memref<128xi32, #tpu.memory_space<smem>>
    %294 = arith.index_cast %293 : i32 to index
    %c0_154 = arith.constant 0 : index
    %295 = vector.load %arg2[%294, %c0_154] : memref<64x128xf32, #tpu.memory_space<vmem>>, vector<1x128xf32>
    %c83 = arith.constant 83 : index
    %c0_155 = arith.constant 0 : index
    %296 = vector.load %arg8[%c83, %c0_155] : memref<136x128xf32, #tpu.memory_space<vmem>>, vector<1x128xf32>
    tpu.vector_store %arg8[%c83, %c0_155], %295 {strides = array<i32>} : memref<136x128xf32, #tpu.memory_space<vmem>>, vector<1x128xf32>,
    %c40_i32_156 = arith.constant 40 : i32
    %297 = arith.addi %0, %c40_i32_156 : i32
    %c2_i32_157 = arith.constant 2 : i32
    %298 = arith.addi %297, %c2_i32_157 : i32
    %299 = arith.index_cast %298 : i32 to index
    %300 = memref.load %arg1[%299] : memref<128xi32, #tpu.memory_space<smem>>
    %301 = arith.index_cast %300 : i32 to index
    %c0_158 = arith.constant 0 : index
    %302 = vector.load %arg2[%301, %c0_158] : memref<64x128xf32, #tpu.memory_space<vmem>>, vector<1x128xf32>
    %c84 = arith.constant 84 : index
    %c0_159 = arith.constant 0 : index
    %303 = vector.load %arg8[%c84, %c0_159] : memref<136x128xf32, #tpu.memory_space<vmem>>, vector<1x128xf32>
    tpu.vector_store %arg8[%c84, %c0_159], %302 {strides = array<i32>} : memref<136x128xf32, #tpu.memory_space<vmem>>, vector<1x128xf32>,
    %c40_i32_160 = arith.constant 40 : i32
    %304 = arith.addi %0, %c40_i32_160 : i32
    %c3_i32_161 = arith.constant 3 : i32
    %305 = arith.addi %304, %c3_i32_161 : i32
    %306 = arith.index_cast %305 : i32 to index
    %307 = memref.load %arg1[%306] : memref<128xi32, #tpu.memory_space<smem>>
    %308 = arith.index_cast %307 : i32 to index
    %c0_162 = arith.constant 0 : index
    %309 = vector.load %arg2[%308, %c0_162] : memref<64x128xf32, #tpu.memory_space<vmem>>, vector<1x128xf32>
    %c85 = arith.constant 85 : index
    %c0_163 = arith.constant 0 : index
    %310 = vector.load %arg8[%c85, %c0_163] : memref<136x128xf32, #tpu.memory_space<vmem>>, vector<1x128xf32>
    tpu.vector_store %arg8[%c85, %c0_163], %309 {strides = array<i32>} : memref<136x128xf32, #tpu.memory_space<vmem>>, vector<1x128xf32>,
    %c40_i32_164 = arith.constant 40 : i32
    %311 = arith.addi %0, %c40_i32_164 : i32
    %c4_i32_165 = arith.constant 4 : i32
    %312 = arith.addi %311, %c4_i32_165 : i32
    %313 = arith.index_cast %312 : i32 to index
    %314 = memref.load %arg1[%313] : memref<128xi32, #tpu.memory_space<smem>>
    %315 = arith.index_cast %314 : i32 to index
    %c0_166 = arith.constant 0 : index
    %316 = vector.load %arg2[%315, %c0_166] : memref<64x128xf32, #tpu.memory_space<vmem>>, vector<1x128xf32>
    %c86 = arith.constant 86 : index
    %c0_167 = arith.constant 0 : index
    %317 = vector.load %arg8[%c86, %c0_167] : memref<136x128xf32, #tpu.memory_space<vmem>>, vector<1x128xf32>
    tpu.vector_store %arg8[%c86, %c0_167], %316 {strides = array<i32>} : memref<136x128xf32, #tpu.memory_space<vmem>>, vector<1x128xf32>,
    %c40_i32_168 = arith.constant 40 : i32
    %318 = arith.addi %0, %c40_i32_168 : i32
    %c5_i32_169 = arith.constant 5 : i32
    %319 = arith.addi %318, %c5_i32_169 : i32
    %320 = arith.index_cast %319 : i32 to index
    %321 = memref.load %arg1[%320] : memref<128xi32, #tpu.memory_space<smem>>
    %322 = arith.index_cast %321 : i32 to index
    %c0_170 = arith.constant 0 : index
    %323 = vector.load %arg2[%322, %c0_170] : memref<64x128xf32, #tpu.memory_space<vmem>>, vector<1x128xf32>
    %c87 = arith.constant 87 : index
    %c0_171 = arith.constant 0 : index
    %324 = vector.load %arg8[%c87, %c0_171] : memref<136x128xf32, #tpu.memory_space<vmem>>, vector<1x128xf32>
    tpu.vector_store %arg8[%c87, %c0_171], %323 {strides = array<i32>} : memref<136x128xf32, #tpu.memory_space<vmem>>, vector<1x128xf32>,
    %c40_i32_172 = arith.constant 40 : i32
    %325 = arith.addi %0, %c40_i32_172 : i32
    %c6_i32_173 = arith.constant 6 : i32
    %326 = arith.addi %325, %c6_i32_173 : i32
    %327 = arith.index_cast %326 : i32 to index
    %328 = memref.load %arg1[%327] : memref<128xi32, #tpu.memory_space<smem>>
    %329 = arith.index_cast %328 : i32 to index
    %c0_174 = arith.constant 0 : index
    %330 = vector.load %arg2[%329, %c0_174] : memref<64x128xf32, #tpu.memory_space<vmem>>, vector<1x128xf32>
    %c88 = arith.constant 88 : index
    %c0_175 = arith.constant 0 : index
    %331 = vector.load %arg8[%c88, %c0_175] : memref<136x128xf32, #tpu.memory_space<vmem>>, vector<1x128xf32>
    tpu.vector_store %arg8[%c88, %c0_175], %330 {strides = array<i32>} : memref<136x128xf32, #tpu.memory_space<vmem>>, vector<1x128xf32>,
    %c40_i32_176 = arith.constant 40 : i32
    %332 = arith.addi %0, %c40_i32_176 : i32
    %c7_i32_177 = arith.constant 7 : i32
    %333 = arith.addi %332, %c7_i32_177 : i32
    %334 = arith.index_cast %333 : i32 to index
    %335 = memref.load %arg1[%334] : memref<128xi32, #tpu.memory_space<smem>>
    %336 = arith.index_cast %335 : i32 to index
    %c0_178 = arith.constant 0 : index
    %337 = vector.load %arg2[%336, %c0_178] : memref<64x128xf32, #tpu.memory_space<vmem>>, vector<1x128xf32>
    %c89 = arith.constant 89 : index
    %c0_179 = arith.constant 0 : index
    %338 = vector.load %arg8[%c89, %c0_179] : memref<136x128xf32, #tpu.memory_space<vmem>>, vector<1x128xf32>
    tpu.vector_store %arg8[%c89, %c0_179], %337 {strides = array<i32>} : memref<136x128xf32, #tpu.memory_space<vmem>>, vector<1x128xf32>,
    %c48_i32 = arith.constant 48 : i32
    %339 = arith.addi %0, %c48_i32 : i32
    %c0_i32_180 = arith.constant 0 : i32
    %340 = arith.addi %339, %c0_i32_180 : i32
    %341 = arith.index_cast %340 : i32 to index
    %342 = memref.load %arg1[%341] : memref<128xi32, #tpu.memory_space<smem>>
    %343 = arith.index_cast %342 : i32 to index
    %c0_181 = arith.constant 0 : index
    %344 = vector.load %arg2[%343, %c0_181] : memref<64x128xf32, #tpu.memory_space<vmem>>, vector<1x128xf32>
    %c98 = arith.constant 98 : index
    %c0_182 = arith.constant 0 : index
    %345 = vector.load %arg8[%c98, %c0_182] : memref<136x128xf32, #tpu.memory_space<vmem>>, vector<1x128xf32>
    tpu.vector_store %arg8[%c98, %c0_182], %344 {strides = array<i32>} : memref<136x128xf32, #tpu.memory_space<vmem>>, vector<1x128xf32>,
    %c48_i32_183 = arith.constant 48 : i32
    %346 = arith.addi %0, %c48_i32_183 : i32
    %c1_i32_184 = arith.constant 1 : i32
    %347 = arith.addi %346, %c1_i32_184 : i32
    %348 = arith.index_cast %347 : i32 to index
    %349 = memref.load %arg1[%348] : memref<128xi32, #tpu.memory_space<smem>>
    %350 = arith.index_cast %349 : i32 to index
    %c0_185 = arith.constant 0 : index
    %351 = vector.load %arg2[%350, %c0_185] : memref<64x128xf32, #tpu.memory_space<vmem>>, vector<1x128xf32>
    %c99 = arith.constant 99 : index
    %c0_186 = arith.constant 0 : index
    %352 = vector.load %arg8[%c99, %c0_186] : memref<136x128xf32, #tpu.memory_space<vmem>>, vector<1x128xf32>
    tpu.vector_store %arg8[%c99, %c0_186], %351 {strides = array<i32>} : memref<136x128xf32, #tpu.memory_space<vmem>>, vector<1x128xf32>,
    %c48_i32_187 = arith.constant 48 : i32
    %353 = arith.addi %0, %c48_i32_187 : i32
    %c2_i32_188 = arith.constant 2 : i32
    %354 = arith.addi %353, %c2_i32_188 : i32
    %355 = arith.index_cast %354 : i32 to index
    %356 = memref.load %arg1[%355] : memref<128xi32, #tpu.memory_space<smem>>
    %357 = arith.index_cast %356 : i32 to index
    %c0_189 = arith.constant 0 : index
    %358 = vector.load %arg2[%357, %c0_189] : memref<64x128xf32, #tpu.memory_space<vmem>>, vector<1x128xf32>
    %c100 = arith.constant 100 : index
    %c0_190 = arith.constant 0 : index
    %359 = vector.load %arg8[%c100, %c0_190] : memref<136x128xf32, #tpu.memory_space<vmem>>, vector<1x128xf32>
    tpu.vector_store %arg8[%c100, %c0_190], %358 {strides = array<i32>} : memref<136x128xf32, #tpu.memory_space<vmem>>, vector<1x128xf32>,
    %c48_i32_191 = arith.constant 48 : i32
    %360 = arith.addi %0, %c48_i32_191 : i32
    %c3_i32_192 = arith.constant 3 : i32
    %361 = arith.addi %360, %c3_i32_192 : i32
    %362 = arith.index_cast %361 : i32 to index
    %363 = memref.load %arg1[%362] : memref<128xi32, #tpu.memory_space<smem>>
    %364 = arith.index_cast %363 : i32 to index
    %c0_193 = arith.constant 0 : index
    %365 = vector.load %arg2[%364, %c0_193] : memref<64x128xf32, #tpu.memory_space<vmem>>, vector<1x128xf32>
    %c101 = arith.constant 101 : index
    %c0_194 = arith.constant 0 : index
    %366 = vector.load %arg8[%c101, %c0_194] : memref<136x128xf32, #tpu.memory_space<vmem>>, vector<1x128xf32>
    tpu.vector_store %arg8[%c101, %c0_194], %365 {strides = array<i32>} : memref<136x128xf32, #tpu.memory_space<vmem>>, vector<1x128xf32>,
    %c48_i32_195 = arith.constant 48 : i32
    %367 = arith.addi %0, %c48_i32_195 : i32
    %c4_i32_196 = arith.constant 4 : i32
    %368 = arith.addi %367, %c4_i32_196 : i32
    %369 = arith.index_cast %368 : i32 to index
    %370 = memref.load %arg1[%369] : memref<128xi32, #tpu.memory_space<smem>>
    %371 = arith.index_cast %370 : i32 to index
    %c0_197 = arith.constant 0 : index
    %372 = vector.load %arg2[%371, %c0_197] : memref<64x128xf32, #tpu.memory_space<vmem>>, vector<1x128xf32>
    %c102 = arith.constant 102 : index
    %c0_198 = arith.constant 0 : index
    %373 = vector.load %arg8[%c102, %c0_198] : memref<136x128xf32, #tpu.memory_space<vmem>>, vector<1x128xf32>
    tpu.vector_store %arg8[%c102, %c0_198], %372 {strides = array<i32>} : memref<136x128xf32, #tpu.memory_space<vmem>>, vector<1x128xf32>,
    %c48_i32_199 = arith.constant 48 : i32
    %374 = arith.addi %0, %c48_i32_199 : i32
    %c5_i32_200 = arith.constant 5 : i32
    %375 = arith.addi %374, %c5_i32_200 : i32
    %376 = arith.index_cast %375 : i32 to index
    %377 = memref.load %arg1[%376] : memref<128xi32, #tpu.memory_space<smem>>
    %378 = arith.index_cast %377 : i32 to index
    %c0_201 = arith.constant 0 : index
    %379 = vector.load %arg2[%378, %c0_201] : memref<64x128xf32, #tpu.memory_space<vmem>>, vector<1x128xf32>
    %c103 = arith.constant 103 : index
    %c0_202 = arith.constant 0 : index
    %380 = vector.load %arg8[%c103, %c0_202] : memref<136x128xf32, #tpu.memory_space<vmem>>, vector<1x128xf32>
    tpu.vector_store %arg8[%c103, %c0_202], %379 {strides = array<i32>} : memref<136x128xf32, #tpu.memory_space<vmem>>, vector<1x128xf32>,
    %c48_i32_203 = arith.constant 48 : i32
    %381 = arith.addi %0, %c48_i32_203 : i32
    %c6_i32_204 = arith.constant 6 : i32
    %382 = arith.addi %381, %c6_i32_204 : i32
    %383 = arith.index_cast %382 : i32 to index
    %384 = memref.load %arg1[%383] : memref<128xi32, #tpu.memory_space<smem>>
    %385 = arith.index_cast %384 : i32 to index
    %c0_205 = arith.constant 0 : index
    %386 = vector.load %arg2[%385, %c0_205] : memref<64x128xf32, #tpu.memory_space<vmem>>, vector<1x128xf32>
    %c104 = arith.constant 104 : index
    %c0_206 = arith.constant 0 : index
    %387 = vector.load %arg8[%c104, %c0_206] : memref<136x128xf32, #tpu.memory_space<vmem>>, vector<1x128xf32>
    tpu.vector_store %arg8[%c104, %c0_206], %386 {strides = array<i32>} : memref<136x128xf32, #tpu.memory_space<vmem>>, vector<1x128xf32>,
    %c48_i32_207 = arith.constant 48 : i32
    %388 = arith.addi %0, %c48_i32_207 : i32
    %c7_i32_208 = arith.constant 7 : i32
    %389 = arith.addi %388, %c7_i32_208 : i32
    %390 = arith.index_cast %389 : i32 to index
    %391 = memref.load %arg1[%390] : memref<128xi32, #tpu.memory_space<smem>>
    %392 = arith.index_cast %391 : i32 to index
    %c0_209 = arith.constant 0 : index
    %393 = vector.load %arg2[%392, %c0_209] : memref<64x128xf32, #tpu.memory_space<vmem>>, vector<1x128xf32>
    %c105 = arith.constant 105 : index
    %c0_210 = arith.constant 0 : index
    %394 = vector.load %arg8[%c105, %c0_210] : memref<136x128xf32, #tpu.memory_space<vmem>>, vector<1x128xf32>
    tpu.vector_store %arg8[%c105, %c0_210], %393 {strides = array<i32>} : memref<136x128xf32, #tpu.memory_space<vmem>>, vector<1x128xf32>,
    %c56_i32 = arith.constant 56 : i32
    %395 = arith.addi %0, %c56_i32 : i32
    %c0_i32_211 = arith.constant 0 : i32
    %396 = arith.addi %395, %c0_i32_211 : i32
    %397 = arith.index_cast %396 : i32 to index
    %398 = memref.load %arg1[%397] : memref<128xi32, #tpu.memory_space<smem>>
    %399 = arith.index_cast %398 : i32 to index
    %c0_212 = arith.constant 0 : index
    %400 = vector.load %arg2[%399, %c0_212] : memref<64x128xf32, #tpu.memory_space<vmem>>, vector<1x128xf32>
    %c114 = arith.constant 114 : index
    %c0_213 = arith.constant 0 : index
    %401 = vector.load %arg8[%c114, %c0_213] : memref<136x128xf32, #tpu.memory_space<vmem>>, vector<1x128xf32>
    tpu.vector_store %arg8[%c114, %c0_213], %400 {strides = array<i32>} : memref<136x128xf32, #tpu.memory_space<vmem>>, vector<1x128xf32>,
    %c56_i32_214 = arith.constant 56 : i32
    %402 = arith.addi %0, %c56_i32_214 : i32
    %c1_i32_215 = arith.constant 1 : i32
    %403 = arith.addi %402, %c1_i32_215 : i32
    %404 = arith.index_cast %403 : i32 to index
    %405 = memref.load %arg1[%404] : memref<128xi32, #tpu.memory_space<smem>>
    %406 = arith.index_cast %405 : i32 to index
    %c0_216 = arith.constant 0 : index
    %407 = vector.load %arg2[%406, %c0_216] : memref<64x128xf32, #tpu.memory_space<vmem>>, vector<1x128xf32>
    %c115 = arith.constant 115 : index
    %c0_217 = arith.constant 0 : index
    %408 = vector.load %arg8[%c115, %c0_217] : memref<136x128xf32, #tpu.memory_space<vmem>>, vector<1x128xf32>
    tpu.vector_store %arg8[%c115, %c0_217], %407 {strides = array<i32>} : memref<136x128xf32, #tpu.memory_space<vmem>>, vector<1x128xf32>,
    %c56_i32_218 = arith.constant 56 : i32
    %409 = arith.addi %0, %c56_i32_218 : i32
    %c2_i32_219 = arith.constant 2 : i32
    %410 = arith.addi %409, %c2_i32_219 : i32
    %411 = arith.index_cast %410 : i32 to index
    %412 = memref.load %arg1[%411] : memref<128xi32, #tpu.memory_space<smem>>
    %413 = arith.index_cast %412 : i32 to index
    %c0_220 = arith.constant 0 : index
    %414 = vector.load %arg2[%413, %c0_220] : memref<64x128xf32, #tpu.memory_space<vmem>>, vector<1x128xf32>
    %c116 = arith.constant 116 : index
    %c0_221 = arith.constant 0 : index
    %415 = vector.load %arg8[%c116, %c0_221] : memref<136x128xf32, #tpu.memory_space<vmem>>, vector<1x128xf32>
    tpu.vector_store %arg8[%c116, %c0_221], %414 {strides = array<i32>} : memref<136x128xf32, #tpu.memory_space<vmem>>, vector<1x128xf32>,
    %c56_i32_222 = arith.constant 56 : i32
    %416 = arith.addi %0, %c56_i32_222 : i32
    %c3_i32_223 = arith.constant 3 : i32
    %417 = arith.addi %416, %c3_i32_223 : i32
    %418 = arith.index_cast %417 : i32 to index
    %419 = memref.load %arg1[%418] : memref<128xi32, #tpu.memory_space<smem>>
    %420 = arith.index_cast %419 : i32 to index
    %c0_224 = arith.constant 0 : index
    %421 = vector.load %arg2[%420, %c0_224] : memref<64x128xf32, #tpu.memory_space<vmem>>, vector<1x128xf32>
    %c117 = arith.constant 117 : index
    %c0_225 = arith.constant 0 : index
    %422 = vector.load %arg8[%c117, %c0_225] : memref<136x128xf32, #tpu.memory_space<vmem>>, vector<1x128xf32>
    tpu.vector_store %arg8[%c117, %c0_225], %421 {strides = array<i32>} : memref<136x128xf32, #tpu.memory_space<vmem>>, vector<1x128xf32>,
    %c56_i32_226 = arith.constant 56 : i32
    %423 = arith.addi %0, %c56_i32_226 : i32
    %c4_i32_227 = arith.constant 4 : i32
    %424 = arith.addi %423, %c4_i32_227 : i32
    %425 = arith.index_cast %424 : i32 to index
    %426 = memref.load %arg1[%425] : memref<128xi32, #tpu.memory_space<smem>>
    %427 = arith.index_cast %426 : i32 to index
    %c0_228 = arith.constant 0 : index
    %428 = vector.load %arg2[%427, %c0_228] : memref<64x128xf32, #tpu.memory_space<vmem>>, vector<1x128xf32>
    %c118 = arith.constant 118 : index
    %c0_229 = arith.constant 0 : index
    %429 = vector.load %arg8[%c118, %c0_229] : memref<136x128xf32, #tpu.memory_space<vmem>>, vector<1x128xf32>
    tpu.vector_store %arg8[%c118, %c0_229], %428 {strides = array<i32>} : memref<136x128xf32, #tpu.memory_space<vmem>>, vector<1x128xf32>,
    %c56_i32_230 = arith.constant 56 : i32
    %430 = arith.addi %0, %c56_i32_230 : i32
    %c5_i32_231 = arith.constant 5 : i32
    %431 = arith.addi %430, %c5_i32_231 : i32
    %432 = arith.index_cast %431 : i32 to index
    %433 = memref.load %arg1[%432] : memref<128xi32, #tpu.memory_space<smem>>
    %434 = arith.index_cast %433 : i32 to index
    %c0_232 = arith.constant 0 : index
    %435 = vector.load %arg2[%434, %c0_232] : memref<64x128xf32, #tpu.memory_space<vmem>>, vector<1x128xf32>
    %c119 = arith.constant 119 : index
    %c0_233 = arith.constant 0 : index
    %436 = vector.load %arg8[%c119, %c0_233] : memref<136x128xf32, #tpu.memory_space<vmem>>, vector<1x128xf32>
    tpu.vector_store %arg8[%c119, %c0_233], %435 {strides = array<i32>} : memref<136x128xf32, #tpu.memory_space<vmem>>, vector<1x128xf32>,
    %c56_i32_234 = arith.constant 56 : i32
    %437 = arith.addi %0, %c56_i32_234 : i32
    %c6_i32_235 = arith.constant 6 : i32
    %438 = arith.addi %437, %c6_i32_235 : i32
    %439 = arith.index_cast %438 : i32 to index
    %440 = memref.load %arg1[%439] : memref<128xi32, #tpu.memory_space<smem>>
    %441 = arith.index_cast %440 : i32 to index
    %c0_236 = arith.constant 0 : index
    %442 = vector.load %arg2[%441, %c0_236] : memref<64x128xf32, #tpu.memory_space<vmem>>, vector<1x128xf32>
    %c120 = arith.constant 120 : index
    %c0_237 = arith.constant 0 : index
    %443 = vector.load %arg8[%c120, %c0_237] : memref<136x128xf32, #tpu.memory_space<vmem>>, vector<1x128xf32>
    tpu.vector_store %arg8[%c120, %c0_237], %442 {strides = array<i32>} : memref<136x128xf32, #tpu.memory_space<vmem>>, vector<1x128xf32>,
    %c56_i32_238 = arith.constant 56 : i32
    %444 = arith.addi %0, %c56_i32_238 : i32
    %c7_i32_239 = arith.constant 7 : i32
    %445 = arith.addi %444, %c7_i32_239 : i32
    %446 = arith.index_cast %445 : i32 to index
    %447 = memref.load %arg1[%446] : memref<128xi32, #tpu.memory_space<smem>>
    %448 = arith.index_cast %447 : i32 to index
    %c0_240 = arith.constant 0 : index
    %449 = vector.load %arg2[%448, %c0_240] : memref<64x128xf32, #tpu.memory_space<vmem>>, vector<1x128xf32>
    %c121 = arith.constant 121 : index
    %c0_241 = arith.constant 0 : index
    %450 = vector.load %arg8[%c121, %c0_241] : memref<136x128xf32, #tpu.memory_space<vmem>>, vector<1x128xf32>
    tpu.vector_store %arg8[%c121, %c0_241], %449 {strides = array<i32>} : memref<136x128xf32, #tpu.memory_space<vmem>>, vector<1x128xf32>,
    %451 = tpu.iota {dimensions = array<i32: 0>} : vector<64x128xi32>
    %452 = tpu.iota {dimensions = array<i32: 1>} : vector<64x128xi32>
    %c2_i32_242 = arith.constant 2 : i32
    %453 = vector.broadcast %c2_i32_242 : i32 to vector<64x128xi32>
    %454 = arith.muli %453, %451 : vector<64x128xi32>
    %455 = arith.cmpi eq, %452, %454 : vector<64x128xi32>
    %456 = arith.extui %455 : vector<64x128xi1> to vector<64x128xi32>
    %457 = arith.sitofp %456 : vector<64x128xi32> to vector<64x128xf32>
    %458 = arith.truncf %457 : vector<64x128xf32> to vector<64x128xbf16>
    %c2_i32_243 = arith.constant 2 : i32
    %459 = vector.broadcast %c2_i32_243 : i32 to vector<64x128xi32>
    %460 = arith.muli %459, %451 : vector<64x128xi32>
    %c1_i32_244 = arith.constant 1 : i32
    %461 = vector.broadcast %c1_i32_244 : i32 to vector<64x128xi32>
    %462 = arith.addi %460, %461 : vector<64x128xi32>
    %463 = arith.cmpi eq, %452, %462 : vector<64x128xi32>
    %464 = arith.extui %463 : vector<64x128xi1> to vector<64x128xi32>
    %465 = arith.sitofp %464 : vector<64x128xi32> to vector<64x128xf32>
    %466 = arith.truncf %465 : vector<64x128xf32> to vector<64x128xbf16>
    %c0_245 = arith.constant 0 : index
    %c0_246 = arith.constant 0 : index
    %467 = vector.load %arg8[%c0_245, %c0_246] : memref<136x128xf32, #tpu.memory_space<vmem>>, vector<136x128xf32>
    %468 = arith.truncf %467 : vector<136x128xf32> to vector<136x128xbf16>
    %469 = vector.extract_strided_slice %468 {offsets = [0, 0], sizes = [128, 128], strides = [1, 1]} : vector<136x128xbf16> to vector<128x128xbf16>
    %c0_247 = arith.constant 0 : index
    %c0_248 = arith.constant 0 : index
    %c0_249 = arith.constant 0 : index
    %c0_250 = arith.constant 0 : index
    %470 = vector.load %arg3[%c0_247, %c0_248, %c0_249, %c0_250] : memref<4x3x128x128xbf16, #tpu.memory_space<vmem>>, vector<1x1x128x128xbf16>
    %471 = vector.shape_cast %470 : vector<1x1x128x128xbf16> to vector<128x128xbf16>
    %cst_251 = arith.constant dense<0.000000e+00> : vector<128x128xf32>
    %472 = tpu.matmul %469, %471, %cst_251 {dimension_numbers = #tpu.dot_dimension_numbers<[1], [0], [0], [1], [0, 0, 1, 1], [], []>} : vector<128x128xbf16>, vector<128x128xbf16>, vector<128x128xf32> -> vector<128x128xf32>
    %473 = vector.extract_strided_slice %468 {offsets = [1, 0], sizes = [128, 128], strides = [1, 1]} : vector<136x128xbf16> to vector<128x128xbf16>
    %c0_252 = arith.constant 0 : index
    %c1 = arith.constant 1 : index
    %c0_253 = arith.constant 0 : index
    %c0_254 = arith.constant 0 : index
    %474 = vector.load %arg3[%c0_252, %c1, %c0_253, %c0_254] : memref<4x3x128x128xbf16, #tpu.memory_space<vmem>>, vector<1x1x128x128xbf16>
    %475 = vector.shape_cast %474 : vector<1x1x128x128xbf16> to vector<128x128xbf16>
    %cst_255 = arith.constant dense<0.000000e+00> : vector<128x128xf32>
    %476 = tpu.matmul %473, %475, %cst_255 {dimension_numbers = #tpu.dot_dimension_numbers<[1], [0], [0], [1], [0, 0, 1, 1], [], []>} : vector<128x128xbf16>, vector<128x128xbf16>, vector<128x128xf32> -> vector<128x128xf32>
    %477 = arith.addf %472, %476 : vector<128x128xf32>
    %478 = vector.extract_strided_slice %468 {offsets = [2, 0], sizes = [128, 128], strides = [1, 1]} : vector<136x128xbf16> to vector<128x128xbf16>
    %c0_256 = arith.constant 0 : index
    %c2_257 = arith.constant 2 : index
    %c0_258 = arith.constant 0 : index
    %c0_259 = arith.constant 0 : index
    %479 = vector.load %arg3[%c0_256, %c2_257, %c0_258, %c0_259] : memref<4x3x128x128xbf16, #tpu.memory_space<vmem>>, vector<1x1x128x128xbf16>
    %480 = vector.shape_cast %479 : vector<1x1x128x128xbf16> to vector<128x128xbf16>
    %cst_260 = arith.constant dense<0.000000e+00> : vector<128x128xf32>
    %481 = tpu.matmul %478, %480, %cst_260 {dimension_numbers = #tpu.dot_dimension_numbers<[1], [0], [0], [1], [0, 0, 1, 1], [], []>} : vector<128x128xbf16>, vector<128x128xbf16>, vector<128x128xf32> -> vector<128x128xf32>
    %482 = arith.addf %477, %481 : vector<128x128xf32>
    %c0_261 = arith.constant 0 : index
    %c0_262 = arith.constant 0 : index
    %483 = vector.load %arg4[%c0_261, %c0_262] : memref<4x128xf32, #tpu.memory_space<vmem>>, vector<1x128xf32>
    %484 = vector.shape_cast %483 : vector<1x128xf32> to vector<128xf32>
    %485 = vector.shape_cast %484 : vector<128xf32> to vector<1x128xf32>
    %486 = vector.broadcast %485 : vector<1x128xf32> to vector<128x128xf32>
    %487 = arith.addf %482, %486 : vector<128x128xf32>
    %cst_263 = arith.constant 0.000000e+00 : f32
    %488 = vector.broadcast %cst_263 : f32 to vector<128x128xf32>
    %489 = arith.maximumf %487, %488 : vector<128x128xf32>
    %490 = arith.truncf %489 : vector<128x128xf32> to vector<128x128xbf16>
    %cst_264 = arith.constant dense<0.000000e+00> : vector<64x128xf32>
    %491 = tpu.matmul %458, %490, %cst_264 {dimension_numbers = #tpu.dot_dimension_numbers<[1], [0], [0], [1], [0, 0, 1, 1], [], []>} : vector<64x128xbf16>, vector<128x128xbf16>, vector<64x128xf32> -> vector<64x128xf32>
    %cst_265 = arith.constant dense<0.000000e+00> : vector<64x128xf32>
    %492 = tpu.matmul %466, %490, %cst_265 {dimension_numbers = #tpu.dot_dimension_numbers<[1], [0], [0], [1], [0, 0, 1, 1], [], []>} : vector<64x128xbf16>, vector<128x128xbf16>, vector<64x128xf32> -> vector<64x128xf32>
    %493 = arith.maximumf %491, %492 : vector<64x128xf32>
    %494 = vector.extract_strided_slice %493 {offsets = [0, 0], sizes = [5, 128], strides = [1, 1]} : vector<64x128xf32> to vector<5x128xf32>
    %c2_266 = arith.constant 2 : index
    %c0_267 = arith.constant 0 : index
    %495 = vector.load %arg8[%c2_266, %c0_267] : memref<136x128xf32, #tpu.memory_space<vmem>>, vector<5x128xf32>
    tpu.vector_store %arg8[%c2_266, %c0_267], %494 {strides = array<i32>} : memref<136x128xf32, #tpu.memory_space<vmem>>, vector<5x128xf32>,
    %cst_268 = arith.constant 0.000000e+00 : f32
    %496 = vector.broadcast %cst_268 : f32 to vector<2x128xf32>
    %c7_269 = arith.constant 7 : index
    %c0_270 = arith.constant 0 : index
    %497 = vector.load %arg8[%c7_269, %c0_270] : memref<136x128xf32, #tpu.memory_space<vmem>>, vector<2x128xf32>
    tpu.vector_store %arg8[%c7_269, %c0_270], %496 {strides = array<i32>} : memref<136x128xf32, #tpu.memory_space<vmem>>, vector<2x128xf32>,
    %498 = vector.extract_strided_slice %493 {offsets = [8, 0], sizes = [5, 128], strides = [1, 1]} : vector<64x128xf32> to vector<5x128xf32>
    %c18_271 = arith.constant 18 : index
    %c0_272 = arith.constant 0 : index
    %499 = vector.load %arg8[%c18_271, %c0_272] : memref<136x128xf32, #tpu.memory_space<vmem>>, vector<5x128xf32>
    tpu.vector_store %arg8[%c18_271, %c0_272], %498 {strides = array<i32>} : memref<136x128xf32, #tpu.memory_space<vmem>>, vector<5x128xf32>,
    %cst_273 = arith.constant 0.000000e+00 : f32
    %500 = vector.broadcast %cst_273 : f32 to vector<2x128xf32>
    %c23_274 = arith.constant 23 : index
    %c0_275 = arith.constant 0 : index
    %501 = vector.load %arg8[%c23_274, %c0_275] : memref<136x128xf32, #tpu.memory_space<vmem>>, vector<2x128xf32>
    tpu.vector_store %arg8[%c23_274, %c0_275], %500 {strides = array<i32>} : memref<136x128xf32, #tpu.memory_space<vmem>>, vector<2x128xf32>,
    %502 = vector.extract_strided_slice %493 {offsets = [16, 0], sizes = [5, 128], strides = [1, 1]} : vector<64x128xf32> to vector<5x128xf32>
    %c34_276 = arith.constant 34 : index
    %c0_277 = arith.constant 0 : index
    %503 = vector.load %arg8[%c34_276, %c0_277] : memref<136x128xf32, #tpu.memory_space<vmem>>, vector<5x128xf32>
    tpu.vector_store %arg8[%c34_276, %c0_277], %502 {strides = array<i32>} : memref<136x128xf32, #tpu.memory_space<vmem>>, vector<5x128xf32>,
    %cst_278 = arith.constant 0.000000e+00 : f32
    %504 = vector.broadcast %cst_278 : f32 to vector<2x128xf32>
    %c39_279 = arith.constant 39 : index
    %c0_280 = arith.constant 0 : index
    %505 = vector.load %arg8[%c39_279, %c0_280] : memref<136x128xf32, #tpu.memory_space<vmem>>, vector<2x128xf32>
    tpu.vector_store %arg8[%c39_279, %c0_280], %504 {strides = array<i32>} : memref<136x128xf32, #tpu.memory_space<vmem>>, vector<2x128xf32>,
    %506 = vector.extract_strided_slice %493 {offsets = [24, 0], sizes = [5, 128], strides = [1, 1]} : vector<64x128xf32> to vector<5x128xf32>
    %c50_281 = arith.constant 50 : index
    %c0_282 = arith.constant 0 : index
    %507 = vector.load %arg8[%c50_281, %c0_282] : memref<136x128xf32, #tpu.memory_space<vmem>>, vector<5x128xf32>
    tpu.vector_store %arg8[%c50_281, %c0_282], %506 {strides = array<i32>} : memref<136x128xf32, #tpu.memory_space<vmem>>, vector<5x128xf32>,
    %cst_283 = arith.constant 0.000000e+00 : f32
    %508 = vector.broadcast %cst_283 : f32 to vector<2x128xf32>
    %c55_284 = arith.constant 55 : index
    %c0_285 = arith.constant 0 : index
    %509 = vector.load %arg8[%c55_284, %c0_285] : memref<136x128xf32, #tpu.memory_space<vmem>>, vector<2x128xf32>
    tpu.vector_store %arg8[%c55_284, %c0_285], %508 {strides = array<i32>} : memref<136x128xf32, #tpu.memory_space<vmem>>, vector<2x128xf32>,
    %510 = vector.extract_strided_slice %493 {offsets = [32, 0], sizes = [5, 128], strides = [1, 1]} : vector<64x128xf32> to vector<5x128xf32>
    %c66_286 = arith.constant 66 : index
    %c0_287 = arith.constant 0 : index
    %511 = vector.load %arg8[%c66_286, %c0_287] : memref<136x128xf32, #tpu.memory_space<vmem>>, vector<5x128xf32>
    tpu.vector_store %arg8[%c66_286, %c0_287], %510 {strides = array<i32>} : memref<136x128xf32, #tpu.memory_space<vmem>>, vector<5x128xf32>,
    %cst_288 = arith.constant 0.000000e+00 : f32
    %512 = vector.broadcast %cst_288 : f32 to vector<2x128xf32>
    %c71_289 = arith.constant 71 : index
    %c0_290 = arith.constant 0 : index
    %513 = vector.load %arg8[%c71_289, %c0_290] : memref<136x128xf32, #tpu.memory_space<vmem>>, vector<2x128xf32>
    tpu.vector_store %arg8[%c71_289, %c0_290], %512 {strides = array<i32>} : memref<136x128xf32, #tpu.memory_space<vmem>>, vector<2x128xf32>,
    %514 = vector.extract_strided_slice %493 {offsets = [40, 0], sizes = [5, 128], strides = [1, 1]} : vector<64x128xf32> to vector<5x128xf32>
    %c82_291 = arith.constant 82 : index
    %c0_292 = arith.constant 0 : index
    %515 = vector.load %arg8[%c82_291, %c0_292] : memref<136x128xf32, #tpu.memory_space<vmem>>, vector<5x128xf32>
    tpu.vector_store %arg8[%c82_291, %c0_292], %514 {strides = array<i32>} : memref<136x128xf32, #tpu.memory_space<vmem>>, vector<5x128xf32>,
    %cst_293 = arith.constant 0.000000e+00 : f32
    %516 = vector.broadcast %cst_293 : f32 to vector<2x128xf32>
    %c87_294 = arith.constant 87 : index
    %c0_295 = arith.constant 0 : index
    %517 = vector.load %arg8[%c87_294, %c0_295] : memref<136x128xf32, #tpu.memory_space<vmem>>, vector<2x128xf32>
    tpu.vector_store %arg8[%c87_294, %c0_295], %516 {strides = array<i32>} : memref<136x128xf32, #tpu.memory_space<vmem>>, vector<2x128xf32>,
    %518 = vector.extract_strided_slice %493 {offsets = [48, 0], sizes = [5, 128], strides = [1, 1]} : vector<64x128xf32> to vector<5x128xf32>
    %c98_296 = arith.constant 98 : index
    %c0_297 = arith.constant 0 : index
    %519 = vector.load %arg8[%c98_296, %c0_297] : memref<136x128xf32, #tpu.memory_space<vmem>>, vector<5x128xf32>
    tpu.vector_store %arg8[%c98_296, %c0_297], %518 {strides = array<i32>} : memref<136x128xf32, #tpu.memory_space<vmem>>, vector<5x128xf32>,
    %cst_298 = arith.constant 0.000000e+00 : f32
    %520 = vector.broadcast %cst_298 : f32 to vector<2x128xf32>
    %c103_299 = arith.constant 103 : index
    %c0_300 = arith.constant 0 : index
    %521 = vector.load %arg8[%c103_299, %c0_300] : memref<136x128xf32, #tpu.memory_space<vmem>>, vector<2x128xf32>
    tpu.vector_store %arg8[%c103_299, %c0_300], %520 {strides = array<i32>} : memref<136x128xf32, #tpu.memory_space<vmem>>, vector<2x128xf32>,
    %522 = vector.extract_strided_slice %493 {offsets = [56, 0], sizes = [5, 128], strides = [1, 1]} : vector<64x128xf32> to vector<5x128xf32>
    %c114_301 = arith.constant 114 : index
    %c0_302 = arith.constant 0 : index
    %523 = vector.load %arg8[%c114_301, %c0_302] : memref<136x128xf32, #tpu.memory_space<vmem>>, vector<5x128xf32>
    tpu.vector_store %arg8[%c114_301, %c0_302], %522 {strides = array<i32>} : memref<136x128xf32, #tpu.memory_space<vmem>>, vector<5x128xf32>,
    %cst_303 = arith.constant 0.000000e+00 : f32
    %524 = vector.broadcast %cst_303 : f32 to vector<2x128xf32>
    %c119_304 = arith.constant 119 : index
    %c0_305 = arith.constant 0 : index
    %525 = vector.load %arg8[%c119_304, %c0_305] : memref<136x128xf32, #tpu.memory_space<vmem>>, vector<2x128xf32>
    tpu.vector_store %arg8[%c119_304, %c0_305], %524 {strides = array<i32>} : memref<136x128xf32, #tpu.memory_space<vmem>>, vector<2x128xf32>,
    %c0_306 = arith.constant 0 : index
    %c0_307 = arith.constant 0 : index
    %526 = vector.load %arg8[%c0_306, %c0_307] : memref<136x128xf32, #tpu.memory_space<vmem>>, vector<136x128xf32>
    %527 = arith.truncf %526 : vector<136x128xf32> to vector<136x128xbf16>
    %528 = vector.extract_strided_slice %527 {offsets = [0, 0], sizes = [128, 128], strides = [1, 1]} : vector<136x128xbf16> to vector<128x128xbf16>
    %c1_308 = arith.constant 1 : index
    %c0_309 = arith.constant 0 : index
    %c0_310 = arith.constant 0 : index
    %c0_311 = arith.constant 0 : index
    %529 = vector.load %arg3[%c1_308, %c0_309, %c0_310, %c0_311] : memref<4x3x128x128xbf16, #tpu.memory_space<vmem>>, vector<1x1x128x128xbf16>
    %530 = vector.shape_cast %529 : vector<1x1x128x128xbf16> to vector<128x128xbf16>
    %cst_312 = arith.constant dense<0.000000e+00> : vector<128x128xf32>
    %531 = tpu.matmul %528, %530, %cst_312 {dimension_numbers = #tpu.dot_dimension_numbers<[1], [0], [0], [1], [0, 0, 1, 1], [], []>} : vector<128x128xbf16>, vector<128x128xbf16>, vector<128x128xf32> -> vector<128x128xf32>
    %532 = vector.extract_strided_slice %527 {offsets = [1, 0], sizes = [128, 128], strides = [1, 1]} : vector<136x128xbf16> to vector<128x128xbf16>
    %c1_313 = arith.constant 1 : index
    %c1_314 = arith.constant 1 : index
    %c0_315 = arith.constant 0 : index
    %c0_316 = arith.constant 0 : index
    %533 = vector.load %arg3[%c1_313, %c1_314, %c0_315, %c0_316] : memref<4x3x128x128xbf16, #tpu.memory_space<vmem>>, vector<1x1x128x128xbf16>
    %534 = vector.shape_cast %533 : vector<1x1x128x128xbf16> to vector<128x128xbf16>
    %cst_317 = arith.constant dense<0.000000e+00> : vector<128x128xf32>
    %535 = tpu.matmul %532, %534, %cst_317 {dimension_numbers = #tpu.dot_dimension_numbers<[1], [0], [0], [1], [0, 0, 1, 1], [], []>} : vector<128x128xbf16>, vector<128x128xbf16>, vector<128x128xf32> -> vector<128x128xf32>
    %536 = arith.addf %531, %535 : vector<128x128xf32>
    %537 = vector.extract_strided_slice %527 {offsets = [2, 0], sizes = [128, 128], strides = [1, 1]} : vector<136x128xbf16> to vector<128x128xbf16>
    %c1_318 = arith.constant 1 : index
    %c2_319 = arith.constant 2 : index
    %c0_320 = arith.constant 0 : index
    %c0_321 = arith.constant 0 : index
    %538 = vector.load %arg3[%c1_318, %c2_319, %c0_320, %c0_321] : memref<4x3x128x128xbf16, #tpu.memory_space<vmem>>, vector<1x1x128x128xbf16>
    %539 = vector.shape_cast %538 : vector<1x1x128x128xbf16> to vector<128x128xbf16>
    %cst_322 = arith.constant dense<0.000000e+00> : vector<128x128xf32>
    %540 = tpu.matmul %537, %539, %cst_322 {dimension_numbers = #tpu.dot_dimension_numbers<[1], [0], [0], [1], [0, 0, 1, 1], [], []>} : vector<128x128xbf16>, vector<128x128xbf16>, vector<128x128xf32> -> vector<128x128xf32>
    %541 = arith.addf %536, %540 : vector<128x128xf32>
    %c1_323 = arith.constant 1 : index
    %c0_324 = arith.constant 0 : index
    %542 = vector.load %arg4[%c1_323, %c0_324] : memref<4x128xf32, #tpu.memory_space<vmem>>, vector<1x128xf32>
    %543 = vector.shape_cast %542 : vector<1x128xf32> to vector<128xf32>
    %544 = vector.shape_cast %543 : vector<128xf32> to vector<1x128xf32>
    %545 = vector.broadcast %544 : vector<1x128xf32> to vector<128x128xf32>
    %546 = arith.addf %541, %545 : vector<128x128xf32>
    %cst_325 = arith.constant 0.000000e+00 : f32
    %547 = vector.broadcast %cst_325 : f32 to vector<128x128xf32>
    %548 = arith.maximumf %546, %547 : vector<128x128xf32>
    %549 = arith.truncf %548 : vector<128x128xf32> to vector<128x128xbf16>
    %cst_326 = arith.constant dense<0.000000e+00> : vector<64x128xf32>
    %550 = tpu.matmul %458, %549, %cst_326 {dimension_numbers = #tpu.dot_dimension_numbers<[1], [0], [0], [1], [0, 0, 1, 1], [], []>} : vector<64x128xbf16>, vector<128x128xbf16>, vector<64x128xf32> -> vector<64x128xf32>
    %cst_327 = arith.constant dense<0.000000e+00> : vector<64x128xf32>
    %551 = tpu.matmul %466, %549, %cst_327 {dimension_numbers = #tpu.dot_dimension_numbers<[1], [0], [0], [1], [0, 0, 1, 1], [], []>} : vector<64x128xbf16>, vector<128x128xbf16>, vector<64x128xf32> -> vector<64x128xf32>
    %552 = arith.maximumf %550, %551 : vector<64x128xf32>
    %553 = vector.extract_strided_slice %552 {offsets = [0, 0], sizes = [3, 128], strides = [1, 1]} : vector<64x128xf32> to vector<3x128xf32>
    %c2_328 = arith.constant 2 : index
    %c0_329 = arith.constant 0 : index
    %554 = vector.load %arg8[%c2_328, %c0_329] : memref<136x128xf32, #tpu.memory_space<vmem>>, vector<3x128xf32>
    tpu.vector_store %arg8[%c2_328, %c0_329], %553 {strides = array<i32>} : memref<136x128xf32, #tpu.memory_space<vmem>>, vector<3x128xf32>,
    %cst_330 = arith.constant 0.000000e+00 : f32
    %555 = vector.broadcast %cst_330 : f32 to vector<2x128xf32>
    %c5_331 = arith.constant 5 : index
    %c0_332 = arith.constant 0 : index
    %556 = vector.load %arg8[%c5_331, %c0_332] : memref<136x128xf32, #tpu.memory_space<vmem>>, vector<2x128xf32>
    tpu.vector_store %arg8[%c5_331, %c0_332], %555 {strides = array<i32>} : memref<136x128xf32, #tpu.memory_space<vmem>>, vector<2x128xf32>,
    %557 = vector.extract_strided_slice %552 {offsets = [8, 0], sizes = [3, 128], strides = [1, 1]} : vector<64x128xf32> to vector<3x128xf32>
    %c18_333 = arith.constant 18 : index
    %c0_334 = arith.constant 0 : index
    %558 = vector.load %arg8[%c18_333, %c0_334] : memref<136x128xf32, #tpu.memory_space<vmem>>, vector<3x128xf32>
    tpu.vector_store %arg8[%c18_333, %c0_334], %557 {strides = array<i32>} : memref<136x128xf32, #tpu.memory_space<vmem>>, vector<3x128xf32>,
    %cst_335 = arith.constant 0.000000e+00 : f32
    %559 = vector.broadcast %cst_335 : f32 to vector<2x128xf32>
    %c21_336 = arith.constant 21 : index
    %c0_337 = arith.constant 0 : index
    %560 = vector.load %arg8[%c21_336, %c0_337] : memref<136x128xf32, #tpu.memory_space<vmem>>, vector<2x128xf32>
    tpu.vector_store %arg8[%c21_336, %c0_337], %559 {strides = array<i32>} : memref<136x128xf32, #tpu.memory_space<vmem>>, vector<2x128xf32>,
    %561 = vector.extract_strided_slice %552 {offsets = [16, 0], sizes = [3, 128], strides = [1, 1]} : vector<64x128xf32> to vector<3x128xf32>
    %c34_338 = arith.constant 34 : index
    %c0_339 = arith.constant 0 : index
    %562 = vector.load %arg8[%c34_338, %c0_339] : memref<136x128xf32, #tpu.memory_space<vmem>>, vector<3x128xf32>
    tpu.vector_store %arg8[%c34_338, %c0_339], %561 {strides = array<i32>} : memref<136x128xf32, #tpu.memory_space<vmem>>, vector<3x128xf32>,
    %cst_340 = arith.constant 0.000000e+00 : f32
    %563 = vector.broadcast %cst_340 : f32 to vector<2x128xf32>
    %c37_341 = arith.constant 37 : index
    %c0_342 = arith.constant 0 : index
    %564 = vector.load %arg8[%c37_341, %c0_342] : memref<136x128xf32, #tpu.memory_space<vmem>>, vector<2x128xf32>
    tpu.vector_store %arg8[%c37_341, %c0_342], %563 {strides = array<i32>} : memref<136x128xf32, #tpu.memory_space<vmem>>, vector<2x128xf32>,
    %565 = vector.extract_strided_slice %552 {offsets = [24, 0], sizes = [3, 128], strides = [1, 1]} : vector<64x128xf32> to vector<3x128xf32>
    %c50_343 = arith.constant 50 : index
    %c0_344 = arith.constant 0 : index
    %566 = vector.load %arg8[%c50_343, %c0_344] : memref<136x128xf32, #tpu.memory_space<vmem>>, vector<3x128xf32>
    tpu.vector_store %arg8[%c50_343, %c0_344], %565 {strides = array<i32>} : memref<136x128xf32, #tpu.memory_space<vmem>>, vector<3x128xf32>,
    %cst_345 = arith.constant 0.000000e+00 : f32
    %567 = vector.broadcast %cst_345 : f32 to vector<2x128xf32>
    %c53_346 = arith.constant 53 : index
    %c0_347 = arith.constant 0 : index
    %568 = vector.load %arg8[%c53_346, %c0_347] : memref<136x128xf32, #tpu.memory_space<vmem>>, vector<2x128xf32>
    tpu.vector_store %arg8[%c53_346, %c0_347], %567 {strides = array<i32>} : memref<136x128xf32, #tpu.memory_space<vmem>>, vector<2x128xf32>,
    %569 = vector.extract_strided_slice %552 {offsets = [32, 0], sizes = [3, 128], strides = [1, 1]} : vector<64x128xf32> to vector<3x128xf32>
    %c66_348 = arith.constant 66 : index
    %c0_349 = arith.constant 0 : index
    %570 = vector.load %arg8[%c66_348, %c0_349] : memref<136x128xf32, #tpu.memory_space<vmem>>, vector<3x128xf32>
    tpu.vector_store %arg8[%c66_348, %c0_349], %569 {strides = array<i32>} : memref<136x128xf32, #tpu.memory_space<vmem>>, vector<3x128xf32>,
    %cst_350 = arith.constant 0.000000e+00 : f32
    %571 = vector.broadcast %cst_350 : f32 to vector<2x128xf32>
    %c69_351 = arith.constant 69 : index
    %c0_352 = arith.constant 0 : index
    %572 = vector.load %arg8[%c69_351, %c0_352] : memref<136x128xf32, #tpu.memory_space<vmem>>, vector<2x128xf32>
    tpu.vector_store %arg8[%c69_351, %c0_352], %571 {strides = array<i32>} : memref<136x128xf32, #tpu.memory_space<vmem>>, vector<2x128xf32>,
    %573 = vector.extract_strided_slice %552 {offsets = [40, 0], sizes = [3, 128], strides = [1, 1]} : vector<64x128xf32> to vector<3x128xf32>
    %c82_353 = arith.constant 82 : index
    %c0_354 = arith.constant 0 : index
    %574 = vector.load %arg8[%c82_353, %c0_354] : memref<136x128xf32, #tpu.memory_space<vmem>>, vector<3x128xf32>
    tpu.vector_store %arg8[%c82_353, %c0_354], %573 {strides = array<i32>} : memref<136x128xf32, #tpu.memory_space<vmem>>, vector<3x128xf32>,
    %cst_355 = arith.constant 0.000000e+00 : f32
    %575 = vector.broadcast %cst_355 : f32 to vector<2x128xf32>
    %c85_356 = arith.constant 85 : index
    %c0_357 = arith.constant 0 : index
    %576 = vector.load %arg8[%c85_356, %c0_357] : memref<136x128xf32, #tpu.memory_space<vmem>>, vector<2x128xf32>
    tpu.vector_store %arg8[%c85_356, %c0_357], %575 {strides = array<i32>} : memref<136x128xf32, #tpu.memory_space<vmem>>, vector<2x128xf32>,
    %577 = vector.extract_strided_slice %552 {offsets = [48, 0], sizes = [3, 128], strides = [1, 1]} : vector<64x128xf32> to vector<3x128xf32>
    %c98_358 = arith.constant 98 : index
    %c0_359 = arith.constant 0 : index
    %578 = vector.load %arg8[%c98_358, %c0_359] : memref<136x128xf32, #tpu.memory_space<vmem>>, vector<3x128xf32>
    tpu.vector_store %arg8[%c98_358, %c0_359], %577 {strides = array<i32>} : memref<136x128xf32, #tpu.memory_space<vmem>>, vector<3x128xf32>,
    %cst_360 = arith.constant 0.000000e+00 : f32
    %579 = vector.broadcast %cst_360 : f32 to vector<2x128xf32>
    %c101_361 = arith.constant 101 : index
    %c0_362 = arith.constant 0 : index
    %580 = vector.load %arg8[%c101_361, %c0_362] : memref<136x128xf32, #tpu.memory_space<vmem>>, vector<2x128xf32>
    tpu.vector_store %arg8[%c101_361, %c0_362], %579 {strides = array<i32>} : memref<136x128xf32, #tpu.memory_space<vmem>>, vector<2x128xf32>,
    %581 = vector.extract_strided_slice %552 {offsets = [56, 0], sizes = [3, 128], strides = [1, 1]} : vector<64x128xf32> to vector<3x128xf32>
    %c114_363 = arith.constant 114 : index
    %c0_364 = arith.constant 0 : index
    %582 = vector.load %arg8[%c114_363, %c0_364] : memref<136x128xf32, #tpu.memory_space<vmem>>, vector<3x128xf32>
    tpu.vector_store %arg8[%c114_363, %c0_364], %581 {strides = array<i32>} : memref<136x128xf32, #tpu.memory_space<vmem>>, vector<3x128xf32>,
    %cst_365 = arith.constant 0.000000e+00 : f32
    %583 = vector.broadcast %cst_365 : f32 to vector<2x128xf32>
    %c117_366 = arith.constant 117 : index
    %c0_367 = arith.constant 0 : index
    %584 = vector.load %arg8[%c117_366, %c0_367] : memref<136x128xf32, #tpu.memory_space<vmem>>, vector<2x128xf32>
    tpu.vector_store %arg8[%c117_366, %c0_367], %583 {strides = array<i32>} : memref<136x128xf32, #tpu.memory_space<vmem>>, vector<2x128xf32>,
    %c0_368 = arith.constant 0 : index
    %c0_369 = arith.constant 0 : index
    %585 = vector.load %arg8[%c0_368, %c0_369] : memref<136x128xf32, #tpu.memory_space<vmem>>, vector<136x128xf32>
    %586 = arith.truncf %585 : vector<136x128xf32> to vector<136x128xbf16>
    %587 = vector.extract_strided_slice %586 {offsets = [0, 0], sizes = [128, 128], strides = [1, 1]} : vector<136x128xbf16> to vector<128x128xbf16>
    %c2_370 = arith.constant 2 : index
    %c0_371 = arith.constant 0 : index
    %c0_372 = arith.constant 0 : index
    %c0_373 = arith.constant 0 : index
    %588 = vector.load %arg3[%c2_370, %c0_371, %c0_372, %c0_373] : memref<4x3x128x128xbf16, #tpu.memory_space<vmem>>, vector<1x1x128x128xbf16>
    %589 = vector.shape_cast %588 : vector<1x1x128x128xbf16> to vector<128x128xbf16>
    %cst_374 = arith.constant dense<0.000000e+00> : vector<128x128xf32>
    %590 = tpu.matmul %587, %589, %cst_374 {dimension_numbers = #tpu.dot_dimension_numbers<[1], [0], [0], [1], [0, 0, 1, 1], [], []>} : vector<128x128xbf16>, vector<128x128xbf16>, vector<128x128xf32> -> vector<128x128xf32>
    %591 = vector.extract_strided_slice %586 {offsets = [1, 0], sizes = [128, 128], strides = [1, 1]} : vector<136x128xbf16> to vector<128x128xbf16>
    %c2_375 = arith.constant 2 : index
    %c1_376 = arith.constant 1 : index
    %c0_377 = arith.constant 0 : index
    %c0_378 = arith.constant 0 : index
    %592 = vector.load %arg3[%c2_375, %c1_376, %c0_377, %c0_378] : memref<4x3x128x128xbf16, #tpu.memory_space<vmem>>, vector<1x1x128x128xbf16>
    %593 = vector.shape_cast %592 : vector<1x1x128x128xbf16> to vector<128x128xbf16>
    %cst_379 = arith.constant dense<0.000000e+00> : vector<128x128xf32>
    %594 = tpu.matmul %591, %593, %cst_379 {dimension_numbers = #tpu.dot_dimension_numbers<[1], [0], [0], [1], [0, 0, 1, 1], [], []>} : vector<128x128xbf16>, vector<128x128xbf16>, vector<128x128xf32> -> vector<128x128xf32>
    %595 = arith.addf %590, %594 : vector<128x128xf32>
    %596 = vector.extract_strided_slice %586 {offsets = [2, 0], sizes = [128, 128], strides = [1, 1]} : vector<136x128xbf16> to vector<128x128xbf16>
    %c2_380 = arith.constant 2 : index
    %c2_381 = arith.constant 2 : index
    %c0_382 = arith.constant 0 : index
    %c0_383 = arith.constant 0 : index
    %597 = vector.load %arg3[%c2_380, %c2_381, %c0_382, %c0_383] : memref<4x3x128x128xbf16, #tpu.memory_space<vmem>>, vector<1x1x128x128xbf16>
    %598 = vector.shape_cast %597 : vector<1x1x128x128xbf16> to vector<128x128xbf16>
    %cst_384 = arith.constant dense<0.000000e+00> : vector<128x128xf32>
    %599 = tpu.matmul %596, %598, %cst_384 {dimension_numbers = #tpu.dot_dimension_numbers<[1], [0], [0], [1], [0, 0, 1, 1], [], []>} : vector<128x128xbf16>, vector<128x128xbf16>, vector<128x128xf32> -> vector<128x128xf32>
    %600 = arith.addf %595, %599 : vector<128x128xf32>
    %c2_385 = arith.constant 2 : index
    %c0_386 = arith.constant 0 : index
    %601 = vector.load %arg4[%c2_385, %c0_386] : memref<4x128xf32, #tpu.memory_space<vmem>>, vector<1x128xf32>
    %602 = vector.shape_cast %601 : vector<1x128xf32> to vector<128xf32>
    %603 = vector.shape_cast %602 : vector<128xf32> to vector<1x128xf32>
    %604 = vector.broadcast %603 : vector<1x128xf32> to vector<128x128xf32>
    %605 = arith.addf %600, %604 : vector<128x128xf32>
    %cst_387 = arith.constant 0.000000e+00 : f32
    %606 = vector.broadcast %cst_387 : f32 to vector<128x128xf32>
    %607 = arith.maximumf %605, %606 : vector<128x128xf32>
    %608 = arith.truncf %607 : vector<128x128xf32> to vector<128x128xbf16>
    %cst_388 = arith.constant dense<0.000000e+00> : vector<64x128xf32>
    %609 = tpu.matmul %458, %608, %cst_388 {dimension_numbers = #tpu.dot_dimension_numbers<[1], [0], [0], [1], [0, 0, 1, 1], [], []>} : vector<64x128xbf16>, vector<128x128xbf16>, vector<64x128xf32> -> vector<64x128xf32>
    %cst_389 = arith.constant dense<0.000000e+00> : vector<64x128xf32>
    %610 = tpu.matmul %466, %608, %cst_389 {dimension_numbers = #tpu.dot_dimension_numbers<[1], [0], [0], [1], [0, 0, 1, 1], [], []>} : vector<64x128xbf16>, vector<128x128xbf16>, vector<64x128xf32> -> vector<64x128xf32>
    %611 = arith.maximumf %609, %610 : vector<64x128xf32>
    %612 = vector.extract_strided_slice %611 {offsets = [0, 0], sizes = [2, 128], strides = [1, 1]} : vector<64x128xf32> to vector<2x128xf32>
    %c2_390 = arith.constant 2 : index
    %c0_391 = arith.constant 0 : index
    %613 = vector.load %arg8[%c2_390, %c0_391] : memref<136x128xf32, #tpu.memory_space<vmem>>, vector<2x128xf32>
    tpu.vector_store %arg8[%c2_390, %c0_391], %612 {strides = array<i32>} : memref<136x128xf32, #tpu.memory_space<vmem>>, vector<2x128xf32>,
    %cst_392 = arith.constant 0.000000e+00 : f32
    %614 = vector.broadcast %cst_392 : f32 to vector<2x128xf32>
    %c4_393 = arith.constant 4 : index
    %c0_394 = arith.constant 0 : index
    %615 = vector.load %arg8[%c4_393, %c0_394] : memref<136x128xf32, #tpu.memory_space<vmem>>, vector<2x128xf32>
    tpu.vector_store %arg8[%c4_393, %c0_394], %614 {strides = array<i32>} : memref<136x128xf32, #tpu.memory_space<vmem>>, vector<2x128xf32>,
    %616 = vector.extract_strided_slice %611 {offsets = [8, 0], sizes = [2, 128], strides = [1, 1]} : vector<64x128xf32> to vector<2x128xf32>
    %c18_395 = arith.constant 18 : index
    %c0_396 = arith.constant 0 : index
    %617 = vector.load %arg8[%c18_395, %c0_396] : memref<136x128xf32, #tpu.memory_space<vmem>>, vector<2x128xf32>
    tpu.vector_store %arg8[%c18_395, %c0_396], %616 {strides = array<i32>} : memref<136x128xf32, #tpu.memory_space<vmem>>, vector<2x128xf32>,
    %cst_397 = arith.constant 0.000000e+00 : f32
    %618 = vector.broadcast %cst_397 : f32 to vector<2x128xf32>
    %c20_398 = arith.constant 20 : index
    %c0_399 = arith.constant 0 : index
    %619 = vector.load %arg8[%c20_398, %c0_399] : memref<136x128xf32, #tpu.memory_space<vmem>>, vector<2x128xf32>
    tpu.vector_store %arg8[%c20_398, %c0_399], %618 {strides = array<i32>} : memref<136x128xf32, #tpu.memory_space<vmem>>, vector<2x128xf32>,
    %620 = vector.extract_strided_slice %611 {offsets = [16, 0], sizes = [2, 128], strides = [1, 1]} : vector<64x128xf32> to vector<2x128xf32>
    %c34_400 = arith.constant 34 : index
    %c0_401 = arith.constant 0 : index
    %621 = vector.load %arg8[%c34_400, %c0_401] : memref<136x128xf32, #tpu.memory_space<vmem>>, vector<2x128xf32>
    tpu.vector_store %arg8[%c34_400, %c0_401], %620 {strides = array<i32>} : memref<136x128xf32, #tpu.memory_space<vmem>>, vector<2x128xf32>,
    %cst_402 = arith.constant 0.000000e+00 : f32
    %622 = vector.broadcast %cst_402 : f32 to vector<2x128xf32>
    %c36_403 = arith.constant 36 : index
    %c0_404 = arith.constant 0 : index
    %623 = vector.load %arg8[%c36_403, %c0_404] : memref<136x128xf32, #tpu.memory_space<vmem>>, vector<2x128xf32>
    tpu.vector_store %arg8[%c36_403, %c0_404], %622 {strides = array<i32>} : memref<136x128xf32, #tpu.memory_space<vmem>>, vector<2x128xf32>,
    %624 = vector.extract_strided_slice %611 {offsets = [24, 0], sizes = [2, 128], strides = [1, 1]} : vector<64x128xf32> to vector<2x128xf32>
    %c50_405 = arith.constant 50 : index
    %c0_406 = arith.constant 0 : index
    %625 = vector.load %arg8[%c50_405, %c0_406] : memref<136x128xf32, #tpu.memory_space<vmem>>, vector<2x128xf32>
    tpu.vector_store %arg8[%c50_405, %c0_406], %624 {strides = array<i32>} : memref<136x128xf32, #tpu.memory_space<vmem>>, vector<2x128xf32>,
    %cst_407 = arith.constant 0.000000e+00 : f32
    %626 = vector.broadcast %cst_407 : f32 to vector<2x128xf32>
    %c52_408 = arith.constant 52 : index
    %c0_409 = arith.constant 0 : index
    %627 = vector.load %arg8[%c52_408, %c0_409] : memref<136x128xf32, #tpu.memory_space<vmem>>, vector<2x128xf32>
    tpu.vector_store %arg8[%c52_408, %c0_409], %626 {strides = array<i32>} : memref<136x128xf32, #tpu.memory_space<vmem>>, vector<2x128xf32>,
    %628 = vector.extract_strided_slice %611 {offsets = [32, 0], sizes = [2, 128], strides = [1, 1]} : vector<64x128xf32> to vector<2x128xf32>
    %c66_410 = arith.constant 66 : index
    %c0_411 = arith.constant 0 : index
    %629 = vector.load %arg8[%c66_410, %c0_411] : memref<136x128xf32, #tpu.memory_space<vmem>>, vector<2x128xf32>
    tpu.vector_store %arg8[%c66_410, %c0_411], %628 {strides = array<i32>} : memref<136x128xf32, #tpu.memory_space<vmem>>, vector<2x128xf32>,
    %cst_412 = arith.constant 0.000000e+00 : f32
    %630 = vector.broadcast %cst_412 : f32 to vector<2x128xf32>
    %c68_413 = arith.constant 68 : index
    %c0_414 = arith.constant 0 : index
    %631 = vector.load %arg8[%c68_413, %c0_414] : memref<136x128xf32, #tpu.memory_space<vmem>>, vector<2x128xf32>
    tpu.vector_store %arg8[%c68_413, %c0_414], %630 {strides = array<i32>} : memref<136x128xf32, #tpu.memory_space<vmem>>, vector<2x128xf32>,
    %632 = vector.extract_strided_slice %611 {offsets = [40, 0], sizes = [2, 128], strides = [1, 1]} : vector<64x128xf32> to vector<2x128xf32>
    %c82_415 = arith.constant 82 : index
    %c0_416 = arith.constant 0 : index
    %633 = vector.load %arg8[%c82_415, %c0_416] : memref<136x128xf32, #tpu.memory_space<vmem>>, vector<2x128xf32>
    tpu.vector_store %arg8[%c82_415, %c0_416], %632 {strides = array<i32>} : memref<136x128xf32, #tpu.memory_space<vmem>>, vector<2x128xf32>,
    %cst_417 = arith.constant 0.000000e+00 : f32
    %634 = vector.broadcast %cst_417 : f32 to vector<2x128xf32>
    %c84_418 = arith.constant 84 : index
    %c0_419 = arith.constant 0 : index
    %635 = vector.load %arg8[%c84_418, %c0_419] : memref<136x128xf32, #tpu.memory_space<vmem>>, vector<2x128xf32>
    tpu.vector_store %arg8[%c84_418, %c0_419], %634 {strides = array<i32>} : memref<136x128xf32, #tpu.memory_space<vmem>>, vector<2x128xf32>,
    %636 = vector.extract_strided_slice %611 {offsets = [48, 0], sizes = [2, 128], strides = [1, 1]} : vector<64x128xf32> to vector<2x128xf32>
    %c98_420 = arith.constant 98 : index
    %c0_421 = arith.constant 0 : index
    %637 = vector.load %arg8[%c98_420, %c0_421] : memref<136x128xf32, #tpu.memory_space<vmem>>, vector<2x128xf32>
    tpu.vector_store %arg8[%c98_420, %c0_421], %636 {strides = array<i32>} : memref<136x128xf32, #tpu.memory_space<vmem>>, vector<2x128xf32>,
    %cst_422 = arith.constant 0.000000e+00 : f32
    %638 = vector.broadcast %cst_422 : f32 to vector<2x128xf32>
    %c100_423 = arith.constant 100 : index
    %c0_424 = arith.constant 0 : index
    %639 = vector.load %arg8[%c100_423, %c0_424] : memref<136x128xf32, #tpu.memory_space<vmem>>, vector<2x128xf32>
    tpu.vector_store %arg8[%c100_423, %c0_424], %638 {strides = array<i32>} : memref<136x128xf32, #tpu.memory_space<vmem>>, vector<2x128xf32>,
    %640 = vector.extract_strided_slice %611 {offsets = [56, 0], sizes = [2, 128], strides = [1, 1]} : vector<64x128xf32> to vector<2x128xf32>
    %c114_425 = arith.constant 114 : index
    %c0_426 = arith.constant 0 : index
    %641 = vector.load %arg8[%c114_425, %c0_426] : memref<136x128xf32, #tpu.memory_space<vmem>>, vector<2x128xf32>
    tpu.vector_store %arg8[%c114_425, %c0_426], %640 {strides = array<i32>} : memref<136x128xf32, #tpu.memory_space<vmem>>, vector<2x128xf32>,
    %cst_427 = arith.constant 0.000000e+00 : f32
    %642 = vector.broadcast %cst_427 : f32 to vector<2x128xf32>
    %c116_428 = arith.constant 116 : index
    %c0_429 = arith.constant 0 : index
    %643 = vector.load %arg8[%c116_428, %c0_429] : memref<136x128xf32, #tpu.memory_space<vmem>>, vector<2x128xf32>
    tpu.vector_store %arg8[%c116_428, %c0_429], %642 {strides = array<i32>} : memref<136x128xf32, #tpu.memory_space<vmem>>, vector<2x128xf32>,
    %c0_430 = arith.constant 0 : index
    %c0_431 = arith.constant 0 : index
    %644 = vector.load %arg8[%c0_430, %c0_431] : memref<136x128xf32, #tpu.memory_space<vmem>>, vector<136x128xf32>
    %645 = arith.truncf %644 : vector<136x128xf32> to vector<136x128xbf16>
    %646 = vector.extract_strided_slice %645 {offsets = [0, 0], sizes = [128, 128], strides = [1, 1]} : vector<136x128xbf16> to vector<128x128xbf16>
    %c3_432 = arith.constant 3 : index
    %c0_433 = arith.constant 0 : index
    %c0_434 = arith.constant 0 : index
    %c0_435 = arith.constant 0 : index
    %647 = vector.load %arg3[%c3_432, %c0_433, %c0_434, %c0_435] : memref<4x3x128x128xbf16, #tpu.memory_space<vmem>>, vector<1x1x128x128xbf16>
    %648 = vector.shape_cast %647 : vector<1x1x128x128xbf16> to vector<128x128xbf16>
    %cst_436 = arith.constant dense<0.000000e+00> : vector<128x128xf32>
    %649 = tpu.matmul %646, %648, %cst_436 {dimension_numbers = #tpu.dot_dimension_numbers<[1], [0], [0], [1], [0, 0, 1, 1], [], []>} : vector<128x128xbf16>, vector<128x128xbf16>, vector<128x128xf32> -> vector<128x128xf32>
    %650 = vector.extract_strided_slice %645 {offsets = [1, 0], sizes = [128, 128], strides = [1, 1]} : vector<136x128xbf16> to vector<128x128xbf16>
    %c3_437 = arith.constant 3 : index
    %c1_438 = arith.constant 1 : index
    %c0_439 = arith.constant 0 : index
    %c0_440 = arith.constant 0 : index
    %651 = vector.load %arg3[%c3_437, %c1_438, %c0_439, %c0_440] : memref<4x3x128x128xbf16, #tpu.memory_space<vmem>>, vector<1x1x128x128xbf16>
    %652 = vector.shape_cast %651 : vector<1x1x128x128xbf16> to vector<128x128xbf16>
    %cst_441 = arith.constant dense<0.000000e+00> : vector<128x128xf32>
    %653 = tpu.matmul %650, %652, %cst_441 {dimension_numbers = #tpu.dot_dimension_numbers<[1], [0], [0], [1], [0, 0, 1, 1], [], []>} : vector<128x128xbf16>, vector<128x128xbf16>, vector<128x128xf32> -> vector<128x128xf32>
    %654 = arith.addf %649, %653 : vector<128x128xf32>
    %655 = vector.extract_strided_slice %645 {offsets = [2, 0], sizes = [128, 128], strides = [1, 1]} : vector<136x128xbf16> to vector<128x128xbf16>
    %c3_442 = arith.constant 3 : index
    %c2_443 = arith.constant 2 : index
    %c0_444 = arith.constant 0 : index
    %c0_445 = arith.constant 0 : index
    %656 = vector.load %arg3[%c3_442, %c2_443, %c0_444, %c0_445] : memref<4x3x128x128xbf16, #tpu.memory_space<vmem>>, vector<1x1x128x128xbf16>
    %657 = vector.shape_cast %656 : vector<1x1x128x128xbf16> to vector<128x128xbf16>
    %cst_446 = arith.constant dense<0.000000e+00> : vector<128x128xf32>
    %658 = tpu.matmul %655, %657, %cst_446 {dimension_numbers = #tpu.dot_dimension_numbers<[1], [0], [0], [1], [0, 0, 1, 1], [], []>} : vector<128x128xbf16>, vector<128x128xbf16>, vector<128x128xf32> -> vector<128x128xf32>
    %659 = arith.addf %654, %658 : vector<128x128xf32>
    %c3_447 = arith.constant 3 : index
    %c0_448 = arith.constant 0 : index
    %660 = vector.load %arg4[%c3_447, %c0_448] : memref<4x128xf32, #tpu.memory_space<vmem>>, vector<1x128xf32>
    %661 = vector.shape_cast %660 : vector<1x128xf32> to vector<128xf32>
    %662 = vector.shape_cast %661 : vector<128xf32> to vector<1x128xf32>
    %663 = vector.broadcast %662 : vector<1x128xf32> to vector<128x128xf32>
    %664 = arith.addf %659, %663 : vector<128x128xf32>
    %cst_449 = arith.constant 0.000000e+00 : f32
    %665 = vector.broadcast %cst_449 : f32 to vector<128x128xf32>
    %666 = arith.maximumf %664, %665 : vector<128x128xf32>
    %667 = vector.extract_strided_slice %666 {offsets = [0, 0], sizes = [4, 128], strides = [1, 1]} : vector<128x128xf32> to vector<4x128xf32>
    %cst_450 = arith.constant dense<0xFF800000> : vector<128xf32>
    %668 = vector.multi_reduction <maximumf>, %667, %cst_450 [0] : vector<4x128xf32> to vector<128xf32>
    %669 = vector.shape_cast %668 : vector<128xf32> to vector<1x128xf32>
    %670 = vector.extract_strided_slice %666 {offsets = [16, 0], sizes = [4, 128], strides = [1, 1]} : vector<128x128xf32> to vector<4x128xf32>
    %cst_451 = arith.constant dense<0xFF800000> : vector<128xf32>
    %671 = vector.multi_reduction <maximumf>, %670, %cst_451 [0] : vector<4x128xf32> to vector<128xf32>
    %672 = vector.shape_cast %671 : vector<128xf32> to vector<1x128xf32>
    %673 = vector.extract_strided_slice %666 {offsets = [32, 0], sizes = [4, 128], strides = [1, 1]} : vector<128x128xf32> to vector<4x128xf32>
    %cst_452 = arith.constant dense<0xFF800000> : vector<128xf32>
    %674 = vector.multi_reduction <maximumf>, %673, %cst_452 [0] : vector<4x128xf32> to vector<128xf32>
    %675 = vector.shape_cast %674 : vector<128xf32> to vector<1x128xf32>
    %676 = vector.extract_strided_slice %666 {offsets = [48, 0], sizes = [4, 128], strides = [1, 1]} : vector<128x128xf32> to vector<4x128xf32>
    %cst_453 = arith.constant dense<0xFF800000> : vector<128xf32>
    %677 = vector.multi_reduction <maximumf>, %676, %cst_453 [0] : vector<4x128xf32> to vector<128xf32>
    %678 = vector.shape_cast %677 : vector<128xf32> to vector<1x128xf32>
    %679 = vector.extract_strided_slice %666 {offsets = [64, 0], sizes = [4, 128], strides = [1, 1]} : vector<128x128xf32> to vector<4x128xf32>
    %cst_454 = arith.constant dense<0xFF800000> : vector<128xf32>
    %680 = vector.multi_reduction <maximumf>, %679, %cst_454 [0] : vector<4x128xf32> to vector<128xf32>
    %681 = vector.shape_cast %680 : vector<128xf32> to vector<1x128xf32>
    %682 = vector.extract_strided_slice %666 {offsets = [80, 0], sizes = [4, 128], strides = [1, 1]} : vector<128x128xf32> to vector<4x128xf32>
    %cst_455 = arith.constant dense<0xFF800000> : vector<128xf32>
    %683 = vector.multi_reduction <maximumf>, %682, %cst_455 [0] : vector<4x128xf32> to vector<128xf32>
    %684 = vector.shape_cast %683 : vector<128xf32> to vector<1x128xf32>
    %685 = vector.extract_strided_slice %666 {offsets = [96, 0], sizes = [4, 128], strides = [1, 1]} : vector<128x128xf32> to vector<4x128xf32>
    %cst_456 = arith.constant dense<0xFF800000> : vector<128xf32>
    %686 = vector.multi_reduction <maximumf>, %685, %cst_456 [0] : vector<4x128xf32> to vector<128xf32>
    %687 = vector.shape_cast %686 : vector<128xf32> to vector<1x128xf32>
    %688 = vector.extract_strided_slice %666 {offsets = [112, 0], sizes = [4, 128], strides = [1, 1]} : vector<128x128xf32> to vector<4x128xf32>
    %cst_457 = arith.constant dense<0xFF800000> : vector<128xf32>
    %689 = vector.multi_reduction <maximumf>, %688, %cst_457 [0] : vector<4x128xf32> to vector<128xf32>
    %690 = vector.shape_cast %689 : vector<128xf32> to vector<1x128xf32>
    %691 = tpu.concatenate %669, %672, %675, %678, %681, %684, %687, %690 in 0 : vector<1x128xf32>, vector<1x128xf32>, vector<1x128xf32>, vector<1x128xf32>, vector<1x128xf32>, vector<1x128xf32>, vector<1x128xf32>, vector<1x128xf32> -> vector<8x128xf32>
    %692 = arith.truncf %691 : vector<8x128xf32> to vector<8x128xbf16>
    %c0_458 = arith.constant 0 : index
    %c0_459 = arith.constant 0 : index
    %693 = vector.load %arg5[%c0_458, %c0_459] : memref<128x128xbf16, #tpu.memory_space<vmem>>, vector<128x128xbf16>
    %cst_460 = arith.constant dense<0.000000e+00> : vector<8x128xf32>
    %694 = tpu.matmul %692, %693, %cst_460 {dimension_numbers = #tpu.dot_dimension_numbers<[1], [0], [0], [1], [0, 0, 1, 1], [], []>} : vector<8x128xbf16>, vector<128x128xbf16>, vector<8x128xf32> -> vector<8x128xf32>
    %c0_461 = arith.constant 0 : index
    %c0_462 = arith.constant 0 : index
    %695 = vector.load %arg6[%c0_461, %c0_462] : memref<1x128xf32, #tpu.memory_space<vmem>>, vector<1x128xf32>
    %696 = vector.broadcast %695 : vector<1x128xf32> to vector<8x128xf32>
    %697 = arith.addf %694, %696 : vector<8x128xf32>
    %698 = math.tanh %697 : vector<8x128xf32>
    %699 = vector.shape_cast %698 : vector<8x128xf32> to vector<1x8x128xf32>
    %c0_463 = arith.constant 0 : index
    %c0_464 = arith.constant 0 : index
    %c0_465 = arith.constant 0 : index
    %700 = vector.load %arg7[%c0_463, %c0_464, %c0_465] : memref<1x8x128xf32, #tpu.memory_space<vmem>>, vector<1x8x128xf32>
    tpu.vector_store %arg7[%c0_463, %c0_464, %c0_465], %699 {strides = array<i32>} : memref<1x8x128xf32, #tpu.memory_space<vmem>>, vector<1x8x128xf32>,
    return
  }
  func.func @transform_0(%arg0: i32, %arg1: memref<128xi32, #tpu.memory_space<smem>>) -> (i32, i32) {
    %c0_i32 = arith.constant 0 : i32
    %c0_i32_0 = arith.constant 0 : i32
    %c0_i32_1 = arith.constant 0 : i32
    return %c0_i32, %c0_i32_0 : i32, i32
  }
  func.func @transform_1(%arg0: i32, %arg1: memref<128xi32, #tpu.memory_space<smem>>) -> (i32, i32, i32, i32) {
    %c0_i32 = arith.constant 0 : i32
    %c0_i32_0 = arith.constant 0 : i32
    %c0_i32_1 = arith.constant 0 : i32
    %c0_i32_2 = arith.constant 0 : i32
    %c0_i32_3 = arith.constant 0 : i32
    return %c0_i32, %c0_i32_0, %c0_i32_1, %c0_i32_2 : i32, i32, i32, i32
  }
  func.func @transform_2(%arg0: i32, %arg1: memref<128xi32, #tpu.memory_space<smem>>) -> (i32, i32) {
    %c0_i32 = arith.constant 0 : i32
    %c0_i32_0 = arith.constant 0 : i32
    %c0_i32_1 = arith.constant 0 : i32
    return %c0_i32, %c0_i32_0 : i32, i32
  }
  func.func @transform_3(%arg0: i32, %arg1: memref<128xi32, #tpu.memory_space<smem>>) -> (i32, i32) {
    %c0_i32 = arith.constant 0 : i32
    %c0_i32_0 = arith.constant 0 : i32
    %c0_i32_1 = arith.constant 0 : i32
    return %c0_i32, %c0_i32_0 : i32, i32
  }
  func.func @transform_4(%arg0: i32, %arg1: memref<128xi32, #tpu.memory_space<smem>>) -> (i32, i32) {
    %c0_i32 = arith.constant 0 : i32
    %c0_i32_0 = arith.constant 0 : i32
    %c0_i32_1 = arith.constant 0 : i32
    return %c0_i32, %c0_i32_0 : i32, i32
  }
  func.func @transform_5(%arg0: i32, %arg1: memref<128xi32, #tpu.memory_space<smem>>) -> (i32, i32, i32) {
    %c0_i32 = arith.constant 0 : i32
    %c0_i32_0 = arith.constant 0 : i32
    %c0_i32_1 = arith.constant 0 : i32
    return %arg0, %c0_i32, %c0_i32_0 : i32, i32, i32
  }
}

</mosaic_0001>

<llo_original>
// kernel: tpu_custom_call.1
$region0: #{tpu_custom_call.1}
  #allocation0 [shape = 'u32[]', space=smem, size = 0x4, offset = 0x4, fixed_abs, tag = 'smem constant byte address 0x4 - core index']
  #allocation1 [shape = 'u32[72,128]{1,0:T(1,128)}', space=vmem, size = 0x9000, scoped, tag = 'internal scratch']
  #allocation2 [shape = 'f32[136,128]{1,0:T(8,128)}', space=vmem, size = 0x11000, scoped, tag = 'scratch operand']
  #allocation3 [shape = 's32[1]{0}', space=sflag, size = 0x4, scoped, tag = 'scoped memory for tpu_custom_call.1']
  #allocation4 [shape = 'u8[512]{0}', space=smem, size = 0x200, scoped, tag = 'prefetched SMEM operand 0']
  %s0 = inlined_call_operand.hbm [shape: s32[128], index: 0, kind: input, shape index: {}]
  %s1 = inlined_call_operand.hbm [shape: f32[64,128], index: 1, kind: input, shape index: {}]
  %s2 = inlined_call_operand.hbm [shape: bf16[4,3,128,128], index: 2, kind: input, shape index: {}]
  %s3 = inlined_call_operand.hbm [shape: f32[4,128], index: 3, kind: input, shape index: {}]
  %s4 = inlined_call_operand.hbm [shape: bf16[128,128], index: 4, kind: input, shape index: {}]
  %s5 = inlined_call_operand.vmem [shape: f32[1,128], index: 5, kind: input, shape index: {}]
  %s6 = inlined_call_operand.hbm [shape: f32[2,8,128], index: 6, kind: output, shape index: {}]
  %s7 = sld [smem:[#allocation0]]
  $region69: #{tpu_custom_call.1} parent=0
    _
  %s9 = ssub.s32 1, %s7
  %s10 = scalar_select 0, %s9, %s7
  %s12 = sshll.u32 %s0, 4
  %s13 = int_to_ptr.hbm [resolvable:$true] %s12
  %15 = dma.hbm_to_smem %s13, 16, [#allocation4], [#allocation3]
  %17 = dma.done [#allocation3], 16
  %18 = sfence
  $region1: #{tpu_custom_call.1} parent=0
    #allocation5 [shape = 'u8[32768]{0}', space=vmem, size = 0x8000, scoped, tag = 'input window, operand 1, single buffered']
    #allocation6 [shape = 's32[2]{0}', space=sflag, size = 0x8, scoped, tag = 'scoped memory for tpu_custom_call.1']
    #allocation7 [shape = 's32[2]{0}', space=sflag, size = 0x8, scoped, tag = 'scoped memory for tpu_custom_call.1']
    #allocation8 [shape = 'u8[393216]{0}', space=vmem, size = 0x60000, scoped, tag = 'input window, operand 2, single buffered']
    #allocation9 [shape = 's32[1]{0}', space=sflag, size = 0x4, scoped, tag = 'scoped memory for tpu_custom_call.1']
    #allocation10 [shape = 'u8[2048]{0}', space=vmem, size = 0x800, scoped, tag = 'input window, operand 3, single buffered']
    #allocation11 [shape = 'u8[32768]{0}', space=vmem, size = 0x8000, scoped, tag = 'input window, operand 4, single buffered']
    #allocation12 [shape = 's32[1]{0}', space=sflag, size = 0x4, scoped, tag = 'scoped memory for tpu_custom_call.1']
    #allocation13 [shape = 'u8[8192]{0}', space=vmem, size = 0x2000, scoped, tag = 'output window, operand 0']
    %19 = vsyncpa [#allocation6], 0
    %20 = vsyncpa [#allocation9], 0
    %21 = vsyncpa [#allocation12], 0
    %22 = vsyncpa [#allocation7], 0
    %s23 = scalar_lea.sflag [#allocation7], 1
    %24 = vsyncpa %s23, 0
    loop: start=0, step=1, limit=4
    $region2: #{tpu_custom_call.1} parent=1 // loop_pre_header
      _
    $region3: #{tpu_custom_call.1} parent=1 // loop_header
      %s26 = sphi 0, %s30
      %p27 = scmp.ge.s32.totalorder %s26, 4
      %s34 = sphi 0, %s34
      %s36 = sphi 0, %s34
      %s37 = sphi 0, %s36
      %s51 = sphi 0, %s37
      %s55 = sphi 0, %s55
      %s57 = sphi 0, %s55
      %s58 = sphi 0, %s57
      %s72 = sphi 0, %s58
      %s76 = sphi 0, %s76
      %s78 = sphi 0, %s76
      %s79 = sphi 0, %s78
      %s93 = sphi 0, %s79
      %s97 = sphi 0, %s97
      %s99 = sphi 0, %s97
      %s100 = sphi 0, %s99
      %s114 = sphi 0, %s100
      %s118 = sphi 0, %s118
      %s120 = sphi 0, %s118
      %s121 = sphi 0, %s120
      %s135 = sphi 0, %s121
      %s141 = sphi 0, %s143
      %s144 = sphi 0, %s141
      %s145 = sphi 0, %s144
      %s161 = sphi 0, %s145
    $region4: #{tpu_custom_call.1} parent=1 // loop_header_branch
      %29 = sbr.rel (%p27) target = $region8
    $region5: #{tpu_custom_call.1} parent=1 // loop_body
      %s31 = ssub.s32 %s26, 1
      %s32 = ssub.s32 %s26, 2
      %s33 = sadd.s32 %s26, 1
      %s35 = sadd.s32 %s34, 1
      %p38 = scmp.eq.s32.totalorder %s26, 1
      %p39 = scmp.ne.s32.totalorder %s34, %s36
      %p40 = scmp.eq.s32.totalorder %s26, 0
      %p41 = por %p39, %p40
      %p42 = scmp.ne.s32.totalorder %s34, %s36
      %p43 = scmp.eq.s32.totalorder %s31, 1
      %p44 = por %p42, %p43
      %p45 = scmp.ne.s32.totalorder %s36, %s37
      %p46 = scmp.eq.s32.totalorder %s31, 0
      %p47 = por %p45, %p46
      %p48 = scmp.ne.s32.totalorder %s36, %s37
      %p49 = scmp.eq.s32.totalorder %s32, 1
      %p50 = por %p48, %p49
      %p52 = scmp.ne.s32.totalorder %s37, %s51
      %p53 = scmp.eq.s32.totalorder %s32, 0
      %p54 = por %p52, %p53
      %s56 = sadd.s32 %s55, 1
      %p59 = scmp.eq.s32.totalorder %s26, 1
      %p60 = scmp.ne.s32.totalorder %s55, %s57
      %p61 = scmp.eq.s32.totalorder %s26, 0
      %p62 = por %p60, %p61
      %p63 = scmp.ne.s32.totalorder %s55, %s57
      %p64 = scmp.eq.s32.totalorder %s31, 1
      %p65 = por %p63, %p64
      %p66 = scmp.ne.s32.totalorder %s57, %s58
      %p67 = scmp.eq.s32.totalorder %s31, 0
      %p68 = por %p66, %p67
      %p69 = scmp.ne.s32.totalorder %s57, %s58
      %p70 = scmp.eq.s32.totalorder %s32, 1
      %p71 = por %p69, %p70
      %p73 = scmp.ne.s32.totalorder %s58, %s72
      %p74 = scmp.eq.s32.totalorder %s32, 0
      %p75 = por %p73, %p74
      %s77 = sadd.s32 %s76, 1
      %p80 = scmp.eq.s32.totalorder %s26, 1
      %p81 = scmp.ne.s32.totalorder %s76, %s78
      %p82 = scmp.eq.s32.totalorder %s26, 0
      %p83 = por %p81, %p82
      %p84 = scmp.ne.s32.totalorder %s76, %s78
      %p85 = scmp.eq.s32.totalorder %s31, 1
      %p86 = por %p84, %p85
      %p87 = scmp.ne.s32.totalorder %s78, %s79
      %p88 = scmp.eq.s32.totalorder %s31, 0
      %p89 = por %p87, %p88
      %p90 = scmp.ne.s32.totalorder %s78, %s79
      %p91 = scmp.eq.s32.totalorder %s32, 1
      %p92 = por %p90, %p91
      %p94 = scmp.ne.s32.totalorder %s79, %s93
      %p95 = scmp.eq.s32.totalorder %s32, 0
      %p96 = por %p94, %p95
      %s98 = sadd.s32 %s97, 1
      %p101 = scmp.eq.s32.totalorder %s26, 1
      %p102 = scmp.ne.s32.totalorder %s97, %s99
      %p103 = scmp.eq.s32.totalorder %s26, 0
      %p104 = por %p102, %p103
      %p105 = scmp.ne.s32.totalorder %s97, %s99
      %p106 = scmp.eq.s32.totalorder %s31, 1
      %p107 = por %p105, %p106
      %p108 = scmp.ne.s32.totalorder %s99, %s100
      %p109 = scmp.eq.s32.totalorder %s31, 0
      %p110 = por %p108, %p109
      %p111 = scmp.ne.s32.totalorder %s99, %s100
      %p112 = scmp.eq.s32.totalorder %s32, 1
      %p113 = por %p111, %p112
      %p115 = scmp.ne.s32.totalorder %s100, %s114
      %p116 = scmp.eq.s32.totalorder %s32, 0
      %p117 = por %p115, %p116
      %s119 = sadd.s32 %s118, 1
      %p122 = scmp.eq.s32.totalorder %s26, 1
      %p123 = scmp.ne.s32.totalorder %s118, %s120
      %p124 = scmp.eq.s32.totalorder %s26, 0
      %p125 = por %p123, %p124
      %p126 = scmp.ne.s32.totalorder %s118, %s120
      %p127 = scmp.eq.s32.totalorder %s31, 1
      %p128 = por %p126, %p127
      %p129 = scmp.ne.s32.totalorder %s120, %s121
      %p130 = scmp.eq.s32.totalorder %s31, 0
      %p131 = por %p129, %p130
      %p132 = scmp.ne.s32.totalorder %s120, %s121
      %p133 = scmp.eq.s32.totalorder %s32, 1
      %p134 = por %p132, %p133
      %p136 = scmp.ne.s32.totalorder %s121, %s135
      %p137 = scmp.eq.s32.totalorder %s32, 0
      %p138 = por %p136, %p137
      %s139 = ssub.s32 %s26, %s33
      %p140 = scmp.eq.s32.totalorder %s139, 0
      %s142 = sadd.s32 %s141, 1
      %s143 = scalar_select %p140, %s141, %s142
      %p146 = pneg %p140
      %p147 = scmp.eq.s32.totalorder %s26, 1
      %p148 = por %p146, %p147
      %p149 = scmp.ne.s32.totalorder %s141, %s144
      %p150 = scmp.eq.s32.totalorder %s26, 0
      %p151 = por %p149, %p150
      %p152 = scmp.ne.s32.totalorder %s141, %s144
      %p153 = scmp.eq.s32.totalorder %s31, 1
      %p154 = por %p152, %p153
      %p155 = scmp.ne.s32.totalorder %s144, %s145
      %p156 = scmp.eq.s32.totalorder %s31, 0
      %p157 = por %p155, %p156
      %p158 = scmp.ne.s32.totalorder %s144, %s145
      %p159 = scmp.eq.s32.totalorder %s32, 1
      %p160 = por %p158, %p159
      %p162 = scmp.ne.s32.totalorder %s145, %s161
      %p163 = scmp.eq.s32.totalorder %s32, 0
      %p164 = por %p162, %p163
      %p165 = scmp.le.s32.totalorder 1, %s26
      %p166 = scmp.lt.s32.totalorder %s26, 3
      %p167 = pnand %p165, %p166
      %p168 = pneg %p167
      // Predicated region
      $region9: #{tpu_custom_call.1} parent=5 // pred_check
        _
      $region10: #{tpu_custom_call.1} parent=5 // pred_check_branch
        %170 = sbr.rel (%p167) target = $region12
      $region11: #{tpu_custom_call.1} parent=5 // pred_region
        %s171 = ssub.s32 %s26, 1
        // Predicated region
        $region13: #{tpu_custom_call.1} parent=11 // pred_check
          %p172 = pneg %p47
        $region14: #{tpu_custom_call.1} parent=11 // pred_check_branch
          %174 = sbr.rel (%p172) target = $region16
        $region15: #{tpu_custom_call.1} parent=11 // pred_region
          %176 = vsyncadd [#allocation6], 0
          %s177 = sshll.u32 %s1, 4
          %s178 = int_to_ptr.hbm [resolvable:$true] %s177
          %s179 = sshll.u32 [#allocation5], 4
          %s180 = int_to_ptr.vmem [resolvable:$true] %s179
          %185 = dma.hbm_to_vmem [thread:$0]  %s178, 1024, %s180, [#allocation6], 128, 128, 8
        $region16: #{tpu_custom_call.1} parent=11 // pred_fallthru
          _
        // Predicated region
        $region17: #{tpu_custom_call.1} parent=11 // pred_check
          %p186 = pneg %p68
        $region18: #{tpu_custom_call.1} parent=11 // pred_check_branch
          %188 = sbr.rel (%p186) target = $region20
        $region19: #{tpu_custom_call.1} parent=11 // pred_region
          %190 = vsyncadd [#allocation9], 0
          %s191 = sshll.u32 %s2, 4
          %s192 = int_to_ptr.hbm [resolvable:$true] %s191
          %s193 = sshll.u32 [#allocation8], 4
          %s194 = int_to_ptr.vmem [resolvable:$true] %s193
          %199 = dma.hbm_to_vmem [thread:$0]  %s192, 12288, %s194, [#allocation9], 64, 64, 4
        $region20: #{tpu_custom_call.1} parent=11 // pred_fallthru
          _
        // Predicated region
        $region21: #{tpu_custom_call.1} parent=11 // pred_check
          %p200 = pneg %p89
        $region22: #{tpu_custom_call.1} parent=11 // pred_check_branch
          %202 = sbr.rel (%p200) target = $region24
        $region23: #{tpu_custom_call.1} parent=11 // pred_region
          %204 = vsyncadd [#allocation9], 0
          %s206 = sshll.u32 %s3, 4
          %s207 = int_to_ptr.hbm [resolvable:$true] %s206
          %s208 = sshll.u32 [#allocation10], 4
          %s209 = int_to_ptr.vmem [resolvable:$true] %s208
          %211 = dma.hbm_to_vmem [thread:$0]  %s207, 64, %s209, [#allocation9]
        $region24: #{tpu_custom_call.1} parent=11 // pred_fallthru
          _
        // Predicated region
        $region25: #{tpu_custom_call.1} parent=11 // pred_check
          %p212 = pneg %p110
        $region26: #{tpu_custom_call.1} parent=11 // pred_check_branch
          %214 = sbr.rel (%p212) target = $region28
        $region27: #{tpu_custom_call.1} parent=11 // pred_region
          %216 = vsyncadd [#allocation12], 0
          %s217 = sshll.u32 %s4, 4
          %s218 = int_to_ptr.hbm [resolvable:$true] %s217
          %s219 = sshll.u32 [#allocation11], 4
          %s220 = int_to_ptr.vmem [resolvable:$true] %s219
          %225 = dma.hbm_to_vmem [thread:$0]  %s218, 1024, %s220, [#allocation12], 64, 64, 4
        $region28: #{tpu_custom_call.1} parent=11 // pred_fallthru
          _
        // Predicated region
        $region29: #{tpu_custom_call.1} parent=11 // pred_check
          %p226 = pneg %p131
        $region30: #{tpu_custom_call.1} parent=11 // pred_check_branch
          %228 = sbr.rel (%p226) target = $region32
        $region31: #{tpu_custom_call.1} parent=11 // pred_region
          _
        $region32: #{tpu_custom_call.1} parent=11 // pred_fallthru
          _
      $region12: #{tpu_custom_call.1} parent=5 // pred_fallthru
        _
      %p229 = scmp.lt.s32.totalorder %s26, 2
      // Predicated region
      $region33: #{tpu_custom_call.1} parent=5 // pred_check
        %p230 = pneg %p229
      $region34: #{tpu_custom_call.1} parent=5 // pred_check_branch
        %232 = sbr.rel (%p230) target = $region36
      $region35: #{tpu_custom_call.1} parent=5 // pred_region
        _
      $region36: #{tpu_custom_call.1} parent=5 // pred_fallthru
        _
      %p233 = scmp.le.s32.totalorder 1, %s26
      %p234 = scmp.lt.s32.totalorder %s26, 3
      %p235 = pnand %p233, %p234
      %p236 = pneg %p235
      // Predicated region
      $region37: #{tpu_custom_call.1} parent=5 // pred_check
        _
      $region38: #{tpu_custom_call.1} parent=5 // pred_check_branch
        %238 = sbr.rel (%p235) target = $region40
      $region39: #{tpu_custom_call.1} parent=5 // pred_region
        %s239 = ssub.s32 %s26, 1
        // Predicated region
        $region41: #{tpu_custom_call.1} parent=39 // pred_check
          %p240 = pneg %p47
        $region42: #{tpu_custom_call.1} parent=39 // pred_check_branch
          %242 = sbr.rel (%p240) target = $region44
        $region43: #{tpu_custom_call.1} parent=39 // pred_region
          %244 = dma.done [#allocation6], 1024
        $region44: #{tpu_custom_call.1} parent=39 // pred_fallthru
          _
        // Predicated region
        $region45: #{tpu_custom_call.1} parent=39 // pred_check
          %p245 = pneg %p68
        $region46: #{tpu_custom_call.1} parent=39 // pred_check_branch
          %247 = sbr.rel (%p245) target = $region48
        $region47: #{tpu_custom_call.1} parent=39 // pred_region
          %249 = dma.done [#allocation9], 12288
        $region48: #{tpu_custom_call.1} parent=39 // pred_fallthru
          _
        // Predicated region
        $region49: #{tpu_custom_call.1} parent=39 // pred_check
          %p250 = pneg %p89
        $region50: #{tpu_custom_call.1} parent=39 // pred_check_branch
          %252 = sbr.rel (%p250) target = $region52
        $region51: #{tpu_custom_call.1} parent=39 // pred_region
          %254 = dma.done [#allocation9], 64
        $region52: #{tpu_custom_call.1} parent=39 // pred_fallthru
          _
        // Predicated region
        $region53: #{tpu_custom_call.1} parent=39 // pred_check
          %p255 = pneg %p110
        $region54: #{tpu_custom_call.1} parent=39 // pred_check_branch
          %257 = sbr.rel (%p255) target = $region56
        $region55: #{tpu_custom_call.1} parent=39 // pred_region
          %259 = dma.done [#allocation12], 1024
        $region56: #{tpu_custom_call.1} parent=39 // pred_fallthru
          _
        %p260 = pneg %p47
        %p261 = pneg %p44
        %p262 = pneg %p68
        %p263 = pneg %p65
        %p264 = pneg %p89
        %p265 = pneg %p86
        %p266 = pneg %p110
        %p267 = pneg %p107
        %p268 = pneg %p131
        %p269 = pneg %p128
        %p270 = pneg %p157
        %p271 = pneg %p154
        %s272 = sand.u32 %s144, 1
        %s273 = scalar_lea.sflag [#allocation7], %s272
        %s274 = sand.u32 %s144, 1
        %s275 = smul.addr %s274, 8
        %s276 = scalar_lea.vmem [#allocation13], %s275
        %s277 = smul.u32 %s31, 64
        %278 = vst [vmem:[#allocation2] sm:$0xff] 0.0
        %279 = vst [vmem:[#allocation2 + $0x8] sm:$0xff] 0.0
        %280 = vst [vmem:[#allocation2 + $0x10] sm:$0xff] 0.0
        %281 = vst [vmem:[#allocation2 + $0x18] sm:$0xff] 0.0
        %282 = vst [vmem:[#allocation2 + $0x20] sm:$0xff] 0.0
        %283 = vst [vmem:[#allocation2 + $0x28] sm:$0xff] 0.0
        %284 = vst [vmem:[#allocation2 + $0x30] sm:$0xff] 0.0
        %285 = vst [vmem:[#allocation2 + $0x38] sm:$0xff] 0.0
        %286 = vst [vmem:[#allocation2 + $0x40] sm:$0xff] 0.0
        %287 = vst [vmem:[#allocation2 + $0x48] sm:$0xff] 0.0
        %288 = vst [vmem:[#allocation2 + $0x50] sm:$0xff] 0.0
        %289 = vst [vmem:[#allocation2 + $0x58] sm:$0xff] 0.0
        %290 = vst [vmem:[#allocation2 + $0x60] sm:$0xff] 0.0
        %291 = vst [vmem:[#allocation2 + $0x68] sm:$0xff] 0.0
        %292 = vst [vmem:[#allocation2 + $0x70] sm:$0xff] 0.0
        %293 = vst [vmem:[#allocation2 + $0x78] sm:$0xff] 0.0
        %294 = vst [vmem:[#allocation2 + $0x80] sm:$0xff] 0.0
        %s295 = sld [smem:[#allocation4 + %s277]]
        %s296 = scalar_lea.vmem [#allocation5], %s295
        %v297 = vld [vmem:[%s296] sm:$0x1]
        %298 = vst [vmem:[#allocation2 + $0x2] sm:$0x1] %v297
        %s299 = sadd.s32 %s277, 1
        %s300 = sld [smem:[#allocation4 + %s299]]
        %s301 = scalar_lea.vmem [#allocation5], %s300
        %v302 = vld [vmem:[%s301] sm:$0x1]
        %303 = vst [vmem:[#allocation2 + $0x3] sm:$0x1] %v302
        %s304 = sadd.s32 %s277, 2
        %s305 = sld [smem:[#allocation4 + %s304]]
        %s306 = scalar_lea.vmem [#allocation5], %s305
        %v307 = vld [vmem:[%s306] sm:$0x1]
        %308 = vst [vmem:[#allocation2 + $0x4] sm:$0x1] %v307
        %s309 = sadd.s32 %s277, 3
        %s310 = sld [smem:[#allocation4 + %s309]]
        %s311 = scalar_lea.vmem [#allocation5], %s310
        %v312 = vld [vmem:[%s311] sm:$0x1]
        %313 = vst [vmem:[#allocation2 + $0x5] sm:$0x1] %v312
        %s314 = sadd.s32 %s277, 4
        %s315 = sld [smem:[#allocation4 + %s314]]
        %s316 = scalar_lea.vmem [#allocation5], %s315
        %v317 = vld [vmem:[%s316] sm:$0x1]
        %318 = vst [vmem:[#allocation2 + $0x6] sm:$0x1] %v317
        %s319 = sadd.s32 %s277, 5
        %s320 = sld [smem:[#allocation4 + %s319]]
        %s321 = scalar_lea.vmem [#allocation5], %s320
        %v322 = vld [vmem:[%s321] sm:$0x1]
        %323 = vst [vmem:[#allocation2 + $0x7] sm:$0x1] %v322
        %s324 = sadd.s32 %s277, 6
        %s325 = sld [smem:[#allocation4 + %s324]]
        %s326 = scalar_lea.vmem [#allocation5], %s325
        %v327 = vld [vmem:[%s326] sm:$0x1]
        %328 = vst [vmem:[#allocation2 + $0x8] sm:$0x1] %v327
        %s329 = sadd.s32 %s277, 7
        %s330 = sld [smem:[#allocation4 + %s329]]
        %s331 = scalar_lea.vmem [#allocation5], %s330
        %v332 = vld [vmem:[%s331] sm:$0x1]
        %333 = vst [vmem:[#allocation2 + $0x9] sm:$0x1] %v332
        %s334 = sadd.s32 %s277, 8
        %s335 = sld [smem:[#allocation4 + %s334]]
        %s336 = scalar_lea.vmem [#allocation5], %s335
        %v337 = vld [vmem:[%s336] sm:$0x1]
        %338 = vst [vmem:[#allocation2 + $0x12] sm:$0x1] %v337
        %s339 = sadd.s32 %s277, 9
        %s340 = sld [smem:[#allocation4 + %s339]]
        %s341 = scalar_lea.vmem [#allocation5], %s340
        %v342 = vld [vmem:[%s341] sm:$0x1]
        %343 = vst [vmem:[#allocation2 + $0x13] sm:$0x1] %v342
        %s344 = sadd.s32 %s277, 10
        %s345 = sld [smem:[#allocation4 + %s344]]
        %s346 = scalar_lea.vmem [#allocation5], %s345
        %v347 = vld [vmem:[%s346] sm:$0x1]
        %348 = vst [vmem:[#allocation2 + $0x14] sm:$0x1] %v347
        %s349 = sadd.s32 %s277, 11
        %s350 = sld [smem:[#allocation4 + %s349]]
        %s351 = scalar_lea.vmem [#allocation5], %s350
        %v352 = vld [vmem:[%s351] sm:$0x1]
        %353 = vst [vmem:[#allocation2 + $0x15] sm:$0x1] %v352
        %s354 = sadd.s32 %s277, 12
        %s355 = sld [smem:[#allocation4 + %s354]]
        %s356 = scalar_lea.vmem [#allocation5], %s355
        %v357 = vld [vmem:[%s356] sm:$0x1]
        %358 = vst [vmem:[#allocation2 + $0x16] sm:$0x1] %v357
        %s359 = sadd.s32 %s277, 13
        %s360 = sld [smem:[#allocation4 + %s359]]
        %s361 = scalar_lea.vmem [#allocation5], %s360
        %v362 = vld [vmem:[%s361] sm:$0x1]
        %363 = vst [vmem:[#allocation2 + $0x17] sm:$0x1] %v362
        %s364 = sadd.s32 %s277, 14
        %s365 = sld [smem:[#allocation4 + %s364]]
        %s366 = scalar_lea.vmem [#allocation5], %s365
        %v367 = vld [vmem:[%s366] sm:$0x1]
        %368 = vst [vmem:[#allocation2 + $0x18] sm:$0x1] %v367
        %s369 = sadd.s32 %s277, 15
        %s370 = sld [smem:[#allocation4 + %s369]]
        %s371 = scalar_lea.vmem [#allocation5], %s370
        %v372 = vld [vmem:[%s371] sm:$0x1]
        %373 = vst [vmem:[#allocation2 + $0x19] sm:$0x1] %v372
        %s374 = sadd.s32 %s277, 16
        %s375 = sld [smem:[#allocation4 + %s374]]
        %s376 = scalar_lea.vmem [#allocation5], %s375
        %v377 = vld [vmem:[%s376] sm:$0x1]
        %378 = vst [vmem:[#allocation2 + $0x22] sm:$0x1] %v377
        %s379 = sadd.s32 %s277, 17
        %s380 = sld [smem:[#allocation4 + %s379]]
        %s381 = scalar_lea.vmem [#allocation5], %s380
        %v382 = vld [vmem:[%s381] sm:$0x1]
        %383 = vst [vmem:[#allocation2 + $0x23] sm:$0x1] %v382
        %s384 = sadd.s32 %s277, 18
        %s385 = sld [smem:[#allocation4 + %s384]]
        %s386 = scalar_lea.vmem [#allocation5], %s385
        %v387 = vld [vmem:[%s386] sm:$0x1]
        %388 = vst [vmem:[#allocation2 + $0x24] sm:$0x1] %v387
        %s389 = sadd.s32 %s277, 19
        %s390 = sld [smem:[#allocation4 + %s389]]
        %s391 = scalar_lea.vmem [#allocation5], %s390
        %v392 = vld [vmem:[%s391] sm:$0x1]
        %393 = vst [vmem:[#allocation2 + $0x25] sm:$0x1] %v392
        %s394 = sadd.s32 %s277, 20
        %s395 = sld [smem:[#allocation4 + %s394]]
        %s396 = scalar_lea.vmem [#allocation5], %s395
        %v397 = vld [vmem:[%s396] sm:$0x1]
        %398 = vst [vmem:[#allocation2 + $0x26] sm:$0x1] %v397
        %s399 = sadd.s32 %s277, 21
        %s400 = sld [smem:[#allocation4 + %s399]]
        %s401 = scalar_lea.vmem [#allocation5], %s400
        %v402 = vld [vmem:[%s401] sm:$0x1]
        %403 = vst [vmem:[#allocation2 + $0x27] sm:$0x1] %v402
        %s404 = sadd.s32 %s277, 22
        %s405 = sld [smem:[#allocation4 + %s404]]
        %s406 = scalar_lea.vmem [#allocation5], %s405
        %v407 = vld [vmem:[%s406] sm:$0x1]
        %408 = vst [vmem:[#allocation2 + $0x28] sm:$0x1] %v407
        %s409 = sadd.s32 %s277, 23
        %s410 = sld [smem:[#allocation4 + %s409]]
        %s411 = scalar_lea.vmem [#allocation5], %s410
        %v412 = vld [vmem:[%s411] sm:$0x1]
        %413 = vst [vmem:[#allocation2 + $0x29] sm:$0x1] %v412
        %s414 = sadd.s32 %s277, 24
        %s415 = sld [smem:[#allocation4 + %s414]]
        %s416 = scalar_lea.vmem [#allocation5], %s415
        %v417 = vld [vmem:[%s416] sm:$0x1]
        %418 = vst [vmem:[#allocation2 + $0x32] sm:$0x1] %v417
        %s419 = sadd.s32 %s277, 25
        %s420 = sld [smem:[#allocation4 + %s419]]
        %s421 = scalar_lea.vmem [#allocation5], %s420
        %v422 = vld [vmem:[%s421] sm:$0x1]
        %423 = vst [vmem:[#allocation2 + $0x33] sm:$0x1] %v422
        %s424 = sadd.s32 %s277, 26
        %s425 = sld [smem:[#allocation4 + %s424]]
        %s426 = scalar_lea.vmem [#allocation5], %s425
        %v427 = vld [vmem:[%s426] sm:$0x1]
        %428 = vst [vmem:[#allocation2 + $0x34] sm:$0x1] %v427
        %s429 = sadd.s32 %s277, 27
        %s430 = sld [smem:[#allocation4 + %s429]]
        %s431 = scalar_lea.vmem [#allocation5], %s430
        %v432 = vld [vmem:[%s431] sm:$0x1]
        %433 = vst [vmem:[#allocation2 + $0x35] sm:$0x1] %v432
        %s434 = sadd.s32 %s277, 28
        %s435 = sld [smem:[#allocation4 + %s434]]
        %s436 = scalar_lea.vmem [#allocation5], %s435
        %v437 = vld [vmem:[%s436] sm:$0x1]
        %438 = vst [vmem:[#allocation2 + $0x36] sm:$0x1] %v437
        %s439 = sadd.s32 %s277, 29
        %s440 = sld [smem:[#allocation4 + %s439]]
        %s441 = scalar_lea.vmem [#allocation5], %s440
        %v442 = vld [vmem:[%s441] sm:$0x1]
        %443 = vst [vmem:[#allocation2 + $0x37] sm:$0x1] %v442
        %s444 = sadd.s32 %s277, 30
        %s445 = sld [smem:[#allocation4 + %s444]]
        %s446 = scalar_lea.vmem [#allocation5], %s445
        %v447 = vld [vmem:[%s446] sm:$0x1]
        %448 = vst [vmem:[#allocation2 + $0x38] sm:$0x1] %v447
        %s449 = sadd.s32 %s277, 31
        %s450 = sld [smem:[#allocation4 + %s449]]
        %s451 = scalar_lea.vmem [#allocation5], %s450
        %v452 = vld [vmem:[%s451] sm:$0x1]
        %453 = vst [vmem:[#allocation2 + $0x39] sm:$0x1] %v452
        %s454 = sadd.s32 %s277, 32
        %s455 = sld [smem:[#allocation4 + %s454]]
        %s456 = scalar_lea.vmem [#allocation5], %s455
        %v457 = vld [vmem:[%s456] sm:$0x1]
        %458 = vst [vmem:[#allocation2 + $0x42] sm:$0x1] %v457
        %s459 = sadd.s32 %s277, 33
        %s460 = sld [smem:[#allocation4 + %s459]]
        %s461 = scalar_lea.vmem [#allocation5], %s460
        %v462 = vld [vmem:[%s461] sm:$0x1]
        %463 = vst [vmem:[#allocation2 + $0x43] sm:$0x1] %v462
        %s464 = sadd.s32 %s277, 34
        %s465 = sld [smem:[#allocation4 + %s464]]
        %s466 = scalar_lea.vmem [#allocation5], %s465
        %v467 = vld [vmem:[%s466] sm:$0x1]
        %468 = vst [vmem:[#allocation2 + $0x44] sm:$0x1] %v467
        %s469 = sadd.s32 %s277, 35
        %s470 = sld [smem:[#allocation4 + %s469]]
        %s471 = scalar_lea.vmem [#allocation5], %s470
        %v472 = vld [vmem:[%s471] sm:$0x1]
        %473 = vst [vmem:[#allocation2 + $0x45] sm:$0x1] %v472
        %s474 = sadd.s32 %s277, 36
        %s475 = sld [smem:[#allocation4 + %s474]]
        %s476 = scalar_lea.vmem [#allocation5], %s475
        %v477 = vld [vmem:[%s476] sm:$0x1]
        %478 = vst [vmem:[#allocation2 + $0x46] sm:$0x1] %v477
        %s479 = sadd.s32 %s277, 37
        %s480 = sld [smem:[#allocation4 + %s479]]
        %s481 = scalar_lea.vmem [#allocation5], %s480
        %v482 = vld [vmem:[%s481] sm:$0x1]
        %483 = vst [vmem:[#allocation2 + $0x47] sm:$0x1] %v482
        %s484 = sadd.s32 %s277, 38
        %s485 = sld [smem:[#allocation4 + %s484]]
        %s486 = scalar_lea.vmem [#allocation5], %s485
        %v487 = vld [vmem:[%s486] sm:$0x1]
        %488 = vst [vmem:[#allocation2 + $0x48] sm:$0x1] %v487
        %s489 = sadd.s32 %s277, 39
        %s490 = sld [smem:[#allocation4 + %s489]]
        %s491 = scalar_lea.vmem [#allocation5], %s490
        %v492 = vld [vmem:[%s491] sm:$0x1]
        %493 = vst [vmem:[#allocation2 + $0x49] sm:$0x1] %v492
        %s494 = sadd.s32 %s277, 40
        %s495 = sld [smem:[#allocation4 + %s494]]
        %s496 = scalar_lea.vmem [#allocation5], %s495
        %v497 = vld [vmem:[%s496] sm:$0x1]
        %498 = vst [vmem:[#allocation2 + $0x52] sm:$0x1] %v497
        %s499 = sadd.s32 %s277, 41
        %s500 = sld [smem:[#allocation4 + %s499]]
        %s501 = scalar_lea.vmem [#allocation5], %s500
        %v502 = vld [vmem:[%s501] sm:$0x1]
        %503 = vst [vmem:[#allocation2 + $0x53] sm:$0x1] %v502
        %s504 = sadd.s32 %s277, 42
        %s505 = sld [smem:[#allocation4 + %s504]]
        %s506 = scalar_lea.vmem [#allocation5], %s505
        %v507 = vld [vmem:[%s506] sm:$0x1]
        %508 = vst [vmem:[#allocation2 + $0x54] sm:$0x1] %v507
        %s509 = sadd.s32 %s277, 43
        %s510 = sld [smem:[#allocation4 + %s509]]
        %s511 = scalar_lea.vmem [#allocation5], %s510
        %v512 = vld [vmem:[%s511] sm:$0x1]
        %513 = vst [vmem:[#allocation2 + $0x55] sm:$0x1] %v512
        %s514 = sadd.s32 %s277, 44
        %s515 = sld [smem:[#allocation4 + %s514]]
        %s516 = scalar_lea.vmem [#allocation5], %s515
        %v517 = vld [vmem:[%s516] sm:$0x1]
        %518 = vst [vmem:[#allocation2 + $0x56] sm:$0x1] %v517
        %s519 = sadd.s32 %s277, 45
        %s520 = sld [smem:[#allocation4 + %s519]]
        %s521 = scalar_lea.vmem [#allocation5], %s520
        %v522 = vld [vmem:[%s521] sm:$0x1]
        %523 = vst [vmem:[#allocation2 + $0x57] sm:$0x1] %v522
        %s524 = sadd.s32 %s277, 46
        %s525 = sld [smem:[#allocation4 + %s524]]
        %s526 = scalar_lea.vmem [#allocation5], %s525
        %v527 = vld [vmem:[%s526] sm:$0x1]
        %528 = vst [vmem:[#allocation2 + $0x58] sm:$0x1] %v527
        %s529 = sadd.s32 %s277, 47
        %s530 = sld [smem:[#allocation4 + %s529]]
        %s531 = scalar_lea.vmem [#allocation5], %s530
        %v532 = vld [vmem:[%s531] sm:$0x1]
        %533 = vst [vmem:[#allocation2 + $0x59] sm:$0x1] %v532
        %s534 = sadd.s32 %s277, 48
        %s535 = sld [smem:[#allocation4 + %s534]]
        %s536 = scalar_lea.vmem [#allocation5], %s535
        %v537 = vld [vmem:[%s536] sm:$0x1]
        %538 = vst [vmem:[#allocation2 + $0x62] sm:$0x1] %v537
        %s539 = sadd.s32 %s277, 49
        %s540 = sld [smem:[#allocation4 + %s539]]
        %s541 = scalar_lea.vmem [#allocation5], %s540
        %v542 = vld [vmem:[%s541] sm:$0x1]
        %543 = vst [vmem:[#allocation2 + $0x63] sm:$0x1] %v542
        %s544 = sadd.s32 %s277, 50
        %s545 = sld [smem:[#allocation4 + %s544]]
        %s546 = scalar_lea.vmem [#allocation5], %s545
        %v547 = vld [vmem:[%s546] sm:$0x1]
        %548 = vst [vmem:[#allocation2 + $0x64] sm:$0x1] %v547
        %s549 = sadd.s32 %s277, 51
        %s550 = sld [smem:[#allocation4 + %s549]]
        %s551 = scalar_lea.vmem [#allocation5], %s550
        %v552 = vld [vmem:[%s551] sm:$0x1]
        %553 = vst [vmem:[#allocation2 + $0x65] sm:$0x1] %v552
        %s554 = sadd.s32 %s277, 52
        %s555 = sld [smem:[#allocation4 + %s554]]
        %s556 = scalar_lea.vmem [#allocation5], %s555
        %v557 = vld [vmem:[%s556] sm:$0x1]
        %558 = vst [vmem:[#allocation2 + $0x66] sm:$0x1] %v557
        %s559 = sadd.s32 %s277, 53
        %s560 = sld [smem:[#allocation4 + %s559]]
        %s561 = scalar_lea.vmem [#allocation5], %s560
        %v562 = vld [vmem:[%s561] sm:$0x1]
        %563 = vst [vmem:[#allocation2 + $0x67] sm:$0x1] %v562
        %s564 = sadd.s32 %s277, 54
        %s565 = sld [smem:[#allocation4 + %s564]]
        %s566 = scalar_lea.vmem [#allocation5], %s565
        %v567 = vld [vmem:[%s566] sm:$0x1]
        %568 = vst [vmem:[#allocation2 + $0x68] sm:$0x1] %v567
        %s569 = sadd.s32 %s277, 55
        %s570 = sld [smem:[#allocation4 + %s569]]
        %s571 = scalar_lea.vmem [#allocation5], %s570
        %v572 = vld [vmem:[%s571] sm:$0x1]
        %573 = vst [vmem:[#allocation2 + $0x69] sm:$0x1] %v572
        %s574 = sadd.s32 %s277, 56
        %s575 = sld [smem:[#allocation4 + %s574]]
        %s576 = scalar_lea.vmem [#allocation5], %s575
        %v577 = vld [vmem:[%s576] sm:$0x1]
        %578 = vst [vmem:[#allocation2 + $0x72] sm:$0x1] %v577
        %s579 = sadd.s32 %s277, 57
        %s580 = sld [smem:[#allocation4 + %s579]]
        %s581 = scalar_lea.vmem [#allocation5], %s580
        %v582 = vld [vmem:[%s581] sm:$0x1]
        %583 = vst [vmem:[#allocation2 + $0x73] sm:$0x1] %v582
        %s584 = sadd.s32 %s277, 58
        %s585 = sld [smem:[#allocation4 + %s584]]
        %s586 = scalar_lea.vmem [#allocation5], %s585
        %v587 = vld [vmem:[%s586] sm:$0x1]
        %588 = vst [vmem:[#allocation2 + $0x74] sm:$0x1] %v587
        %s589 = sadd.s32 %s277, 59
        %s590 = sld [smem:[#allocation4 + %s589]]
        %s591 = scalar_lea.vmem [#allocation5], %s590
        %v592 = vld [vmem:[%s591] sm:$0x1]
        %593 = vst [vmem:[#allocation2 + $0x75] sm:$0x1] %v592
        %s594 = sadd.s32 %s277, 60
        %s595 = sld [smem:[#allocation4 + %s594]]
        %s596 = scalar_lea.vmem [#allocation5], %s595
        %v597 = vld [vmem:[%s596] sm:$0x1]
        %598 = vst [vmem:[#allocation2 + $0x76] sm:$0x1] %v597
        %s599 = sadd.s32 %s277, 61
        %s600 = sld [smem:[#allocation4 + %s599]]
        %s601 = scalar_lea.vmem [#allocation5], %s600
        %v602 = vld [vmem:[%s601] sm:$0x1]
        %603 = vst [vmem:[#allocation2 + $0x77] sm:$0x1] %v602
        %s604 = sadd.s32 %s277, 62
        %s605 = sld [smem:[#allocation4 + %s604]]
        %s606 = scalar_lea.vmem [#allocation5], %s605
        %v607 = vld [vmem:[%s606] sm:$0x1]
        %608 = vst [vmem:[#allocation2 + $0x78] sm:$0x1] %v607
        %s609 = sadd.s32 %s277, 63
        %s610 = sld [smem:[#allocation4 + %s609]]
        %s611 = scalar_lea.vmem [#allocation5], %s610
        %v612 = vld [vmem:[%s611] sm:$0x1]
        %613 = vst [vmem:[#allocation2 + $0x79] sm:$0x1] %v612
        %v614 = vlaneseq
        %v615 = vshrl.u32 %v614, 7
        %v616 = vadd.s32 %v615, 8
        %v617 = vadd.s32 %v615, 16
        %v618 = vadd.s32 %v615, 24
        %v619 = vadd.s32 %v615, 32
        %v620 = vadd.s32 %v615, 40
        %v621 = vadd.s32 %v615, 48
        %v622 = vadd.s32 %v615, 56
        %v623 = vlaneseq
        %v624 = vand.u32 %v623, 127
        %v625 = vmul.u32 %v615, 2
        %v626 = vmul.u32 %v616, 2
        %v627 = vmul.u32 %v617, 2
        %v628 = vmul.u32 %v618, 2
        %v629 = vmul.u32 %v619, 2
        %v630 = vmul.u32 %v620, 2
        %v631 = vmul.u32 %v621, 2
        %v632 = vmul.u32 %v622, 2
        %vm633 = vcmp.eq.s32.totalorder %v624, %v625
        %vm634 = vcmp.eq.s32.totalorder %v624, %v626
        %vm635 = vcmp.eq.s32.totalorder %v624, %v627
        %vm636 = vcmp.eq.s32.totalorder %v624, %v628
        %vm637 = vcmp.eq.s32.totalorder %v624, %v629
        %vm638 = vcmp.eq.s32.totalorder %v624, %v630
        %vm639 = vcmp.eq.s32.totalorder %v624, %v631
        %vm640 = vcmp.eq.s32.totalorder %v624, %v632
        %v641 = vsel %vm633, 1, 0
        %v642 = vsel %vm634, 1, 0
        %v643 = vsel %vm635, 1, 0
        %v644 = vsel %vm636, 1, 0
        %v645 = vsel %vm637, 1, 0
        %v646 = vsel %vm638, 1, 0
        %v647 = vsel %vm639, 1, 0
        %v648 = vsel %vm640, 1, 0
        %v649 = vcvt.s32.f32 %v641
        %v650 = vcvt.s32.f32 %v642
        %v651 = vcvt.s32.f32 %v643
        %v652 = vcvt.s32.f32 %v644
        %v653 = vcvt.s32.f32 %v645
        %v654 = vcvt.s32.f32 %v646
        %v655 = vcvt.s32.f32 %v647
        %v656 = vcvt.s32.f32 %v648
        %v657 = vpack.c.bf16 %v650, %v649
        %v658 = vpack.c.bf16 %v652, %v651
        %v659 = vpack.c.bf16 %v654, %v653
        %v660 = vpack.c.bf16 %v656, %v655
        %v661 = vadd.s32 %v625, 1
        %v662 = vadd.s32 %v626, 1
        %v663 = vadd.s32 %v627, 1
        %v664 = vadd.s32 %v628, 1
        %v665 = vadd.s32 %v629, 1
        %v666 = vadd.s32 %v630, 1
        %v667 = vadd.s32 %v631, 1
        %v668 = vadd.s32 %v632, 1
        %vm669 = vcmp.eq.s32.totalorder %v624, %v661
        %vm670 = vcmp.eq.s32.totalorder %v624, %v662
        %vm671 = vcmp.eq.s32.totalorder %v624, %v663
        %vm672 = vcmp.eq.s32.totalorder %v624, %v664
        %vm673 = vcmp.eq.s32.totalorder %v624, %v665
        %vm674 = vcmp.eq.s32.totalorder %v624, %v666
        %vm675 = vcmp.eq.s32.totalorder %v624, %v667
        %vm676 = vcmp.eq.s32.totalorder %v624, %v668
        %v677 = vsel %vm669, 1, 0
        %v678 = vsel %vm670, 1, 0
        %v679 = vsel %vm671, 1, 0
        %v680 = vsel %vm672, 1, 0
        %v681 = vsel %vm673, 1, 0
        %v682 = vsel %vm674, 1, 0
        %v683 = vsel %vm675, 1, 0
        %v684 = vsel %vm676, 1, 0
        %v685 = vcvt.s32.f32 %v677
        %v686 = vcvt.s32.f32 %v678
        %v687 = vcvt.s32.f32 %v679
        %v688 = vcvt.s32.f32 %v680
        %v689 = vcvt.s32.f32 %v681
        %v690 = vcvt.s32.f32 %v682
        %v691 = vcvt.s32.f32 %v683
        %v692 = vcvt.s32.f32 %v684
        %v693 = vpack.c.bf16 %v686, %v685
        %v694 = vpack.c.bf16 %v688, %v687
        %v695 = vpack.c.bf16 %v690, %v689
        %v696 = vpack.c.bf16 %v692, %v691
        %v697 = vld [vmem:[#allocation2] sm:$0xff]
        %v698 = vld [vmem:[#allocation2 + $0x8] sm:$0xff]
        %v699 = vld [vmem:[#allocation2 + $0x10] sm:$0xff]
        %v700 = vld [vmem:[#allocation2 + $0x18] sm:$0xff]
        %v701 = vld [vmem:[#allocation2 + $0x20] sm:$0xff]
        %v702 = vld [vmem:[#allocation2 + $0x28] sm:$0xff]
        %v703 = vld [vmem:[#allocation2 + $0x30] sm:$0xff]
        %v704 = vld [vmem:[#allocation2 + $0x38] sm:$0xff]
        %v705 = vld [vmem:[#allocation2 + $0x40] sm:$0xff]
        %v706 = vld [vmem:[#allocation2 + $0x48] sm:$0xff]
        %v707 = vld [vmem:[#allocation2 + $0x50] sm:$0xff]
        %v708 = vld [vmem:[#allocation2 + $0x58] sm:$0xff]
        %v709 = vld [vmem:[#allocation2 + $0x60] sm:$0xff]
        %v710 = vld [vmem:[#allocation2 + $0x68] sm:$0xff]
        %v711 = vld [vmem:[#allocation2 + $0x70] sm:$0xff]
        %v712 = vld [vmem:[#allocation2 + $0x78] sm:$0xff]
        %v713 = vld [vmem:[#allocation2 + $0x80] sm:$0xff]
        %v714 = vpack.c.bf16 %v697, %v697
        %v715 = vpack.c.bf16 %v698, %v698
        %v716 = vpack.c.bf16 %v699, %v699
        %v717 = vpack.c.bf16 %v700, %v700
        %v718 = vpack.c.bf16 %v701, %v701
        %v719 = vpack.c.bf16 %v702, %v702
        %v720 = vpack.c.bf16 %v703, %v703
        %v721 = vpack.c.bf16 %v704, %v704
        %v722 = vpack.c.bf16 %v705, %v705
        %v723 = vpack.c.bf16 %v706, %v706
        %v724 = vpack.c.bf16 %v707, %v707
        %v725 = vpack.c.bf16 %v708, %v708
        %v726 = vpack.c.bf16 %v709, %v709
        %v727 = vpack.c.bf16 %v710, %v710
        %v728 = vpack.c.bf16 %v711, %v711
        %v729 = vpack.c.bf16 %v712, %v712
        %v730 = vpack.c.bf16 %v713, %v713
        %v731 = vld [vmem:[#allocation8] sm:$0xf]
        %v732 = vld [vmem:[#allocation8 + $0x4] sm:$0xf]
        %v733 = vld [vmem:[#allocation8 + $0x8] sm:$0xf]
        %v734 = vld [vmem:[#allocation8 + $0xc] sm:$0xf]
        %v735 = vld [vmem:[#allocation8 + $0x10] sm:$0xf]
        %v736 = vld [vmem:[#allocation8 + $0x14] sm:$0xf]
        %v737 = vld [vmem:[#allocation8 + $0x18] sm:$0xf]
        %v738 = vld [vmem:[#allocation8 + $0x1c] sm:$0xf]
        %v739 = vld [vmem:[#allocation8 + $0x20] sm:$0xf]
        %v740 = vld [vmem:[#allocation8 + $0x24] sm:$0xf]
        %v741 = vld [vmem:[#allocation8 + $0x28] sm:$0xf]
        %v742 = vld [vmem:[#allocation8 + $0x2c] sm:$0xf]
        %v743 = vld [vmem:[#allocation8 + $0x30] sm:$0xf]
        %v744 = vld [vmem:[#allocation8 + $0x34] sm:$0xf]
        %v745 = vld [vmem:[#allocation8 + $0x38] sm:$0xf]
        %v746 = vld [vmem:[#allocation8 + $0x3c] sm:$0xf]
        %s747 = scalar_lea.vmem [#allocation8], 64
        %v748 = vld [vmem:[%s747] sm:$0xf]
        %v749 = vld [vmem:[%s747 + $0x4] sm:$0xf]
        %v750 = vld [vmem:[%s747 + $0x8] sm:$0xf]
        %v751 = vld [vmem:[%s747 + $0xc] sm:$0xf]
        %v752 = vld [vmem:[%s747 + $0x10] sm:$0xf]
        %v753 = vld [vmem:[%s747 + $0x14] sm:$0xf]
        %v754 = vld [vmem:[%s747 + $0x18] sm:$0xf]
        %v755 = vld [vmem:[%s747 + $0x1c] sm:$0xf]
        %v756 = vld [vmem:[%s747 + $0x20] sm:$0xf]
        %v757 = vld [vmem:[%s747 + $0x24] sm:$0xf]
        %v758 = vld [vmem:[%s747 + $0x28] sm:$0xf]
        %v759 = vld [vmem:[%s747 + $0x2c] sm:$0xf]
        %v760 = vld [vmem:[%s747 + $0x30] sm:$0xf]
        %v761 = vld [vmem:[%s747 + $0x34] sm:$0xf]
        %v762 = vld [vmem:[%s747 + $0x38] sm:$0xf]
        %v763 = vld [vmem:[%s747 + $0x3c] sm:$0xf]
        %v781 = vunpack.c.l.b16 %v714
        %v782 = vunpack.c.l.b16 %v715
        %v783 = vunpack.c.l.b16 %v716
        %v784 = vunpack.c.l.b16 %v717
        %v785 = vunpack.c.l.b16 %v718
        %v786 = vunpack.c.l.b16 %v719
        %v787 = vunpack.c.l.b16 %v720
        %v788 = vunpack.c.l.b16 %v721
        %v789 = vunpack.c.l.b16 %v722
        %v790 = vunpack.c.l.b16 %v723
        %v791 = vunpack.c.l.b16 %v724
        %v792 = vunpack.c.l.b16 %v725
        %v793 = vunpack.c.l.b16 %v726
        %v794 = vunpack.c.l.b16 %v727
        %v795 = vunpack.c.l.b16 %v728
        %v796 = vunpack.c.l.b16 %v729
        %v797 = vunpack.c.l.b16 %v730
        %v798 = vpack.c.b16 %v782, %v781
        %v799 = vpack.c.b16 %v784, %v783
        %v800 = vpack.c.b16 %v786, %v785
        %v801 = vpack.c.b16 %v788, %v787
        %v802 = vpack.c.b16 %v790, %v789
        %v803 = vpack.c.b16 %v792, %v791
        %v804 = vpack.c.b16 %v794, %v793
        %v805 = vpack.c.b16 %v796, %v795
        %v806 = vpack.c.b16 %v797, %v797
        %vm807 = vsmask.f32 7424
        %v809 = vshrl.u32 %v798, 16
        %v811 = vshll.u32 %v798, 16
        %v813 = vrot.slane %v811, 1
        %v814 = vor.u32 %v809, %v813
        %v816 = vshll.u32 %v799, 16
        %v818 = vrot.slane %v816, 1
        %v819 = vsel %vm807, %v814, %v818
        %v820 = vshrl.u32 %v799, 16
        %v822 = vor.u32 %v820, %v818
        %v824 = vshll.u32 %v800, 16
        %v826 = vrot.slane %v824, 1
        %v827 = vsel %vm807, %v822, %v826
        %v828 = vshrl.u32 %v800, 16
        %v830 = vor.u32 %v828, %v826
        %v832 = vshll.u32 %v801, 16
        %v834 = vrot.slane %v832, 1
        %v835 = vsel %vm807, %v830, %v834
        %v836 = vshrl.u32 %v801, 16
        %v838 = vor.u32 %v836, %v834
        %v840 = vshll.u32 %v802, 16
        %v842 = vrot.slane %v840, 1
        %v843 = vsel %vm807, %v838, %v842
        %v844 = vshrl.u32 %v802, 16
        %v846 = vor.u32 %v844, %v842
        %v848 = vshll.u32 %v803, 16
        %v850 = vrot.slane %v848, 1
        %v851 = vsel %vm807, %v846, %v850
        %v852 = vshrl.u32 %v803, 16
        %v854 = vor.u32 %v852, %v850
        %v856 = vshll.u32 %v804, 16
        %v858 = vrot.slane %v856, 1
        %v859 = vsel %vm807, %v854, %v858
        %v860 = vshrl.u32 %v804, 16
        %v862 = vor.u32 %v860, %v858
        %v864 = vshll.u32 %v805, 16
        %v866 = vrot.slane %v864, 1
        %v867 = vsel %vm807, %v862, %v866
        %v868 = vshrl.u32 %v805, 16
        %v870 = vor.u32 %v868, %v866
        %v872 = vshll.u32 %v806, 16
        %v874 = vrot.slane %v872, 1
        %v875 = vsel %vm807, %v870, %v874
        %v900 = vunpack.c.l.b16 %v748
        %v901 = vunpack.c.l.b16 %v749
        %v902 = vunpack.c.l.b16 %v750
        %v903 = vunpack.c.l.b16 %v751
        %v904 = vunpack.c.l.b16 %v752
        %v905 = vunpack.c.l.b16 %v753
        %v906 = vunpack.c.l.b16 %v754
        %v907 = vunpack.c.l.b16 %v755
        %v908 = vunpack.c.l.b16 %v756
        %v909 = vunpack.c.l.b16 %v757
        %v910 = vunpack.c.l.b16 %v758
        %v911 = vunpack.c.l.b16 %v759
        %v912 = vunpack.c.l.b16 %v760
        %v913 = vunpack.c.l.b16 %v761
        %v914 = vunpack.c.l.b16 %v762
        %v915 = vunpack.c.l.b16 %v763
        %v916 = vpack.c.b16 %v901, %v900
        %v917 = vpack.c.b16 %v903, %v902
        %v918 = vpack.c.b16 %v905, %v904
        %v919 = vpack.c.b16 %v907, %v906
        %v920 = vpack.c.b16 %v909, %v908
        %v921 = vpack.c.b16 %v911, %v910
        %v922 = vpack.c.b16 %v913, %v912
        %v923 = vpack.c.b16 %v915, %v914
        %932 = vmatpush.bf16.msra.mxu0 %v923
        %933 = vmatpush.bf16.msra.mxu0 %v922
        %934 = vmatpush.bf16.msra.mxu0 %v921
        %935 = vmatpush.bf16.msra.mxu0 %v920
        %936 = vmatpush.bf16.msra.mxu0 %v919
        %937 = vmatpush.bf16.msra.mxu0 %v918
        %938 = vmatpush.bf16.msra.mxu0 %v917
        %939 = vmatpush.bf16.msra.mxu0 %v916
        %940 = vmatmul.bf16.gmra.mxu0 %v819
        %v941 = vpop.f32.mrf.mxu0
        %v942 = vadd.f32 0.0, %v941
        %v943 = vpop.f32.mrf.mxu0
        %v944 = vadd.f32 0.0, %v943
        %945 = vmatmul.bf16.gmra.mxu0 %v827
        %v946 = vpop.f32.mrf.mxu0
        %v947 = vadd.f32 0.0, %v946
        %v948 = vpop.f32.mrf.mxu0
        %v949 = vadd.f32 0.0, %v948
        %950 = vmatmul.bf16.gmra.mxu0 %v835
        %v951 = vpop.f32.mrf.mxu0
        %v952 = vadd.f32 0.0, %v951
        %v953 = vpop.f32.mrf.mxu0
        %v954 = vadd.f32 0.0, %v953
        %955 = vmatmul.bf16.gmra.mxu0 %v843
        %v956 = vpop.f32.mrf.mxu0
        %v957 = vadd.f32 0.0, %v956
        %v958 = vpop.f32.mrf.mxu0
        %v959 = vadd.f32 0.0, %v958
        %960 = vmatmul.bf16.gmra.mxu0 %v851
        %v961 = vpop.f32.mrf.mxu0
        %v962 = vadd.f32 0.0, %v961
        %v963 = vpop.f32.mrf.mxu0
        %v964 = vadd.f32 0.0, %v963
        %965 = vmatmul.bf16.gmra.mxu0 %v859
        %v966 = vpop.f32.mrf.mxu0
        %v967 = vadd.f32 0.0, %v966
        %v968 = vpop.f32.mrf.mxu0
        %v969 = vadd.f32 0.0, %v968
        %970 = vmatmul.bf16.gmra.mxu0 %v867
        %v971 = vpop.f32.mrf.mxu0
        %v972 = vadd.f32 0.0, %v971
        %v973 = vpop.f32.mrf.mxu0
        %v974 = vadd.f32 0.0, %v973
        %975 = vmatmul.bf16.gmra.mxu0 %v875
        %v976 = vpop.f32.mrf.mxu0
        %v977 = vadd.f32 0.0, %v976
        %v978 = vpop.f32.mrf.mxu0
        %v979 = vadd.f32 0.0, %v978
        %980 = vdwg.mxu0
        %v1005 = vunpack.c.l.b16 %v731
        %v1006 = vunpack.c.l.b16 %v732
        %v1007 = vunpack.c.l.b16 %v733
        %v1008 = vunpack.c.l.b16 %v734
        %v1009 = vunpack.c.l.b16 %v735
        %v1010 = vunpack.c.l.b16 %v736
        %v1011 = vunpack.c.l.b16 %v737
        %v1012 = vunpack.c.l.b16 %v738
        %v1013 = vunpack.c.l.b16 %v739
        %v1014 = vunpack.c.l.b16 %v740
        %v1015 = vunpack.c.l.b16 %v741
        %v1016 = vunpack.c.l.b16 %v742
        %v1017 = vunpack.c.l.b16 %v743
        %v1018 = vunpack.c.l.b16 %v744
        %v1019 = vunpack.c.l.b16 %v745
        %v1020 = vunpack.c.l.b16 %v746
        %v1021 = vpack.c.b16 %v1006, %v1005
        %v1022 = vpack.c.b16 %v1008, %v1007
        %v1023 = vpack.c.b16 %v1010, %v1009
        %v1024 = vpack.c.b16 %v1012, %v1011
        %v1025 = vpack.c.b16 %v1014, %v1013
        %v1026 = vpack.c.b16 %v1016, %v1015
        %v1027 = vpack.c.b16 %v1018, %v1017
        %v1028 = vpack.c.b16 %v1020, %v1019
        %1037 = vmatpush.bf16.msra.mxu0 %v1028
        %1038 = vmatpush.bf16.msra.mxu0 %v1027
        %1039 = vmatpush.bf16.msra.mxu0 %v1026
        %1040 = vmatpush.bf16.msra.mxu0 %v1025
        %1041 = vmatpush.bf16.msra.mxu0 %v1024
        %1042 = vmatpush.bf16.msra.mxu0 %v1023
        %1043 = vmatpush.bf16.msra.mxu0 %v1022
        %1044 = vmatpush.bf16.msra.mxu0 %v1021
        %1045 = vmatmul.bf16.gmra.mxu0 %v798
        %v1046 = vpop.f32.mrf.mxu0
        %v1047 = vadd.f32 %v942, %v1046
        %v1048 = vpop.f32.mrf.mxu0
        %v1049 = vadd.f32 %v944, %v1048
        %1050 = vmatmul.bf16.gmra.mxu0 %v799
        %v1051 = vpop.f32.mrf.mxu0
        %v1052 = vadd.f32 %v947, %v1051
        %v1053 = vpop.f32.mrf.mxu0
        %v1054 = vadd.f32 %v949, %v1053
        %1055 = vmatmul.bf16.gmra.mxu0 %v800
        %v1056 = vpop.f32.mrf.mxu0
        %v1057 = vadd.f32 %v952, %v1056
        %v1058 = vpop.f32.mrf.mxu0
        %v1059 = vadd.f32 %v954, %v1058
        %1060 = vmatmul.bf16.gmra.mxu0 %v801
        %v1061 = vpop.f32.mrf.mxu0
        %v1062 = vadd.f32 %v957, %v1061
        %v1063 = vpop.f32.mrf.mxu0
        %v1064 = vadd.f32 %v959, %v1063
        %1065 = vmatmul.bf16.gmra.mxu0 %v802
        %v1066 = vpop.f32.mrf.mxu0
        %v1067 = vadd.f32 %v962, %v1066
        %v1068 = vpop.f32.mrf.mxu0
        %v1069 = vadd.f32 %v964, %v1068
        %1070 = vmatmul.bf16.gmra.mxu0 %v803
        %v1071 = vpop.f32.mrf.mxu0
        %v1072 = vadd.f32 %v967, %v1071
        %v1073 = vpop.f32.mrf.mxu0
        %v1074 = vadd.f32 %v969, %v1073
        %1075 = vmatmul.bf16.gmra.mxu0 %v804
        %v1076 = vpop.f32.mrf.mxu0
        %v1077 = vadd.f32 %v972, %v1076
        %v1078 = vpop.f32.mrf.mxu0
        %v1079 = vadd.f32 %v974, %v1078
        %1080 = vmatmul.bf16.gmra.mxu0 %v805
        %v1081 = vpop.f32.mrf.mxu0
        %v1082 = vadd.f32 %v977, %v1081
        %v1083 = vpop.f32.mrf.mxu0
        %v1084 = vadd.f32 %v979, %v1083
        %1085 = vdwg.mxu0
        %s1086 = scalar_lea.vmem [#allocation8], 128
        %v1087 = vld [vmem:[%s1086] sm:$0xf]
        %v1088 = vld [vmem:[%s1086 + $0x4] sm:$0xf]
        %v1089 = vld [vmem:[%s1086 + $0x8] sm:$0xf]
        %v1090 = vld [vmem:[%s1086 + $0xc] sm:$0xf]
        %v1091 = vld [vmem:[%s1086 + $0x10] sm:$0xf]
        %v1092 = vld [vmem:[%s1086 + $0x14] sm:$0xf]
        %v1093 = vld [vmem:[%s1086 + $0x18] sm:$0xf]
        %v1094 = vld [vmem:[%s1086 + $0x1c] sm:$0xf]
        %v1095 = vld [vmem:[%s1086 + $0x20] sm:$0xf]
        %v1096 = vld [vmem:[%s1086 + $0x24] sm:$0xf]
        %v1097 = vld [vmem:[%s1086 + $0x28] sm:$0xf]
        %v1098 = vld [vmem:[%s1086 + $0x2c] sm:$0xf]
        %v1099 = vld [vmem:[%s1086 + $0x30] sm:$0xf]
        %v1100 = vld [vmem:[%s1086 + $0x34] sm:$0xf]
        %v1101 = vld [vmem:[%s1086 + $0x38] sm:$0xf]
        %v1102 = vld [vmem:[%s1086 + $0x3c] sm:$0xf]
        %vm1103 = vcmask 1046528
        %v1104 = vrot.slane %v798, 1
        %v1105 = vrot.slane %v799, 1
        %v1106 = vsel %vm1103, %v1104, %v1105
        %v1107 = vrot.slane %v800, 1
        %v1108 = vsel %vm1103, %v1105, %v1107
        %v1109 = vrot.slane %v801, 1
        %v1110 = vsel %vm1103, %v1107, %v1109
        %v1111 = vrot.slane %v802, 1
        %v1112 = vsel %vm1103, %v1109, %v1111
        %v1113 = vrot.slane %v803, 1
        %v1114 = vsel %vm1103, %v1111, %v1113
        %v1115 = vrot.slane %v804, 1
        %v1116 = vsel %vm1103, %v1113, %v1115
        %v1117 = vrot.slane %v805, 1
        %v1118 = vsel %vm1103, %v1115, %v1117
        %v1119 = vrot.slane %v806, 1
        %v1120 = vsel %vm1103, %v1117, %v1119
        %v1145 = vunpack.c.l.b16 %v1087
        %v1146 = vunpack.c.l.b16 %v1088
        %v1147 = vunpack.c.l.b16 %v1089
        %v1148 = vunpack.c.l.b16 %v1090
        %v1149 = vunpack.c.l.b16 %v1091
        %v1150 = vunpack.c.l.b16 %v1092
        %v1151 = vunpack.c.l.b16 %v1093
        %v1152 = vunpack.c.l.b16 %v1094
        %v1153 = vunpack.c.l.b16 %v1095
        %v1154 = vunpack.c.l.b16 %v1096
        %v1155 = vunpack.c.l.b16 %v1097
        %v1156 = vunpack.c.l.b16 %v1098
        %v1157 = vunpack.c.l.b16 %v1099
        %v1158 = vunpack.c.l.b16 %v1100
        %v1159 = vunpack.c.l.b16 %v1101
        %v1160 = vunpack.c.l.b16 %v1102
        %v1161 = vpack.c.b16 %v1146, %v1145
        %v1162 = vpack.c.b16 %v1148, %v1147
        %v1163 = vpack.c.b16 %v1150, %v1149
        %v1164 = vpack.c.b16 %v1152, %v1151
        %v1165 = vpack.c.b16 %v1154, %v1153
        %v1166 = vpack.c.b16 %v1156, %v1155
        %v1167 = vpack.c.b16 %v1158, %v1157
        %v1168 = vpack.c.b16 %v1160, %v1159
        %1177 = vmatpush.bf16.msra.mxu0 %v1168
        %1178 = vmatpush.bf16.msra.mxu0 %v1167
        %1179 = vmatpush.bf16.msra.mxu0 %v1166
        %1180 = vmatpush.bf16.msra.mxu0 %v1165
        %1181 = vmatpush.bf16.msra.mxu0 %v1164
        %1182 = vmatpush.bf16.msra.mxu0 %v1163
        %1183 = vmatpush.bf16.msra.mxu0 %v1162
        %1184 = vmatpush.bf16.msra.mxu0 %v1161
        %1185 = vmatmul.bf16.gmra.mxu0 %v1106
        %v1186 = vpop.f32.mrf.mxu0
        %v1187 = vadd.f32 0.0, %v1186
        %v1188 = vpop.f32.mrf.mxu0
        %v1189 = vadd.f32 0.0, %v1188
        %1190 = vmatmul.bf16.gmra.mxu0 %v1108
        %v1191 = vpop.f32.mrf.mxu0
        %v1192 = vadd.f32 0.0, %v1191
        %v1193 = vpop.f32.mrf.mxu0
        %v1194 = vadd.f32 0.0, %v1193
        %1195 = vmatmul.bf16.gmra.mxu0 %v1110
        %v1196 = vpop.f32.mrf.mxu0
        %v1197 = vadd.f32 0.0, %v1196
        %v1198 = vpop.f32.mrf.mxu0
        %v1199 = vadd.f32 0.0, %v1198
        %1200 = vmatmul.bf16.gmra.mxu0 %v1112
        %v1201 = vpop.f32.mrf.mxu0
        %v1202 = vadd.f32 0.0, %v1201
        %v1203 = vpop.f32.mrf.mxu0
        %v1204 = vadd.f32 0.0, %v1203
        %1205 = vmatmul.bf16.gmra.mxu0 %v1114
        %v1206 = vpop.f32.mrf.mxu0
        %v1207 = vadd.f32 0.0, %v1206
        %v1208 = vpop.f32.mrf.mxu0
        %v1209 = vadd.f32 0.0, %v1208
        %1210 = vmatmul.bf16.gmra.mxu0 %v1116
        %v1211 = vpop.f32.mrf.mxu0
        %v1212 = vadd.f32 0.0, %v1211
        %v1213 = vpop.f32.mrf.mxu0
        %v1214 = vadd.f32 0.0, %v1213
        %1215 = vmatmul.bf16.gmra.mxu0 %v1118
        %v1216 = vpop.f32.mrf.mxu0
        %v1217 = vadd.f32 0.0, %v1216
        %v1218 = vpop.f32.mrf.mxu0
        %v1219 = vadd.f32 0.0, %v1218
        %1220 = vmatmul.bf16.gmra.mxu0 %v1120
        %v1221 = vpop.f32.mrf.mxu0
        %v1222 = vadd.f32 0.0, %v1221
        %v1223 = vpop.f32.mrf.mxu0
        %v1224 = vadd.f32 0.0, %v1223
        %1225 = vdwg.mxu0
        %v1226 = vadd.f32 %v1047, %v1187
        %v1227 = vadd.f32 %v1049, %v1189
        %v1228 = vadd.f32 %v1052, %v1192
        %v1229 = vadd.f32 %v1054, %v1194
        %v1230 = vadd.f32 %v1057, %v1197
        %v1231 = vadd.f32 %v1059, %v1199
        %v1232 = vadd.f32 %v1062, %v1202
        %v1233 = vadd.f32 %v1064, %v1204
        %v1234 = vadd.f32 %v1067, %v1207
        %v1235 = vadd.f32 %v1069, %v1209
        %v1236 = vadd.f32 %v1072, %v1212
        %v1237 = vadd.f32 %v1074, %v1214
        %v1238 = vadd.f32 %v1077, %v1217
        %v1239 = vadd.f32 %v1079, %v1219
        %v1240 = vadd.f32 %v1082, %v1222
        %v1241 = vadd.f32 %v1084, %v1224
        %v1242 = vld [vmem:[#allocation10] sm:$0x1]
        %v1243 = vperm.slane %v1242, 0
        %v1244 = vadd.f32 %v1226, %v1243
        %v1245 = vadd.f32 %v1227, %v1243
        %v1246 = vadd.f32 %v1228, %v1243
        %v1247 = vadd.f32 %v1229, %v1243
        %v1248 = vadd.f32 %v1230, %v1243
        %v1249 = vadd.f32 %v1231, %v1243
        %v1250 = vadd.f32 %v1232, %v1243
        %v1251 = vadd.f32 %v1233, %v1243
        %v1252 = vadd.f32 %v1234, %v1243
        %v1253 = vadd.f32 %v1235, %v1243
        %v1254 = vadd.f32 %v1236, %v1243
        %v1255 = vadd.f32 %v1237, %v1243
        %v1256 = vadd.f32 %v1238, %v1243
        %v1257 = vadd.f32 %v1239, %v1243
        %v1258 = vadd.f32 %v1240, %v1243
        %v1259 = vadd.f32 %v1241, %v1243
        %v1260 = vmax.f32 %v1244, 0.0
        %v1261 = vmax.f32 %v1245, 0.0
        %v1262 = vmax.f32 %v1246, 0.0
        %v1263 = vmax.f32 %v1247, 0.0
        %v1264 = vmax.f32 %v1248, 0.0
        %v1265 = vmax.f32 %v1249, 0.0
        %v1266 = vmax.f32 %v1250, 0.0
        %v1267 = vmax.f32 %v1251, 0.0
        %v1268 = vmax.f32 %v1252, 0.0
        %v1269 = vmax.f32 %v1253, 0.0
        %v1270 = vmax.f32 %v1254, 0.0
        %v1271 = vmax.f32 %v1255, 0.0
        %v1272 = vmax.f32 %v1256, 0.0
        %v1273 = vmax.f32 %v1257, 0.0
        %v1274 = vmax.f32 %v1258, 0.0
        %v1275 = vmax.f32 %v1259, 0.0
        %v1276 = vpack.c.bf16 %v1261, %v1260
        %v1277 = vpack.c.bf16 %v1263, %v1262
        %v1278 = vpack.c.bf16 %v1265, %v1264
        %v1279 = vpack.c.bf16 %v1267, %v1266
        %v1280 = vpack.c.bf16 %v1269, %v1268
        %v1281 = vpack.c.bf16 %v1271, %v1270
        %v1282 = vpack.c.bf16 %v1273, %v1272
        %v1283 = vpack.c.bf16 %v1275, %v1274
        %1284 = vmatpush.bf16.msra.mxu0 %v1283
        %1285 = vmatpush.bf16.msra.mxu0 %v1282
        %1286 = vmatpush.bf16.msra.mxu0 %v1281
        %1287 = vmatpush.bf16.msra.mxu0 %v1280
        %1288 = vmatpush.bf16.msra.mxu0 %v1279
        %1289 = vmatpush.bf16.msra.mxu0 %v1278
        %1290 = vmatpush.bf16.msra.mxu0 %v1277
        %1291 = vmatpush.bf16.msra.mxu0 %v1276
        %1292 = vmatmul.bf16.gmra.mxu0 %v657
        %v1293 = vpop.f32.mrf.mxu0
        %v1294 = vadd.f32 0.0, %v1293
        %v1295 = vpop.f32.mrf.mxu0
        %v1296 = vadd.f32 0.0, %v1295
        %1297 = vmatmul.bf16.gmra.mxu0 %v658
        %v1298 = vpop.f32.mrf.mxu0
        %v1299 = vadd.f32 0.0, %v1298
        %v1300 = vpop.f32.mrf.mxu0
        %v1301 = vadd.f32 0.0, %v1300
        %1302 = vmatmul.bf16.gmra.mxu0 %v659
        %v1303 = vpop.f32.mrf.mxu0
        %v1304 = vadd.f32 0.0, %v1303
        %v1305 = vpop.f32.mrf.mxu0
        %v1306 = vadd.f32 0.0, %v1305
        %1307 = vmatmul.bf16.gmra.mxu0 %v660
        %v1308 = vpop.f32.mrf.mxu0
        %v1309 = vadd.f32 0.0, %v1308
        %v1310 = vpop.f32.mrf.mxu0
        %v1311 = vadd.f32 0.0, %v1310
        %1312 = vdwg.mxu0
        %1313 = vmatpush.bf16.msra.mxu0 %v1283
        %1314 = vmatpush.bf16.msra.mxu0 %v1282
        %1315 = vmatpush.bf16.msra.mxu0 %v1281
        %1316 = vmatpush.bf16.msra.mxu0 %v1280
        %1317 = vmatpush.bf16.msra.mxu0 %v1279
        %1318 = vmatpush.bf16.msra.mxu0 %v1278
        %1319 = vmatpush.bf16.msra.mxu0 %v1277
        %1320 = vmatpush.bf16.msra.mxu0 %v1276
        %1321 = vmatmul.bf16.gmra.mxu0 %v693
        %v1322 = vpop.f32.mrf.mxu0
        %v1323 = vadd.f32 0.0, %v1322
        %v1324 = vpop.f32.mrf.mxu0
        %v1325 = vadd.f32 0.0, %v1324
        %1326 = vmatmul.bf16.gmra.mxu0 %v694
        %v1327 = vpop.f32.mrf.mxu0
        %v1328 = vadd.f32 0.0, %v1327
        %v1329 = vpop.f32.mrf.mxu0
        %v1330 = vadd.f32 0.0, %v1329
        %1331 = vmatmul.bf16.gmra.mxu0 %v695
        %v1332 = vpop.f32.mrf.mxu0
        %v1333 = vadd.f32 0.0, %v1332
        %v1334 = vpop.f32.mrf.mxu0
        %v1335 = vadd.f32 0.0, %v1334
        %1336 = vmatmul.bf16.gmra.mxu0 %v696
        %v1337 = vpop.f32.mrf.mxu0
        %v1338 = vadd.f32 0.0, %v1337
        %v1339 = vpop.f32.mrf.mxu0
        %v1340 = vadd.f32 0.0, %v1339
        %1341 = vdwg.mxu0
        %v1342 = vmax.f32 %v1294, %v1323
        %v1343 = vmax.f32 %v1296, %v1325
        %v1344 = vmax.f32 %v1299, %v1328
        %v1345 = vmax.f32 %v1301, %v1330
        %v1346 = vmax.f32 %v1304, %v1333
        %v1347 = vmax.f32 %v1306, %v1335
        %v1348 = vmax.f32 %v1309, %v1338
        %v1349 = vmax.f32 %v1311, %v1340
        %1350 = vst [vmem:[#allocation2 + $0x2] sm:$0x1f] %v1342
        %1351 = vst [vmem:[#allocation2 + $0x7] sm:$0x3] 0.0
        %1352 = vst [vmem:[#allocation2 + $0x12] sm:$0x1f] %v1343
        %1353 = vst [vmem:[#allocation2 + $0x17] sm:$0x3] 0.0
        %1354 = vst [vmem:[#allocation2 + $0x22] sm:$0x1f] %v1344
        %1355 = vst [vmem:[#allocation2 + $0x27] sm:$0x3] 0.0
        %1356 = vst [vmem:[#allocation2 + $0x32] sm:$0x1f] %v1345
        %1357 = vst [vmem:[#allocation2 + $0x37] sm:$0x3] 0.0
        %1358 = vst [vmem:[#allocation2 + $0x42] sm:$0x1f] %v1346
        %1359 = vst [vmem:[#allocation2 + $0x47] sm:$0x3] 0.0
        %1360 = vst [vmem:[#allocation2 + $0x52] sm:$0x1f] %v1347
        %1361 = vst [vmem:[#allocation2 + $0x57] sm:$0x3] 0.0
        %1362 = vst [vmem:[#allocation2 + $0x62] sm:$0x1f] %v1348
        %1363 = vst [vmem:[#allocation2 + $0x67] sm:$0x3] 0.0
        %1364 = vst [vmem:[#allocation2 + $0x72] sm:$0x1f] %v1349
        %1365 = vst [vmem:[#allocation2 + $0x77] sm:$0x3] 0.0
        %v1366 = vld [vmem:[#allocation2] sm:$0xff]
        %v1367 = vld [vmem:[#allocation2 + $0x8] sm:$0xff]
        %v1368 = vld [vmem:[#allocation2 + $0x10] sm:$0xff]
        %v1369 = vld [vmem:[#allocation2 + $0x18] sm:$0xff]
        %v1370 = vld [vmem:[#allocation2 + $0x20] sm:$0xff]
        %v1371 = vld [vmem:[#allocation2 + $0x28] sm:$0xff]
        %v1372 = vld [vmem:[#allocation2 + $0x30] sm:$0xff]
        %v1373 = vld [vmem:[#allocation2 + $0x38] sm:$0xff]
        %v1374 = vld [vmem:[#allocation2 + $0x40] sm:$0xff]
        %v1375 = vld [vmem:[#allocation2 + $0x48] sm:$0xff]
        %v1376 = vld [vmem:[#allocation2 + $0x50] sm:$0xff]
        %v1377 = vld [vmem:[#allocation2 + $0x58] sm:$0xff]
        %v1378 = vld [vmem:[#allocation2 + $0x60] sm:$0xff]
        %v1379 = vld [vmem:[#allocation2 + $0x68] sm:$0xff]
        %v1380 = vld [vmem:[#allocation2 + $0x70] sm:$0xff]
        %v1381 = vld [vmem:[#allocation2 + $0x78] sm:$0xff]
        %v1382 = vld [vmem:[#allocation2 + $0x80] sm:$0xff]
        %v1383 = vpack.c.bf16 %v1366, %v1366
        %v1384 = vpack.c.bf16 %v1367, %v1367
        %v1385 = vpack.c.bf16 %v1368, %v1368
        %v1386 = vpack.c.bf16 %v1369, %v1369
        %v1387 = vpack.c.bf16 %v1370, %v1370
        %v1388 = vpack.c.bf16 %v1371, %v1371
        %v1389 = vpack.c.bf16 %v1372, %v1372
        %v1390 = vpack.c.bf16 %v1373, %v1373
        %v1391 = vpack.c.bf16 %v1374, %v1374
        %v1392 = vpack.c.bf16 %v1375, %v1375
        %v1393 = vpack.c.bf16 %v1376, %v1376
        %v1394 = vpack.c.bf16 %v1377, %v1377
        %v1395 = vpack.c.bf16 %v1378, %v1378
        %v1396 = vpack.c.bf16 %v1379, %v1379
        %v1397 = vpack.c.bf16 %v1380, %v1380
        %v1398 = vpack.c.bf16 %v1381, %v1381
        %v1399 = vpack.c.bf16 %v1382, %v1382
        %s1400 = scalar_lea.vmem [#allocation8], 192
        %v1401 = vld [vmem:[%s1400] sm:$0xf]
        %v1402 = vld [vmem:[%s1400 + $0x4] sm:$0xf]
        %v1403 = vld [vmem:[%s1400 + $0x8] sm:$0xf]
        %v1404 = vld [vmem:[%s1400 + $0xc] sm:$0xf]
        %v1405 = vld [vmem:[%s1400 + $0x10] sm:$0xf]
        %v1406 = vld [vmem:[%s1400 + $0x14] sm:$0xf]
        %v1407 = vld [vmem:[%s1400 + $0x18] sm:$0xf]
        %v1408 = vld [vmem:[%s1400 + $0x1c] sm:$0xf]
        %v1409 = vld [vmem:[%s1400 + $0x20] sm:$0xf]
        %v1410 = vld [vmem:[%s1400 + $0x24] sm:$0xf]
        %v1411 = vld [vmem:[%s1400 + $0x28] sm:$0xf]
        %v1412 = vld [vmem:[%s1400 + $0x2c] sm:$0xf]
        %v1413 = vld [vmem:[%s1400 + $0x30] sm:$0xf]
        %v1414 = vld [vmem:[%s1400 + $0x34] sm:$0xf]
        %v1415 = vld [vmem:[%s1400 + $0x38] sm:$0xf]
        %v1416 = vld [vmem:[%s1400 + $0x3c] sm:$0xf]
        %s1417 = scalar_lea.vmem [#allocation8], 256
        %v1418 = vld [vmem:[%s1417] sm:$0xf]
        %v1419 = vld [vmem:[%s1417 + $0x4] sm:$0xf]
        %v1420 = vld [vmem:[%s1417 + $0x8] sm:$0xf]
        %v1421 = vld [vmem:[%s1417 + $0xc] sm:$0xf]
        %v1422 = vld [vmem:[%s1417 + $0x10] sm:$0xf]
        %v1423 = vld [vmem:[%s1417 + $0x14] sm:$0xf]
        %v1424 = vld [vmem:[%s1417 + $0x18] sm:$0xf]
        %v1425 = vld [vmem:[%s1417 + $0x1c] sm:$0xf]
        %v1426 = vld [vmem:[%s1417 + $0x20] sm:$0xf]
        %v1427 = vld [vmem:[%s1417 + $0x24] sm:$0xf]
        %v1428 = vld [vmem:[%s1417 + $0x28] sm:$0xf]
        %v1429 = vld [vmem:[%s1417 + $0x2c] sm:$0xf]
        %v1430 = vld [vmem:[%s1417 + $0x30] sm:$0xf]
        %v1431 = vld [vmem:[%s1417 + $0x34] sm:$0xf]
        %v1432 = vld [vmem:[%s1417 + $0x38] sm:$0xf]
        %v1433 = vld [vmem:[%s1417 + $0x3c] sm:$0xf]
        %v1451 = vunpack.c.l.b16 %v1383
        %v1452 = vunpack.c.l.b16 %v1384
        %v1453 = vunpack.c.l.b16 %v1385
        %v1454 = vunpack.c.l.b16 %v1386
        %v1455 = vunpack.c.l.b16 %v1387
        %v1456 = vunpack.c.l.b16 %v1388
        %v1457 = vunpack.c.l.b16 %v1389
        %v1458 = vunpack.c.l.b16 %v1390
        %v1459 = vunpack.c.l.b16 %v1391
        %v1460 = vunpack.c.l.b16 %v1392
        %v1461 = vunpack.c.l.b16 %v1393
        %v1462 = vunpack.c.l.b16 %v1394
        %v1463 = vunpack.c.l.b16 %v1395
        %v1464 = vunpack.c.l.b16 %v1396
        %v1465 = vunpack.c.l.b16 %v1397
        %v1466 = vunpack.c.l.b16 %v1398
        %v1467 = vunpack.c.l.b16 %v1399
        %v1468 = vpack.c.b16 %v1452, %v1451
        %v1469 = vpack.c.b16 %v1454, %v1453
        %v1470 = vpack.c.b16 %v1456, %v1455
        %v1471 = vpack.c.b16 %v1458, %v1457
        %v1472 = vpack.c.b16 %v1460, %v1459
        %v1473 = vpack.c.b16 %v1462, %v1461
        %v1474 = vpack.c.b16 %v1464, %v1463
        %v1475 = vpack.c.b16 %v1466, %v1465
        %v1476 = vpack.c.b16 %v1467, %v1467
        %v1478 = vshrl.u32 %v1468, 16
        %v1480 = vshll.u32 %v1468, 16
        %v1482 = vrot.slane %v1480, 1
        %v1483 = vor.u32 %v1478, %v1482
        %v1485 = vshll.u32 %v1469, 16
        %v1487 = vrot.slane %v1485, 1
        %v1488 = vsel %vm807, %v1483, %v1487
        %v1489 = vshrl.u32 %v1469, 16
        %v1491 = vor.u32 %v1489, %v1487
        %v1493 = vshll.u32 %v1470, 16
        %v1495 = vrot.slane %v1493, 1
        %v1496 = vsel %vm807, %v1491, %v1495
        %v1497 = vshrl.u32 %v1470, 16
        %v1499 = vor.u32 %v1497, %v1495
        %v1501 = vshll.u32 %v1471, 16
        %v1503 = vrot.slane %v1501, 1
        %v1504 = vsel %vm807, %v1499, %v1503
        %v1505 = vshrl.u32 %v1471, 16
        %v1507 = vor.u32 %v1505, %v1503
        %v1509 = vshll.u32 %v1472, 16
        %v1511 = vrot.slane %v1509, 1
        %v1512 = vsel %vm807, %v1507, %v1511
        %v1513 = vshrl.u32 %v1472, 16
        %v1515 = vor.u32 %v1513, %v1511
        %v1517 = vshll.u32 %v1473, 16
        %v1519 = vrot.slane %v1517, 1
        %v1520 = vsel %vm807, %v1515, %v1519
        %v1521 = vshrl.u32 %v1473, 16
        %v1523 = vor.u32 %v1521, %v1519
        %v1525 = vshll.u32 %v1474, 16
        %v1527 = vrot.slane %v1525, 1
        %v1528 = vsel %vm807, %v1523, %v1527
        %v1529 = vshrl.u32 %v1474, 16
        %v1531 = vor.u32 %v1529, %v1527
        %v1533 = vshll.u32 %v1475, 16
        %v1535 = vrot.slane %v1533, 1
        %v1536 = vsel %vm807, %v1531, %v1535
        %v1537 = vshrl.u32 %v1475, 16
        %v1539 = vor.u32 %v1537, %v1535
        %v1541 = vshll.u32 %v1476, 16
        %v1543 = vrot.slane %v1541, 1
        %v1544 = vsel %vm807, %v1539, %v1543
        %v1569 = vunpack.c.l.b16 %v1418
        %v1570 = vunpack.c.l.b16 %v1419
        %v1571 = vunpack.c.l.b16 %v1420
        %v1572 = vunpack.c.l.b16 %v1421
        %v1573 = vunpack.c.l.b16 %v1422
        %v1574 = vunpack.c.l.b16 %v1423
        %v1575 = vunpack.c.l.b16 %v1424
        %v1576 = vunpack.c.l.b16 %v1425
        %v1577 = vunpack.c.l.b16 %v1426
        %v1578 = vunpack.c.l.b16 %v1427
        %v1579 = vunpack.c.l.b16 %v1428
        %v1580 = vunpack.c.l.b16 %v1429
        %v1581 = vunpack.c.l.b16 %v1430
        %v1582 = vunpack.c.l.b16 %v1431
        %v1583 = vunpack.c.l.b16 %v1432
        %v1584 = vunpack.c.l.b16 %v1433
        %v1585 = vpack.c.b16 %v1570, %v1569
        %v1586 = vpack.c.b16 %v1572, %v1571
        %v1587 = vpack.c.b16 %v1574, %v1573
        %v1588 = vpack.c.b16 %v1576, %v1575
        %v1589 = vpack.c.b16 %v1578, %v1577
        %v1590 = vpack.c.b16 %v1580, %v1579
        %v1591 = vpack.c.b16 %v1582, %v1581
        %v1592 = vpack.c.b16 %v1584, %v1583
        %1601 = vmatpush.bf16.msra.mxu0 %v1592
        %1602 = vmatpush.bf16.msra.mxu0 %v1591
        %1603 = vmatpush.bf16.msra.mxu0 %v1590
        %1604 = vmatpush.bf16.msra.mxu0 %v1589
        %1605 = vmatpush.bf16.msra.mxu0 %v1588
        %1606 = vmatpush.bf16.msra.mxu0 %v1587
        %1607 = vmatpush.bf16.msra.mxu0 %v1586
        %1608 = vmatpush.bf16.msra.mxu0 %v1585
        %1609 = vmatmul.bf16.gmra.mxu0 %v1488
        %v1610 = vpop.f32.mrf.mxu0
        %v1611 = vadd.f32 0.0, %v1610
        %v1612 = vpop.f32.mrf.mxu0
        %v1613 = vadd.f32 0.0, %v1612
        %1614 = vmatmul.bf16.gmra.mxu0 %v1496
        %v1615 = vpop.f32.mrf.mxu0
        %v1616 = vadd.f32 0.0, %v1615
        %v1617 = vpop.f32.mrf.mxu0
        %v1618 = vadd.f32 0.0, %v1617
        %1619 = vmatmul.bf16.gmra.mxu0 %v1504
        %v1620 = vpop.f32.mrf.mxu0
        %v1621 = vadd.f32 0.0, %v1620
        %v1622 = vpop.f32.mrf.mxu0
        %v1623 = vadd.f32 0.0, %v1622
        %1624 = vmatmul.bf16.gmra.mxu0 %v1512
        %v1625 = vpop.f32.mrf.mxu0
        %v1626 = vadd.f32 0.0, %v1625
        %v1627 = vpop.f32.mrf.mxu0
        %v1628 = vadd.f32 0.0, %v1627
        %1629 = vmatmul.bf16.gmra.mxu0 %v1520
        %v1630 = vpop.f32.mrf.mxu0
        %v1631 = vadd.f32 0.0, %v1630
        %v1632 = vpop.f32.mrf.mxu0
        %v1633 = vadd.f32 0.0, %v1632
        %1634 = vmatmul.bf16.gmra.mxu0 %v1528
        %v1635 = vpop.f32.mrf.mxu0
        %v1636 = vadd.f32 0.0, %v1635
        %v1637 = vpop.f32.mrf.mxu0
        %v1638 = vadd.f32 0.0, %v1637
        %1639 = vmatmul.bf16.gmra.mxu0 %v1536
        %v1640 = vpop.f32.mrf.mxu0
        %v1641 = vadd.f32 0.0, %v1640
        %v1642 = vpop.f32.mrf.mxu0
        %v1643 = vadd.f32 0.0, %v1642
        %1644 = vmatmul.bf16.gmra.mxu0 %v1544
        %v1645 = vpop.f32.mrf.mxu0
        %v1646 = vadd.f32 0.0, %v1645
        %v1647 = vpop.f32.mrf.mxu0
        %v1648 = vadd.f32 0.0, %v1647
        %1649 = vdwg.mxu0
        %v1674 = vunpack.c.l.b16 %v1401
        %v1675 = vunpack.c.l.b16 %v1402
        %v1676 = vunpack.c.l.b16 %v1403
        %v1677 = vunpack.c.l.b16 %v1404
        %v1678 = vunpack.c.l.b16 %v1405
        %v1679 = vunpack.c.l.b16 %v1406
        %v1680 = vunpack.c.l.b16 %v1407
        %v1681 = vunpack.c.l.b16 %v1408
        %v1682 = vunpack.c.l.b16 %v1409
        %v1683 = vunpack.c.l.b16 %v1410
        %v1684 = vunpack.c.l.b16 %v1411
        %v1685 = vunpack.c.l.b16 %v1412
        %v1686 = vunpack.c.l.b16 %v1413
        %v1687 = vunpack.c.l.b16 %v1414
        %v1688 = vunpack.c.l.b16 %v1415
        %v1689 = vunpack.c.l.b16 %v1416
        %v1690 = vpack.c.b16 %v1675, %v1674
        %v1691 = vpack.c.b16 %v1677, %v1676
        %v1692 = vpack.c.b16 %v1679, %v1678
        %v1693 = vpack.c.b16 %v1681, %v1680
        %v1694 = vpack.c.b16 %v1683, %v1682
        %v1695 = vpack.c.b16 %v1685, %v1684
        %v1696 = vpack.c.b16 %v1687, %v1686
        %v1697 = vpack.c.b16 %v1689, %v1688
        %1706 = vmatpush.bf16.msra.mxu0 %v1697
        %1707 = vmatpush.bf16.msra.mxu0 %v1696
        %1708 = vmatpush.bf16.msra.mxu0 %v1695
        %1709 = vmatpush.bf16.msra.mxu0 %v1694
        %1710 = vmatpush.bf16.msra.mxu0 %v1693
        %1711 = vmatpush.bf16.msra.mxu0 %v1692
        %1712 = vmatpush.bf16.msra.mxu0 %v1691
        %1713 = vmatpush.bf16.msra.mxu0 %v1690
        %1714 = vmatmul.bf16.gmra.mxu0 %v1468
        %v1715 = vpop.f32.mrf.mxu0
        %v1716 = vadd.f32 %v1611, %v1715
        %v1717 = vpop.f32.mrf.mxu0
        %v1718 = vadd.f32 %v1613, %v1717
        %1719 = vmatmul.bf16.gmra.mxu0 %v1469
        %v1720 = vpop.f32.mrf.mxu0
        %v1721 = vadd.f32 %v1616, %v1720
        %v1722 = vpop.f32.mrf.mxu0
        %v1723 = vadd.f32 %v1618, %v1722
        %1724 = vmatmul.bf16.gmra.mxu0 %v1470
        %v1725 = vpop.f32.mrf.mxu0
        %v1726 = vadd.f32 %v1621, %v1725
        %v1727 = vpop.f32.mrf.mxu0
        %v1728 = vadd.f32 %v1623, %v1727
        %1729 = vmatmul.bf16.gmra.mxu0 %v1471
        %v1730 = vpop.f32.mrf.mxu0
        %v1731 = vadd.f32 %v1626, %v1730
        %v1732 = vpop.f32.mrf.mxu0
        %v1733 = vadd.f32 %v1628, %v1732
        %1734 = vmatmul.bf16.gmra.mxu0 %v1472
        %v1735 = vpop.f32.mrf.mxu0
        %v1736 = vadd.f32 %v1631, %v1735
        %v1737 = vpop.f32.mrf.mxu0
        %v1738 = vadd.f32 %v1633, %v1737
        %1739 = vmatmul.bf16.gmra.mxu0 %v1473
        %v1740 = vpop.f32.mrf.mxu0
        %v1741 = vadd.f32 %v1636, %v1740
        %v1742 = vpop.f32.mrf.mxu0
        %v1743 = vadd.f32 %v1638, %v1742
        %1744 = vmatmul.bf16.gmra.mxu0 %v1474
        %v1745 = vpop.f32.mrf.mxu0
        %v1746 = vadd.f32 %v1641, %v1745
        %v1747 = vpop.f32.mrf.mxu0
        %v1748 = vadd.f32 %v1643, %v1747
        %1749 = vmatmul.bf16.gmra.mxu0 %v1475
        %v1750 = vpop.f32.mrf.mxu0
        %v1751 = vadd.f32 %v1646, %v1750
        %v1752 = vpop.f32.mrf.mxu0
        %v1753 = vadd.f32 %v1648, %v1752
        %1754 = vdwg.mxu0
        %s1755 = scalar_lea.vmem [#allocation8], 320
        %v1756 = vld [vmem:[%s1755] sm:$0xf]
        %v1757 = vld [vmem:[%s1755 + $0x4] sm:$0xf]
        %v1758 = vld [vmem:[%s1755 + $0x8] sm:$0xf]
        %v1759 = vld [vmem:[%s1755 + $0xc] sm:$0xf]
        %v1760 = vld [vmem:[%s1755 + $0x10] sm:$0xf]
        %v1761 = vld [vmem:[%s1755 + $0x14] sm:$0xf]
        %v1762 = vld [vmem:[%s1755 + $0x18] sm:$0xf]
        %v1763 = vld [vmem:[%s1755 + $0x1c] sm:$0xf]
        %v1764 = vld [vmem:[%s1755 + $0x20] sm:$0xf]
        %v1765 = vld [vmem:[%s1755 + $0x24] sm:$0xf]
        %v1766 = vld [vmem:[%s1755 + $0x28] sm:$0xf]
        %v1767 = vld [vmem:[%s1755 + $0x2c] sm:$0xf]
        %v1768 = vld [vmem:[%s1755 + $0x30] sm:$0xf]
        %v1769 = vld [vmem:[%s1755 + $0x34] sm:$0xf]
        %v1770 = vld [vmem:[%s1755 + $0x38] sm:$0xf]
        %v1771 = vld [vmem:[%s1755 + $0x3c] sm:$0xf]
        %v1772 = vrot.slane %v1468, 1
        %v1773 = vrot.slane %v1469, 1
        %v1774 = vsel %vm1103, %v1772, %v1773
        %v1775 = vrot.slane %v1470, 1
        %v1776 = vsel %vm1103, %v1773, %v1775
        %v1777 = vrot.slane %v1471, 1
        %v1778 = vsel %vm1103, %v1775, %v1777
        %v1779 = vrot.slane %v1472, 1
        %v1780 = vsel %vm1103, %v1777, %v1779
        %v1781 = vrot.slane %v1473, 1
        %v1782 = vsel %vm1103, %v1779, %v1781
        %v1783 = vrot.slane %v1474, 1
        %v1784 = vsel %vm1103, %v1781, %v1783
        %v1785 = vrot.slane %v1475, 1
        %v1786 = vsel %vm1103, %v1783, %v1785
        %v1787 = vrot.slane %v1476, 1
        %v1788 = vsel %vm1103, %v1785, %v1787
        %v1813 = vunpack.c.l.b16 %v1756
        %v1814 = vunpack.c.l.b16 %v1757
        %v1815 = vunpack.c.l.b16 %v1758
        %v1816 = vunpack.c.l.b16 %v1759
        %v1817 = vunpack.c.l.b16 %v1760
        %v1818 = vunpack.c.l.b16 %v1761
        %v1819 = vunpack.c.l.b16 %v1762
        %v1820 = vunpack.c.l.b16 %v1763
        %v1821 = vunpack.c.l.b16 %v1764
        %v1822 = vunpack.c.l.b16 %v1765
        %v1823 = vunpack.c.l.b16 %v1766
        %v1824 = vunpack.c.l.b16 %v1767
        %v1825 = vunpack.c.l.b16 %v1768
        %v1826 = vunpack.c.l.b16 %v1769
        %v1827 = vunpack.c.l.b16 %v1770
        %v1828 = vunpack.c.l.b16 %v1771
        %v1829 = vpack.c.b16 %v1814, %v1813
        %v1830 = vpack.c.b16 %v1816, %v1815
        %v1831 = vpack.c.b16 %v1818, %v1817
        %v1832 = vpack.c.b16 %v1820, %v1819
        %v1833 = vpack.c.b16 %v1822, %v1821
        %v1834 = vpack.c.b16 %v1824, %v1823
        %v1835 = vpack.c.b16 %v1826, %v1825
        %v1836 = vpack.c.b16 %v1828, %v1827
        %1845 = vmatpush.bf16.msra.mxu0 %v1836
        %1846 = vmatpush.bf16.msra.mxu0 %v1835
        %1847 = vmatpush.bf16.msra.mxu0 %v1834
        %1848 = vmatpush.bf16.msra.mxu0 %v1833
        %1849 = vmatpush.bf16.msra.mxu0 %v1832
        %1850 = vmatpush.bf16.msra.mxu0 %v1831
        %1851 = vmatpush.bf16.msra.mxu0 %v1830
        %1852 = vmatpush.bf16.msra.mxu0 %v1829
        %1853 = vmatmul.bf16.gmra.mxu0 %v1774
        %v1854 = vpop.f32.mrf.mxu0
        %v1855 = vadd.f32 0.0, %v1854
        %v1856 = vpop.f32.mrf.mxu0
        %v1857 = vadd.f32 0.0, %v1856
        %1858 = vmatmul.bf16.gmra.mxu0 %v1776
        %v1859 = vpop.f32.mrf.mxu0
        %v1860 = vadd.f32 0.0, %v1859
        %v1861 = vpop.f32.mrf.mxu0
        %v1862 = vadd.f32 0.0, %v1861
        %1863 = vmatmul.bf16.gmra.mxu0 %v1778
        %v1864 = vpop.f32.mrf.mxu0
        %v1865 = vadd.f32 0.0, %v1864
        %v1866 = vpop.f32.mrf.mxu0
        %v1867 = vadd.f32 0.0, %v1866
        %1868 = vmatmul.bf16.gmra.mxu0 %v1780
        %v1869 = vpop.f32.mrf.mxu0
        %v1870 = vadd.f32 0.0, %v1869
        %v1871 = vpop.f32.mrf.mxu0
        %v1872 = vadd.f32 0.0, %v1871
        %1873 = vmatmul.bf16.gmra.mxu0 %v1782
        %v1874 = vpop.f32.mrf.mxu0
        %v1875 = vadd.f32 0.0, %v1874
        %v1876 = vpop.f32.mrf.mxu0
        %v1877 = vadd.f32 0.0, %v1876
        %1878 = vmatmul.bf16.gmra.mxu0 %v1784
        %v1879 = vpop.f32.mrf.mxu0
        %v1880 = vadd.f32 0.0, %v1879
        %v1881 = vpop.f32.mrf.mxu0
        %v1882 = vadd.f32 0.0, %v1881
        %1883 = vmatmul.bf16.gmra.mxu0 %v1786
        %v1884 = vpop.f32.mrf.mxu0
        %v1885 = vadd.f32 0.0, %v1884
        %v1886 = vpop.f32.mrf.mxu0
        %v1887 = vadd.f32 0.0, %v1886
        %1888 = vmatmul.bf16.gmra.mxu0 %v1788
        %v1889 = vpop.f32.mrf.mxu0
        %v1890 = vadd.f32 0.0, %v1889
        %v1891 = vpop.f32.mrf.mxu0
        %v1892 = vadd.f32 0.0, %v1891
        %1893 = vdwg.mxu0
        %v1894 = vadd.f32 %v1716, %v1855
        %v1895 = vadd.f32 %v1718, %v1857
        %v1896 = vadd.f32 %v1721, %v1860
        %v1897 = vadd.f32 %v1723, %v1862
        %v1898 = vadd.f32 %v1726, %v1865
        %v1899 = vadd.f32 %v1728, %v1867
        %v1900 = vadd.f32 %v1731, %v1870
        %v1901 = vadd.f32 %v1733, %v1872
        %v1902 = vadd.f32 %v1736, %v1875
        %v1903 = vadd.f32 %v1738, %v1877
        %v1904 = vadd.f32 %v1741, %v1880
        %v1905 = vadd.f32 %v1743, %v1882
        %v1906 = vadd.f32 %v1746, %v1885
        %v1907 = vadd.f32 %v1748, %v1887
        %v1908 = vadd.f32 %v1751, %v1890
        %v1909 = vadd.f32 %v1753, %v1892
        %v1910 = vld [vmem:[#allocation10 + $0x1] sm:$0x1]
        %v1911 = vperm.slane %v1910, 0
        %v1912 = vadd.f32 %v1894, %v1911
        %v1913 = vadd.f32 %v1895, %v1911
        %v1914 = vadd.f32 %v1896, %v1911
        %v1915 = vadd.f32 %v1897, %v1911
        %v1916 = vadd.f32 %v1898, %v1911
        %v1917 = vadd.f32 %v1899, %v1911
        %v1918 = vadd.f32 %v1900, %v1911
        %v1919 = vadd.f32 %v1901, %v1911
        %v1920 = vadd.f32 %v1902, %v1911
        %v1921 = vadd.f32 %v1903, %v1911
        %v1922 = vadd.f32 %v1904, %v1911
        %v1923 = vadd.f32 %v1905, %v1911
        %v1924 = vadd.f32 %v1906, %v1911
        %v1925 = vadd.f32 %v1907, %v1911
        %v1926 = vadd.f32 %v1908, %v1911
        %v1927 = vadd.f32 %v1909, %v1911
        %v1928 = vmax.f32 %v1912, 0.0
        %v1929 = vmax.f32 %v1913, 0.0
        %v1930 = vmax.f32 %v1914, 0.0
        %v1931 = vmax.f32 %v1915, 0.0
        %v1932 = vmax.f32 %v1916, 0.0
        %v1933 = vmax.f32 %v1917, 0.0
        %v1934 = vmax.f32 %v1918, 0.0
        %v1935 = vmax.f32 %v1919, 0.0
        %v1936 = vmax.f32 %v1920, 0.0
        %v1937 = vmax.f32 %v1921, 0.0
        %v1938 = vmax.f32 %v1922, 0.0
        %v1939 = vmax.f32 %v1923, 0.0
        %v1940 = vmax.f32 %v1924, 0.0
        %v1941 = vmax.f32 %v1925, 0.0
        %v1942 = vmax.f32 %v1926, 0.0
        %v1943 = vmax.f32 %v1927, 0.0
        %v1944 = vpack.c.bf16 %v1929, %v1928
        %v1945 = vpack.c.bf16 %v1931, %v1930
        %v1946 = vpack.c.bf16 %v1933, %v1932
        %v1947 = vpack.c.bf16 %v1935, %v1934
        %v1948 = vpack.c.bf16 %v1937, %v1936
        %v1949 = vpack.c.bf16 %v1939, %v1938
        %v1950 = vpack.c.bf16 %v1941, %v1940
        %v1951 = vpack.c.bf16 %v1943, %v1942
        %1952 = vmatpush.bf16.msra.mxu0 %v1951
        %1953 = vmatpush.bf16.msra.mxu0 %v1950
        %1954 = vmatpush.bf16.msra.mxu0 %v1949
        %1955 = vmatpush.bf16.msra.mxu0 %v1948
        %1956 = vmatpush.bf16.msra.mxu0 %v1947
        %1957 = vmatpush.bf16.msra.mxu0 %v1946
        %1958 = vmatpush.bf16.msra.mxu0 %v1945
        %1959 = vmatpush.bf16.msra.mxu0 %v1944
        %1960 = vmatmul.bf16.gmra.mxu0 %v657
        %v1961 = vpop.f32.mrf.mxu0
        %v1962 = vadd.f32 0.0, %v1961
        %v1963 = vpop.f32.mrf.mxu0
        %v1964 = vadd.f32 0.0, %v1963
        %1965 = vmatmul.bf16.gmra.mxu0 %v658
        %v1966 = vpop.f32.mrf.mxu0
        %v1967 = vadd.f32 0.0, %v1966
        %v1968 = vpop.f32.mrf.mxu0
        %v1969 = vadd.f32 0.0, %v1968
        %1970 = vmatmul.bf16.gmra.mxu0 %v659
        %v1971 = vpop.f32.mrf.mxu0
        %v1972 = vadd.f32 0.0, %v1971
        %v1973 = vpop.f32.mrf.mxu0
        %v1974 = vadd.f32 0.0, %v1973
        %1975 = vmatmul.bf16.gmra.mxu0 %v660
        %v1976 = vpop.f32.mrf.mxu0
        %v1977 = vadd.f32 0.0, %v1976
        %v1978 = vpop.f32.mrf.mxu0
        %v1979 = vadd.f32 0.0, %v1978
        %1980 = vdwg.mxu0
        %1981 = vmatpush.bf16.msra.mxu0 %v1951
        %1982 = vmatpush.bf16.msra.mxu0 %v1950
        %1983 = vmatpush.bf16.msra.mxu0 %v1949
        %1984 = vmatpush.bf16.msra.mxu0 %v1948
        %1985 = vmatpush.bf16.msra.mxu0 %v1947
        %1986 = vmatpush.bf16.msra.mxu0 %v1946
        %1987 = vmatpush.bf16.msra.mxu0 %v1945
        %1988 = vmatpush.bf16.msra.mxu0 %v1944
        %1989 = vmatmul.bf16.gmra.mxu0 %v693
        %v1990 = vpop.f32.mrf.mxu0
        %v1991 = vadd.f32 0.0, %v1990
        %v1992 = vpop.f32.mrf.mxu0
        %v1993 = vadd.f32 0.0, %v1992
        %1994 = vmatmul.bf16.gmra.mxu0 %v694
        %v1995 = vpop.f32.mrf.mxu0
        %v1996 = vadd.f32 0.0, %v1995
        %v1997 = vpop.f32.mrf.mxu0
        %v1998 = vadd.f32 0.0, %v1997
        %1999 = vmatmul.bf16.gmra.mxu0 %v695
        %v2000 = vpop.f32.mrf.mxu0
        %v2001 = vadd.f32 0.0, %v2000
        %v2002 = vpop.f32.mrf.mxu0
        %v2003 = vadd.f32 0.0, %v2002
        %2004 = vmatmul.bf16.gmra.mxu0 %v696
        %v2005 = vpop.f32.mrf.mxu0
        %v2006 = vadd.f32 0.0, %v2005
        %v2007 = vpop.f32.mrf.mxu0
        %v2008 = vadd.f32 0.0, %v2007
        %2009 = vdwg.mxu0
        %v2010 = vmax.f32 %v1962, %v1991
        %v2011 = vmax.f32 %v1964, %v1993
        %v2012 = vmax.f32 %v1967, %v1996
        %v2013 = vmax.f32 %v1969, %v1998
        %v2014 = vmax.f32 %v1972, %v2001
        %v2015 = vmax.f32 %v1974, %v2003
        %v2016 = vmax.f32 %v1977, %v2006
        %v2017 = vmax.f32 %v1979, %v2008
        %2018 = vst [vmem:[#allocation2 + $0x2] sm:$0x7] %v2010
        %2019 = vst [vmem:[#allocation2 + $0x5] sm:$0x3] 0.0
        %2020 = vst [vmem:[#allocation2 + $0x12] sm:$0x7] %v2011
        %2021 = vst [vmem:[#allocation2 + $0x15] sm:$0x3] 0.0
        %2022 = vst [vmem:[#allocation2 + $0x22] sm:$0x7] %v2012
        %2023 = vst [vmem:[#allocation2 + $0x25] sm:$0x3] 0.0
        %2024 = vst [vmem:[#allocation2 + $0x32] sm:$0x7] %v2013
        %2025 = vst [vmem:[#allocation2 + $0x35] sm:$0x3] 0.0
        %2026 = vst [vmem:[#allocation2 + $0x42] sm:$0x7] %v2014
        %2027 = vst [vmem:[#allocation2 + $0x45] sm:$0x3] 0.0
        %2028 = vst [vmem:[#allocation2 + $0x52] sm:$0x7] %v2015
        %2029 = vst [vmem:[#allocation2 + $0x55] sm:$0x3] 0.0
        %2030 = vst [vmem:[#allocation2 + $0x62] sm:$0x7] %v2016
        %2031 = vst [vmem:[#allocation2 + $0x65] sm:$0x3] 0.0
        %2032 = vst [vmem:[#allocation2 + $0x72] sm:$0x7] %v2017
        %2033 = vst [vmem:[#allocation2 + $0x75] sm:$0x3] 0.0
        %v2034 = vld [vmem:[#allocation2] sm:$0xff]
        %v2035 = vld [vmem:[#allocation2 + $0x8] sm:$0xff]
        %v2036 = vld [vmem:[#allocation2 + $0x10] sm:$0xff]
        %v2037 = vld [vmem:[#allocation2 + $0x18] sm:$0xff]
        %v2038 = vld [vmem:[#allocation2 + $0x20] sm:$0xff]
        %v2039 = vld [vmem:[#allocation2 + $0x28] sm:$0xff]
        %v2040 = vld [vmem:[#allocation2 + $0x30] sm:$0xff]
        %v2041 = vld [vmem:[#allocation2 + $0x38] sm:$0xff]
        %v2042 = vld [vmem:[#allocation2 + $0x40] sm:$0xff]
        %v2043 = vld [vmem:[#allocation2 + $0x48] sm:$0xff]
        %v2044 = vld [vmem:[#allocation2 + $0x50] sm:$0xff]
        %v2045 = vld [vmem:[#allocation2 + $0x58] sm:$0xff]
        %v2046 = vld [vmem:[#allocation2 + $0x60] sm:$0xff]
        %v2047 = vld [vmem:[#allocation2 + $0x68] sm:$0xff]
        %v2048 = vld [vmem:[#allocation2 + $0x70] sm:$0xff]
        %v2049 = vld [vmem:[#allocation2 + $0x78] sm:$0xff]
        %v2050 = vld [vmem:[#allocation2 + $0x80] sm:$0xff]
        %v2051 = vpack.c.bf16 %v2034, %v2034
        %v2052 = vpack.c.bf16 %v2035, %v2035
        %v2053 = vpack.c.bf16 %v2036, %v2036
        %v2054 = vpack.c.bf16 %v2037, %v2037
        %v2055 = vpack.c.bf16 %v2038, %v2038
        %v2056 = vpack.c.bf16 %v2039, %v2039
        %v2057 = vpack.c.bf16 %v2040, %v2040
        %v2058 = vpack.c.bf16 %v2041, %v2041
        %v2059 = vpack.c.bf16 %v2042, %v2042
        %v2060 = vpack.c.bf16 %v2043, %v2043
        %v2061 = vpack.c.bf16 %v2044, %v2044
        %v2062 = vpack.c.bf16 %v2045, %v2045
        %v2063 = vpack.c.bf16 %v2046, %v2046
        %v2064 = vpack.c.bf16 %v2047, %v2047
        %v2065 = vpack.c.bf16 %v2048, %v2048
        %v2066 = vpack.c.bf16 %v2049, %v2049
        %v2067 = vpack.c.bf16 %v2050, %v2050
        %s2068 = scalar_lea.vmem [#allocation8], 384
        %v2069 = vld [vmem:[%s2068] sm:$0xf]
        %v2070 = vld [vmem:[%s2068 + $0x4] sm:$0xf]
        %v2071 = vld [vmem:[%s2068 + $0x8] sm:$0xf]
        %v2072 = vld [vmem:[%s2068 + $0xc] sm:$0xf]
        %v2073 = vld [vmem:[%s2068 + $0x10] sm:$0xf]
        %v2074 = vld [vmem:[%s2068 + $0x14] sm:$0xf]
        %v2075 = vld [vmem:[%s2068 + $0x18] sm:$0xf]
        %v2076 = vld [vmem:[%s2068 + $0x1c] sm:$0xf]
        %v2077 = vld [vmem:[%s2068 + $0x20] sm:$0xf]
        %v2078 = vld [vmem:[%s2068 + $0x24] sm:$0xf]
        %v2079 = vld [vmem:[%s2068 + $0x28] sm:$0xf]
        %v2080 = vld [vmem:[%s2068 + $0x2c] sm:$0xf]
        %v2081 = vld [vmem:[%s2068 + $0x30] sm:$0xf]
        %v2082 = vld [vmem:[%s2068 + $0x34] sm:$0xf]
        %v2083 = vld [vmem:[%s2068 + $0x38] sm:$0xf]
        %v2084 = vld [vmem:[%s2068 + $0x3c] sm:$0xf]
        %s2085 = scalar_lea.vmem [#allocation8], 448
        %v2086 = vld [vmem:[%s2085] sm:$0xf]
        %v2087 = vld [vmem:[%s2085 + $0x4] sm:$0xf]
        %v2088 = vld [vmem:[%s2085 + $0x8] sm:$0xf]
        %v2089 = vld [vmem:[%s2085 + $0xc] sm:$0xf]
        %v2090 = vld [vmem:[%s2085 + $0x10] sm:$0xf]
        %v2091 = vld [vmem:[%s2085 + $0x14] sm:$0xf]
        %v2092 = vld [vmem:[%s2085 + $0x18] sm:$0xf]
        %v2093 = vld [vmem:[%s2085 + $0x1c] sm:$0xf]
        %v2094 = vld [vmem:[%s2085 + $0x20] sm:$0xf]
        %v2095 = vld [vmem:[%s2085 + $0x24] sm:$0xf]
        %v2096 = vld [vmem:[%s2085 + $0x28] sm:$0xf]
        %v2097 = vld [vmem:[%s2085 + $0x2c] sm:$0xf]
        %v2098 = vld [vmem:[%s2085 + $0x30] sm:$0xf]
        %v2099 = vld [vmem:[%s2085 + $0x34] sm:$0xf]
        %v2100 = vld [vmem:[%s2085 + $0x38] sm:$0xf]
        %v2101 = vld [vmem:[%s2085 + $0x3c] sm:$0xf]
        %v2119 = vunpack.c.l.b16 %v2051
        %v2120 = vunpack.c.l.b16 %v2052
        %v2121 = vunpack.c.l.b16 %v2053
        %v2122 = vunpack.c.l.b16 %v2054
        %v2123 = vunpack.c.l.b16 %v2055
        %v2124 = vunpack.c.l.b16 %v2056
        %v2125 = vunpack.c.l.b16 %v2057
        %v2126 = vunpack.c.l.b16 %v2058
        %v2127 = vunpack.c.l.b16 %v2059
        %v2128 = vunpack.c.l.b16 %v2060
        %v2129 = vunpack.c.l.b16 %v2061
        %v2130 = vunpack.c.l.b16 %v2062
        %v2131 = vunpack.c.l.b16 %v2063
        %v2132 = vunpack.c.l.b16 %v2064
        %v2133 = vunpack.c.l.b16 %v2065
        %v2134 = vunpack.c.l.b16 %v2066
        %v2135 = vunpack.c.l.b16 %v2067
        %v2136 = vpack.c.b16 %v2120, %v2119
        %v2137 = vpack.c.b16 %v2122, %v2121
        %v2138 = vpack.c.b16 %v2124, %v2123
        %v2139 = vpack.c.b16 %v2126, %v2125
        %v2140 = vpack.c.b16 %v2128, %v2127
        %v2141 = vpack.c.b16 %v2130, %v2129
        %v2142 = vpack.c.b16 %v2132, %v2131
        %v2143 = vpack.c.b16 %v2134, %v2133
        %v2144 = vpack.c.b16 %v2135, %v2135
        %v2146 = vshrl.u32 %v2136, 16
        %v2148 = vshll.u32 %v2136, 16
        %v2150 = vrot.slane %v2148, 1
        %v2151 = vor.u32 %v2146, %v2150
        %v2153 = vshll.u32 %v2137, 16
        %v2155 = vrot.slane %v2153, 1
        %v2156 = vsel %vm807, %v2151, %v2155
        %v2157 = vshrl.u32 %v2137, 16
        %v2159 = vor.u32 %v2157, %v2155
        %v2161 = vshll.u32 %v2138, 16
        %v2163 = vrot.slane %v2161, 1
        %v2164 = vsel %vm807, %v2159, %v2163
        %v2165 = vshrl.u32 %v2138, 16
        %v2167 = vor.u32 %v2165, %v2163
        %v2169 = vshll.u32 %v2139, 16
        %v2171 = vrot.slane %v2169, 1
        %v2172 = vsel %vm807, %v2167, %v2171
        %v2173 = vshrl.u32 %v2139, 16
        %v2175 = vor.u32 %v2173, %v2171
        %v2177 = vshll.u32 %v2140, 16
        %v2179 = vrot.slane %v2177, 1
        %v2180 = vsel %vm807, %v2175, %v2179
        %v2181 = vshrl.u32 %v2140, 16
        %v2183 = vor.u32 %v2181, %v2179
        %v2185 = vshll.u32 %v2141, 16
        %v2187 = vrot.slane %v2185, 1
        %v2188 = vsel %vm807, %v2183, %v2187
        %v2189 = vshrl.u32 %v2141, 16
        %v2191 = vor.u32 %v2189, %v2187
        %v2193 = vshll.u32 %v2142, 16
        %v2195 = vrot.slane %v2193, 1
        %v2196 = vsel %vm807, %v2191, %v2195
        %v2197 = vshrl.u32 %v2142, 16
        %v2199 = vor.u32 %v2197, %v2195
        %v2201 = vshll.u32 %v2143, 16
        %v2203 = vrot.slane %v2201, 1
        %v2204 = vsel %vm807, %v2199, %v2203
        %v2205 = vshrl.u32 %v2143, 16
        %v2207 = vor.u32 %v2205, %v2203
        %v2209 = vshll.u32 %v2144, 16
        %v2211 = vrot.slane %v2209, 1
        %v2212 = vsel %vm807, %v2207, %v2211
        %v2237 = vunpack.c.l.b16 %v2086
        %v2238 = vunpack.c.l.b16 %v2087
        %v2239 = vunpack.c.l.b16 %v2088
        %v2240 = vunpack.c.l.b16 %v2089
        %v2241 = vunpack.c.l.b16 %v2090
        %v2242 = vunpack.c.l.b16 %v2091
        %v2243 = vunpack.c.l.b16 %v2092
        %v2244 = vunpack.c.l.b16 %v2093
        %v2245 = vunpack.c.l.b16 %v2094
        %v2246 = vunpack.c.l.b16 %v2095
        %v2247 = vunpack.c.l.b16 %v2096
        %v2248 = vunpack.c.l.b16 %v2097
        %v2249 = vunpack.c.l.b16 %v2098
        %v2250 = vunpack.c.l.b16 %v2099
        %v2251 = vunpack.c.l.b16 %v2100
        %v2252 = vunpack.c.l.b16 %v2101
        %v2253 = vpack.c.b16 %v2238, %v2237
        %v2254 = vpack.c.b16 %v2240, %v2239
        %v2255 = vpack.c.b16 %v2242, %v2241
        %v2256 = vpack.c.b16 %v2244, %v2243
        %v2257 = vpack.c.b16 %v2246, %v2245
        %v2258 = vpack.c.b16 %v2248, %v2247
        %v2259 = vpack.c.b16 %v2250, %v2249
        %v2260 = vpack.c.b16 %v2252, %v2251
        %2269 = vmatpush.bf16.msra.mxu0 %v2260
        %2270 = vmatpush.bf16.msra.mxu0 %v2259
        %2271 = vmatpush.bf16.msra.mxu0 %v2258
        %2272 = vmatpush.bf16.msra.mxu0 %v2257
        %2273 = vmatpush.bf16.msra.mxu0 %v2256
        %2274 = vmatpush.bf16.msra.mxu0 %v2255
        %2275 = vmatpush.bf16.msra.mxu0 %v2254
        %2276 = vmatpush.bf16.msra.mxu0 %v2253
        %2277 = vmatmul.bf16.gmra.mxu0 %v2156
        %v2278 = vpop.f32.mrf.mxu0
        %v2279 = vadd.f32 0.0, %v2278
        %v2280 = vpop.f32.mrf.mxu0
        %v2281 = vadd.f32 0.0, %v2280
        %2282 = vmatmul.bf16.gmra.mxu0 %v2164
        %v2283 = vpop.f32.mrf.mxu0
        %v2284 = vadd.f32 0.0, %v2283
        %v2285 = vpop.f32.mrf.mxu0
        %v2286 = vadd.f32 0.0, %v2285
        %2287 = vmatmul.bf16.gmra.mxu0 %v2172
        %v2288 = vpop.f32.mrf.mxu0
        %v2289 = vadd.f32 0.0, %v2288
        %v2290 = vpop.f32.mrf.mxu0
        %v2291 = vadd.f32 0.0, %v2290
        %2292 = vmatmul.bf16.gmra.mxu0 %v2180
        %v2293 = vpop.f32.mrf.mxu0
        %v2294 = vadd.f32 0.0, %v2293
        %v2295 = vpop.f32.mrf.mxu0
        %v2296 = vadd.f32 0.0, %v2295
        %2297 = vmatmul.bf16.gmra.mxu0 %v2188
        %v2298 = vpop.f32.mrf.mxu0
        %v2299 = vadd.f32 0.0, %v2298
        %v2300 = vpop.f32.mrf.mxu0
        %v2301 = vadd.f32 0.0, %v2300
        %2302 = vmatmul.bf16.gmra.mxu0 %v2196
        %v2303 = vpop.f32.mrf.mxu0
        %v2304 = vadd.f32 0.0, %v2303
        %v2305 = vpop.f32.mrf.mxu0
        %v2306 = vadd.f32 0.0, %v2305
        %2307 = vmatmul.bf16.gmra.mxu0 %v2204
        %v2308 = vpop.f32.mrf.mxu0
        %v2309 = vadd.f32 0.0, %v2308
        %v2310 = vpop.f32.mrf.mxu0
        %v2311 = vadd.f32 0.0, %v2310
        %2312 = vmatmul.bf16.gmra.mxu0 %v2212
        %v2313 = vpop.f32.mrf.mxu0
        %v2314 = vadd.f32 0.0, %v2313
        %v2315 = vpop.f32.mrf.mxu0
        %v2316 = vadd.f32 0.0, %v2315
        %2317 = vdwg.mxu0
        %v2342 = vunpack.c.l.b16 %v2069
        %v2343 = vunpack.c.l.b16 %v2070
        %v2344 = vunpack.c.l.b16 %v2071
        %v2345 = vunpack.c.l.b16 %v2072
        %v2346 = vunpack.c.l.b16 %v2073
        %v2347 = vunpack.c.l.b16 %v2074
        %v2348 = vunpack.c.l.b16 %v2075
        %v2349 = vunpack.c.l.b16 %v2076
        %v2350 = vunpack.c.l.b16 %v2077
        %v2351 = vunpack.c.l.b16 %v2078
        %v2352 = vunpack.c.l.b16 %v2079
        %v2353 = vunpack.c.l.b16 %v2080
        %v2354 = vunpack.c.l.b16 %v2081
        %v2355 = vunpack.c.l.b16 %v2082
        %v2356 = vunpack.c.l.b16 %v2083
        %v2357 = vunpack.c.l.b16 %v2084
        %v2358 = vpack.c.b16 %v2343, %v2342
        %v2359 = vpack.c.b16 %v2345, %v2344
        %v2360 = vpack.c.b16 %v2347, %v2346
        %v2361 = vpack.c.b16 %v2349, %v2348
        %v2362 = vpack.c.b16 %v2351, %v2350
        %v2363 = vpack.c.b16 %v2353, %v2352
        %v2364 = vpack.c.b16 %v2355, %v2354
        %v2365 = vpack.c.b16 %v2357, %v2356
        %2374 = vmatpush.bf16.msra.mxu0 %v2365
        %2375 = vmatpush.bf16.msra.mxu0 %v2364
        %2376 = vmatpush.bf16.msra.mxu0 %v2363
        %2377 = vmatpush.bf16.msra.mxu0 %v2362
        %2378 = vmatpush.bf16.msra.mxu0 %v2361
        %2379 = vmatpush.bf16.msra.mxu0 %v2360
        %2380 = vmatpush.bf16.msra.mxu0 %v2359
        %2381 = vmatpush.bf16.msra.mxu0 %v2358
        %2382 = vmatmul.bf16.gmra.mxu0 %v2136
        %v2383 = vpop.f32.mrf.mxu0
        %v2384 = vadd.f32 %v2279, %v2383
        %v2385 = vpop.f32.mrf.mxu0
        %v2386 = vadd.f32 %v2281, %v2385
        %2387 = vmatmul.bf16.gmra.mxu0 %v2137
        %v2388 = vpop.f32.mrf.mxu0
        %v2389 = vadd.f32 %v2284, %v2388
        %v2390 = vpop.f32.mrf.mxu0
        %v2391 = vadd.f32 %v2286, %v2390
        %2392 = vmatmul.bf16.gmra.mxu0 %v2138
        %v2393 = vpop.f32.mrf.mxu0
        %v2394 = vadd.f32 %v2289, %v2393
        %v2395 = vpop.f32.mrf.mxu0
        %v2396 = vadd.f32 %v2291, %v2395
        %2397 = vmatmul.bf16.gmra.mxu0 %v2139
        %v2398 = vpop.f32.mrf.mxu0
        %v2399 = vadd.f32 %v2294, %v2398
        %v2400 = vpop.f32.mrf.mxu0
        %v2401 = vadd.f32 %v2296, %v2400
        %2402 = vmatmul.bf16.gmra.mxu0 %v2140
        %v2403 = vpop.f32.mrf.mxu0
        %v2404 = vadd.f32 %v2299, %v2403
        %v2405 = vpop.f32.mrf.mxu0
        %v2406 = vadd.f32 %v2301, %v2405
        %2407 = vmatmul.bf16.gmra.mxu0 %v2141
        %v2408 = vpop.f32.mrf.mxu0
        %v2409 = vadd.f32 %v2304, %v2408
        %v2410 = vpop.f32.mrf.mxu0
        %v2411 = vadd.f32 %v2306, %v2410
        %2412 = vmatmul.bf16.gmra.mxu0 %v2142
        %v2413 = vpop.f32.mrf.mxu0
        %v2414 = vadd.f32 %v2309, %v2413
        %v2415 = vpop.f32.mrf.mxu0
        %v2416 = vadd.f32 %v2311, %v2415
        %2417 = vmatmul.bf16.gmra.mxu0 %v2143
        %v2418 = vpop.f32.mrf.mxu0
        %v2419 = vadd.f32 %v2314, %v2418
        %v2420 = vpop.f32.mrf.mxu0
        %v2421 = vadd.f32 %v2316, %v2420
        %2422 = vdwg.mxu0
        %s2423 = scalar_lea.vmem [#allocation8], 512
        %v2424 = vld [vmem:[%s2423] sm:$0xf]
        %v2425 = vld [vmem:[%s2423 + $0x4] sm:$0xf]
        %v2426 = vld [vmem:[%s2423 + $0x8] sm:$0xf]
        %v2427 = vld [vmem:[%s2423 + $0xc] sm:$0xf]
        %v2428 = vld [vmem:[%s2423 + $0x10] sm:$0xf]
        %v2429 = vld [vmem:[%s2423 + $0x14] sm:$0xf]
        %v2430 = vld [vmem:[%s2423 + $0x18] sm:$0xf]
        %v2431 = vld [vmem:[%s2423 + $0x1c] sm:$0xf]
        %v2432 = vld [vmem:[%s2423 + $0x20] sm:$0xf]
        %v2433 = vld [vmem:[%s2423 + $0x24] sm:$0xf]
        %v2434 = vld [vmem:[%s2423 + $0x28] sm:$0xf]
        %v2435 = vld [vmem:[%s2423 + $0x2c] sm:$0xf]
        %v2436 = vld [vmem:[%s2423 + $0x30] sm:$0xf]
        %v2437 = vld [vmem:[%s2423 + $0x34] sm:$0xf]
        %v2438 = vld [vmem:[%s2423 + $0x38] sm:$0xf]
        %v2439 = vld [vmem:[%s2423 + $0x3c] sm:$0xf]
        %v2440 = vrot.slane %v2136, 1
        %v2441 = vrot.slane %v2137, 1
        %v2442 = vsel %vm1103, %v2440, %v2441
        %v2443 = vrot.slane %v2138, 1
        %v2444 = vsel %vm1103, %v2441, %v2443
        %v2445 = vrot.slane %v2139, 1
        %v2446 = vsel %vm1103, %v2443, %v2445
        %v2447 = vrot.slane %v2140, 1
        %v2448 = vsel %vm1103, %v2445, %v2447
        %v2449 = vrot.slane %v2141, 1
        %v2450 = vsel %vm1103, %v2447, %v2449
        %v2451 = vrot.slane %v2142, 1
        %v2452 = vsel %vm1103, %v2449, %v2451
        %v2453 = vrot.slane %v2143, 1
        %v2454 = vsel %vm1103, %v2451, %v2453
        %v2455 = vrot.slane %v2144, 1
        %v2456 = vsel %vm1103, %v2453, %v2455
        %v2481 = vunpack.c.l.b16 %v2424
        %v2482 = vunpack.c.l.b16 %v2425
        %v2483 = vunpack.c.l.b16 %v2426
        %v2484 = vunpack.c.l.b16 %v2427
        %v2485 = vunpack.c.l.b16 %v2428
        %v2486 = vunpack.c.l.b16 %v2429
        %v2487 = vunpack.c.l.b16 %v2430
        %v2488 = vunpack.c.l.b16 %v2431
        %v2489 = vunpack.c.l.b16 %v2432
        %v2490 = vunpack.c.l.b16 %v2433
        %v2491 = vunpack.c.l.b16 %v2434
        %v2492 = vunpack.c.l.b16 %v2435
        %v2493 = vunpack.c.l.b16 %v2436
        %v2494 = vunpack.c.l.b16 %v2437
        %v2495 = vunpack.c.l.b16 %v2438
        %v2496 = vunpack.c.l.b16 %v2439
        %v2497 = vpack.c.b16 %v2482, %v2481
        %v2498 = vpack.c.b16 %v2484, %v2483
        %v2499 = vpack.c.b16 %v2486, %v2485
        %v2500 = vpack.c.b16 %v2488, %v2487
        %v2501 = vpack.c.b16 %v2490, %v2489
        %v2502 = vpack.c.b16 %v2492, %v2491
        %v2503 = vpack.c.b16 %v2494, %v2493
        %v2504 = vpack.c.b16 %v2496, %v2495
        %2513 = vmatpush.bf16.msra.mxu0 %v2504
        %2514 = vmatpush.bf16.msra.mxu0 %v2503
        %2515 = vmatpush.bf16.msra.mxu0 %v2502
        %2516 = vmatpush.bf16.msra.mxu0 %v2501
        %2517 = vmatpush.bf16.msra.mxu0 %v2500
        %2518 = vmatpush.bf16.msra.mxu0 %v2499
        %2519 = vmatpush.bf16.msra.mxu0 %v2498
        %2520 = vmatpush.bf16.msra.mxu0 %v2497
        %2521 = vmatmul.bf16.gmra.mxu0 %v2442
        %v2522 = vpop.f32.mrf.mxu0
        %v2523 = vadd.f32 0.0, %v2522
        %v2524 = vpop.f32.mrf.mxu0
        %v2525 = vadd.f32 0.0, %v2524
        %2526 = vmatmul.bf16.gmra.mxu0 %v2444
        %v2527 = vpop.f32.mrf.mxu0
        %v2528 = vadd.f32 0.0, %v2527
        %v2529 = vpop.f32.mrf.mxu0
        %v2530 = vadd.f32 0.0, %v2529
        %2531 = vmatmul.bf16.gmra.mxu0 %v2446
        %v2532 = vpop.f32.mrf.mxu0
        %v2533 = vadd.f32 0.0, %v2532
        %v2534 = vpop.f32.mrf.mxu0
        %v2535 = vadd.f32 0.0, %v2534
        %2536 = vmatmul.bf16.gmra.mxu0 %v2448
        %v2537 = vpop.f32.mrf.mxu0
        %v2538 = vadd.f32 0.0, %v2537
        %v2539 = vpop.f32.mrf.mxu0
        %v2540 = vadd.f32 0.0, %v2539
        %2541 = vmatmul.bf16.gmra.mxu0 %v2450
        %v2542 = vpop.f32.mrf.mxu0
        %v2543 = vadd.f32 0.0, %v2542
        %v2544 = vpop.f32.mrf.mxu0
        %v2545 = vadd.f32 0.0, %v2544
        %2546 = vmatmul.bf16.gmra.mxu0 %v2452
        %v2547 = vpop.f32.mrf.mxu0
        %v2548 = vadd.f32 0.0, %v2547
        %v2549 = vpop.f32.mrf.mxu0
        %v2550 = vadd.f32 0.0, %v2549
        %2551 = vmatmul.bf16.gmra.mxu0 %v2454
        %v2552 = vpop.f32.mrf.mxu0
        %v2553 = vadd.f32 0.0, %v2552
        %v2554 = vpop.f32.mrf.mxu0
        %v2555 = vadd.f32 0.0, %v2554
        %2556 = vmatmul.bf16.gmra.mxu0 %v2456
        %v2557 = vpop.f32.mrf.mxu0
        %v2558 = vadd.f32 0.0, %v2557
        %v2559 = vpop.f32.mrf.mxu0
        %v2560 = vadd.f32 0.0, %v2559
        %2561 = vdwg.mxu0
        %v2562 = vadd.f32 %v2384, %v2523
        %v2563 = vadd.f32 %v2386, %v2525
        %v2564 = vadd.f32 %v2389, %v2528
        %v2565 = vadd.f32 %v2391, %v2530
        %v2566 = vadd.f32 %v2394, %v2533
        %v2567 = vadd.f32 %v2396, %v2535
        %v2568 = vadd.f32 %v2399, %v2538
        %v2569 = vadd.f32 %v2401, %v2540
        %v2570 = vadd.f32 %v2404, %v2543
        %v2571 = vadd.f32 %v2406, %v2545
        %v2572 = vadd.f32 %v2409, %v2548
        %v2573 = vadd.f32 %v2411, %v2550
        %v2574 = vadd.f32 %v2414, %v2553
        %v2575 = vadd.f32 %v2416, %v2555
        %v2576 = vadd.f32 %v2419, %v2558
        %v2577 = vadd.f32 %v2421, %v2560
        %v2578 = vld [vmem:[#allocation10 + $0x2] sm:$0x1]
        %v2579 = vperm.slane %v2578, 0
        %v2580 = vadd.f32 %v2562, %v2579
        %v2581 = vadd.f32 %v2563, %v2579
        %v2582 = vadd.f32 %v2564, %v2579
        %v2583 = vadd.f32 %v2565, %v2579
        %v2584 = vadd.f32 %v2566, %v2579
        %v2585 = vadd.f32 %v2567, %v2579
        %v2586 = vadd.f32 %v2568, %v2579
        %v2587 = vadd.f32 %v2569, %v2579
        %v2588 = vadd.f32 %v2570, %v2579
        %v2589 = vadd.f32 %v2571, %v2579
        %v2590 = vadd.f32 %v2572, %v2579
        %v2591 = vadd.f32 %v2573, %v2579
        %v2592 = vadd.f32 %v2574, %v2579
        %v2593 = vadd.f32 %v2575, %v2579
        %v2594 = vadd.f32 %v2576, %v2579
        %v2595 = vadd.f32 %v2577, %v2579
        %v2596 = vmax.f32 %v2580, 0.0
        %v2597 = vmax.f32 %v2581, 0.0
        %v2598 = vmax.f32 %v2582, 0.0
        %v2599 = vmax.f32 %v2583, 0.0
        %v2600 = vmax.f32 %v2584, 0.0
        %v2601 = vmax.f32 %v2585, 0.0
        %v2602 = vmax.f32 %v2586, 0.0
        %v2603 = vmax.f32 %v2587, 0.0
        %v2604 = vmax.f32 %v2588, 0.0
        %v2605 = vmax.f32 %v2589, 0.0
        %v2606 = vmax.f32 %v2590, 0.0
        %v2607 = vmax.f32 %v2591, 0.0
        %v2608 = vmax.f32 %v2592, 0.0
        %v2609 = vmax.f32 %v2593, 0.0
        %v2610 = vmax.f32 %v2594, 0.0
        %v2611 = vmax.f32 %v2595, 0.0
        %v2612 = vpack.c.bf16 %v2597, %v2596
        %v2613 = vpack.c.bf16 %v2599, %v2598
        %v2614 = vpack.c.bf16 %v2601, %v2600
        %v2615 = vpack.c.bf16 %v2603, %v2602
        %v2616 = vpack.c.bf16 %v2605, %v2604
        %v2617 = vpack.c.bf16 %v2607, %v2606
        %v2618 = vpack.c.bf16 %v2609, %v2608
        %v2619 = vpack.c.bf16 %v2611, %v2610
        %2620 = vmatpush.bf16.msra.mxu0 %v2619
        %2621 = vmatpush.bf16.msra.mxu0 %v2618
        %2622 = vmatpush.bf16.msra.mxu0 %v2617
        %2623 = vmatpush.bf16.msra.mxu0 %v2616
        %2624 = vmatpush.bf16.msra.mxu0 %v2615
        %2625 = vmatpush.bf16.msra.mxu0 %v2614
        %2626 = vmatpush.bf16.msra.mxu0 %v2613
        %2627 = vmatpush.bf16.msra.mxu0 %v2612
        %2628 = vmatmul.bf16.gmra.mxu0 %v657
        %v2629 = vpop.f32.mrf.mxu0
        %v2630 = vadd.f32 0.0, %v2629
        %v2631 = vpop.f32.mrf.mxu0
        %v2632 = vadd.f32 0.0, %v2631
        %2633 = vmatmul.bf16.gmra.mxu0 %v658
        %v2634 = vpop.f32.mrf.mxu0
        %v2635 = vadd.f32 0.0, %v2634
        %v2636 = vpop.f32.mrf.mxu0
        %v2637 = vadd.f32 0.0, %v2636
        %2638 = vmatmul.bf16.gmra.mxu0 %v659
        %v2639 = vpop.f32.mrf.mxu0
        %v2640 = vadd.f32 0.0, %v2639
        %v2641 = vpop.f32.mrf.mxu0
        %v2642 = vadd.f32 0.0, %v2641
        %2643 = vmatmul.bf16.gmra.mxu0 %v660
        %v2644 = vpop.f32.mrf.mxu0
        %v2645 = vadd.f32 0.0, %v2644
        %v2646 = vpop.f32.mrf.mxu0
        %v2647 = vadd.f32 0.0, %v2646
        %2648 = vdwg.mxu0
        %2649 = vmatpush.bf16.msra.mxu0 %v2619
        %2650 = vmatpush.bf16.msra.mxu0 %v2618
        %2651 = vmatpush.bf16.msra.mxu0 %v2617
        %2652 = vmatpush.bf16.msra.mxu0 %v2616
        %2653 = vmatpush.bf16.msra.mxu0 %v2615
        %2654 = vmatpush.bf16.msra.mxu0 %v2614
        %2655 = vmatpush.bf16.msra.mxu0 %v2613
        %2656 = vmatpush.bf16.msra.mxu0 %v2612
        %2657 = vmatmul.bf16.gmra.mxu0 %v693
        %v2658 = vpop.f32.mrf.mxu0
        %v2659 = vadd.f32 0.0, %v2658
        %v2660 = vpop.f32.mrf.mxu0
        %v2661 = vadd.f32 0.0, %v2660
        %2662 = vmatmul.bf16.gmra.mxu0 %v694
        %v2663 = vpop.f32.mrf.mxu0
        %v2664 = vadd.f32 0.0, %v2663
        %v2665 = vpop.f32.mrf.mxu0
        %v2666 = vadd.f32 0.0, %v2665
        %2667 = vmatmul.bf16.gmra.mxu0 %v695
        %v2668 = vpop.f32.mrf.mxu0
        %v2669 = vadd.f32 0.0, %v2668
        %v2670 = vpop.f32.mrf.mxu0
        %v2671 = vadd.f32 0.0, %v2670
        %2672 = vmatmul.bf16.gmra.mxu0 %v696
        %v2673 = vpop.f32.mrf.mxu0
        %v2674 = vadd.f32 0.0, %v2673
        %v2675 = vpop.f32.mrf.mxu0
        %v2676 = vadd.f32 0.0, %v2675
        %2677 = vdwg.mxu0
        %v2678 = vmax.f32 %v2630, %v2659
        %v2679 = vmax.f32 %v2632, %v2661
        %v2680 = vmax.f32 %v2635, %v2664
        %v2681 = vmax.f32 %v2637, %v2666
        %v2682 = vmax.f32 %v2640, %v2669
        %v2683 = vmax.f32 %v2642, %v2671
        %v2684 = vmax.f32 %v2645, %v2674
        %v2685 = vmax.f32 %v2647, %v2676
        %2686 = vst [vmem:[#allocation2 + $0x2] sm:$0x3] %v2678
        %2687 = vst [vmem:[#allocation2 + $0x4] sm:$0x3] 0.0
        %2688 = vst [vmem:[#allocation2 + $0x12] sm:$0x3] %v2679
        %2689 = vst [vmem:[#allocation2 + $0x14] sm:$0x3] 0.0
        %2690 = vst [vmem:[#allocation2 + $0x22] sm:$0x3] %v2680
        %2691 = vst [vmem:[#allocation2 + $0x24] sm:$0x3] 0.0
        %2692 = vst [vmem:[#allocation2 + $0x32] sm:$0x3] %v2681
        %2693 = vst [vmem:[#allocation2 + $0x34] sm:$0x3] 0.0
        %2694 = vst [vmem:[#allocation2 + $0x42] sm:$0x3] %v2682
        %2695 = vst [vmem:[#allocation2 + $0x44] sm:$0x3] 0.0
        %2696 = vst [vmem:[#allocation2 + $0x52] sm:$0x3] %v2683
        %2697 = vst [vmem:[#allocation2 + $0x54] sm:$0x3] 0.0
        %2698 = vst [vmem:[#allocation2 + $0x62] sm:$0x3] %v2684
        %2699 = vst [vmem:[#allocation2 + $0x64] sm:$0x3] 0.0
        %2700 = vst [vmem:[#allocation2 + $0x72] sm:$0x3] %v2685
        %2701 = vst [vmem:[#allocation2 + $0x74] sm:$0x3] 0.0
        %v2702 = vld [vmem:[#allocation2] sm:$0xff]
        %v2703 = vld [vmem:[#allocation2 + $0x8] sm:$0xff]
        %v2704 = vld [vmem:[#allocation2 + $0x10] sm:$0xff]
        %v2705 = vld [vmem:[#allocation2 + $0x18] sm:$0xff]
        %v2706 = vld [vmem:[#allocation2 + $0x20] sm:$0xff]
        %v2707 = vld [vmem:[#allocation2 + $0x28] sm:$0xff]
        %v2708 = vld [vmem:[#allocation2 + $0x30] sm:$0xff]
        %v2709 = vld [vmem:[#allocation2 + $0x38] sm:$0xff]
        %v2710 = vld [vmem:[#allocation2 + $0x40] sm:$0xff]
        %v2711 = vld [vmem:[#allocation2 + $0x48] sm:$0xff]
        %v2712 = vld [vmem:[#allocation2 + $0x50] sm:$0xff]
        %v2713 = vld [vmem:[#allocation2 + $0x58] sm:$0xff]
        %v2714 = vld [vmem:[#allocation2 + $0x60] sm:$0xff]
        %v2715 = vld [vmem:[#allocation2 + $0x68] sm:$0xff]
        %v2716 = vld [vmem:[#allocation2 + $0x70] sm:$0xff]
        %v2717 = vld [vmem:[#allocation2 + $0x78] sm:$0xff]
        %v2718 = vld [vmem:[#allocation2 + $0x80] sm:$0xff]
        %v2719 = vpack.c.bf16 %v2702, %v2702
        %v2720 = vpack.c.bf16 %v2703, %v2703
        %v2721 = vpack.c.bf16 %v2704, %v2704
        %v2722 = vpack.c.bf16 %v2705, %v2705
        %v2723 = vpack.c.bf16 %v2706, %v2706
        %v2724 = vpack.c.bf16 %v2707, %v2707
        %v2725 = vpack.c.bf16 %v2708, %v2708
        %v2726 = vpack.c.bf16 %v2709, %v2709
        %v2727 = vpack.c.bf16 %v2710, %v2710
        %v2728 = vpack.c.bf16 %v2711, %v2711
        %v2729 = vpack.c.bf16 %v2712, %v2712
        %v2730 = vpack.c.bf16 %v2713, %v2713
        %v2731 = vpack.c.bf16 %v2714, %v2714
        %v2732 = vpack.c.bf16 %v2715, %v2715
        %v2733 = vpack.c.bf16 %v2716, %v2716
        %v2734 = vpack.c.bf16 %v2717, %v2717
        %v2735 = vpack.c.bf16 %v2718, %v2718
        %s2736 = scalar_lea.vmem [#allocation8], 576
        %v2737 = vld [vmem:[%s2736] sm:$0xf]
        %v2738 = vld [vmem:[%s2736 + $0x4] sm:$0xf]
        %v2739 = vld [vmem:[%s2736 + $0x8] sm:$0xf]
        %v2740 = vld [vmem:[%s2736 + $0xc] sm:$0xf]
        %v2741 = vld [vmem:[%s2736 + $0x10] sm:$0xf]
        %v2742 = vld [vmem:[%s2736 + $0x14] sm:$0xf]
        %v2743 = vld [vmem:[%s2736 + $0x18] sm:$0xf]
        %v2744 = vld [vmem:[%s2736 + $0x1c] sm:$0xf]
        %v2745 = vld [vmem:[%s2736 + $0x20] sm:$0xf]
        %v2746 = vld [vmem:[%s2736 + $0x24] sm:$0xf]
        %v2747 = vld [vmem:[%s2736 + $0x28] sm:$0xf]
        %v2748 = vld [vmem:[%s2736 + $0x2c] sm:$0xf]
        %v2749 = vld [vmem:[%s2736 + $0x30] sm:$0xf]
        %v2750 = vld [vmem:[%s2736 + $0x34] sm:$0xf]
        %v2751 = vld [vmem:[%s2736 + $0x38] sm:$0xf]
        %v2752 = vld [vmem:[%s2736 + $0x3c] sm:$0xf]
        %s2753 = scalar_lea.vmem [#allocation8], 640
        %v2754 = vld [vmem:[%s2753] sm:$0xf]
        %v2755 = vld [vmem:[%s2753 + $0x4] sm:$0xf]
        %v2756 = vld [vmem:[%s2753 + $0x8] sm:$0xf]
        %v2757 = vld [vmem:[%s2753 + $0xc] sm:$0xf]
        %v2758 = vld [vmem:[%s2753 + $0x10] sm:$0xf]
        %v2759 = vld [vmem:[%s2753 + $0x14] sm:$0xf]
        %v2760 = vld [vmem:[%s2753 + $0x18] sm:$0xf]
        %v2761 = vld [vmem:[%s2753 + $0x1c] sm:$0xf]
        %v2762 = vld [vmem:[%s2753 + $0x20] sm:$0xf]
        %v2763 = vld [vmem:[%s2753 + $0x24] sm:$0xf]
        %v2764 = vld [vmem:[%s2753 + $0x28] sm:$0xf]
        %v2765 = vld [vmem:[%s2753 + $0x2c] sm:$0xf]
        %v2766 = vld [vmem:[%s2753 + $0x30] sm:$0xf]
        %v2767 = vld [vmem:[%s2753 + $0x34] sm:$0xf]
        %v2768 = vld [vmem:[%s2753 + $0x38] sm:$0xf]
        %v2769 = vld [vmem:[%s2753 + $0x3c] sm:$0xf]
        %v2787 = vunpack.c.l.b16 %v2719
        %v2788 = vunpack.c.l.b16 %v2720
        %v2789 = vunpack.c.l.b16 %v2721
        %v2790 = vunpack.c.l.b16 %v2722
        %v2791 = vunpack.c.l.b16 %v2723
        %v2792 = vunpack.c.l.b16 %v2724
        %v2793 = vunpack.c.l.b16 %v2725
        %v2794 = vunpack.c.l.b16 %v2726
        %v2795 = vunpack.c.l.b16 %v2727
        %v2796 = vunpack.c.l.b16 %v2728
        %v2797 = vunpack.c.l.b16 %v2729
        %v2798 = vunpack.c.l.b16 %v2730
        %v2799 = vunpack.c.l.b16 %v2731
        %v2800 = vunpack.c.l.b16 %v2732
        %v2801 = vunpack.c.l.b16 %v2733
        %v2802 = vunpack.c.l.b16 %v2734
        %v2803 = vunpack.c.l.b16 %v2735
        %v2804 = vpack.c.b16 %v2788, %v2787
        %v2805 = vpack.c.b16 %v2790, %v2789
        %v2806 = vpack.c.b16 %v2792, %v2791
        %v2807 = vpack.c.b16 %v2794, %v2793
        %v2808 = vpack.c.b16 %v2796, %v2795
        %v2809 = vpack.c.b16 %v2798, %v2797
        %v2810 = vpack.c.b16 %v2800, %v2799
        %v2811 = vpack.c.b16 %v2802, %v2801
        %v2812 = vpack.c.b16 %v2803, %v2803
        %v2814 = vshrl.u32 %v2804, 16
        %v2816 = vshll.u32 %v2804, 16
        %v2818 = vrot.slane %v2816, 1
        %v2819 = vor.u32 %v2814, %v2818
        %v2821 = vshll.u32 %v2805, 16
        %v2823 = vrot.slane %v2821, 1
        %v2824 = vsel %vm807, %v2819, %v2823
        %v2825 = vshrl.u32 %v2805, 16
        %v2827 = vor.u32 %v2825, %v2823
        %v2829 = vshll.u32 %v2806, 16
        %v2831 = vrot.slane %v2829, 1
        %v2832 = vsel %vm807, %v2827, %v2831
        %v2833 = vshrl.u32 %v2806, 16
        %v2835 = vor.u32 %v2833, %v2831
        %v2837 = vshll.u32 %v2807, 16
        %v2839 = vrot.slane %v2837, 1
        %v2840 = vsel %vm807, %v2835, %v2839
        %v2841 = vshrl.u32 %v2807, 16
        %v2843 = vor.u32 %v2841, %v2839
        %v2845 = vshll.u32 %v2808, 16
        %v2847 = vrot.slane %v2845, 1
        %v2848 = vsel %vm807, %v2843, %v2847
        %v2849 = vshrl.u32 %v2808, 16
        %v2851 = vor.u32 %v2849, %v2847
        %v2853 = vshll.u32 %v2809, 16
        %v2855 = vrot.slane %v2853, 1
        %v2856 = vsel %vm807, %v2851, %v2855
        %v2857 = vshrl.u32 %v2809, 16
        %v2859 = vor.u32 %v2857, %v2855
        %v2861 = vshll.u32 %v2810, 16
        %v2863 = vrot.slane %v2861, 1
        %v2864 = vsel %vm807, %v2859, %v2863
        %v2865 = vshrl.u32 %v2810, 16
        %v2867 = vor.u32 %v2865, %v2863
        %v2869 = vshll.u32 %v2811, 16
        %v2871 = vrot.slane %v2869, 1
        %v2872 = vsel %vm807, %v2867, %v2871
        %v2873 = vshrl.u32 %v2811, 16
        %v2875 = vor.u32 %v2873, %v2871
        %v2877 = vshll.u32 %v2812, 16
        %v2879 = vrot.slane %v2877, 1
        %v2880 = vsel %vm807, %v2875, %v2879
        %v2905 = vunpack.c.l.b16 %v2754
        %v2906 = vunpack.c.l.b16 %v2755
        %v2907 = vunpack.c.l.b16 %v2756
        %v2908 = vunpack.c.l.b16 %v2757
        %v2909 = vunpack.c.l.b16 %v2758
        %v2910 = vunpack.c.l.b16 %v2759
        %v2911 = vunpack.c.l.b16 %v2760
        %v2912 = vunpack.c.l.b16 %v2761
        %v2913 = vunpack.c.l.b16 %v2762
        %v2914 = vunpack.c.l.b16 %v2763
        %v2915 = vunpack.c.l.b16 %v2764
        %v2916 = vunpack.c.l.b16 %v2765
        %v2917 = vunpack.c.l.b16 %v2766
        %v2918 = vunpack.c.l.b16 %v2767
        %v2919 = vunpack.c.l.b16 %v2768
        %v2920 = vunpack.c.l.b16 %v2769
        %v2921 = vpack.c.b16 %v2906, %v2905
        %v2922 = vpack.c.b16 %v2908, %v2907
        %v2923 = vpack.c.b16 %v2910, %v2909
        %v2924 = vpack.c.b16 %v2912, %v2911
        %v2925 = vpack.c.b16 %v2914, %v2913
        %v2926 = vpack.c.b16 %v2916, %v2915
        %v2927 = vpack.c.b16 %v2918, %v2917
        %v2928 = vpack.c.b16 %v2920, %v2919
        %2937 = vmatpush.bf16.msra.mxu0 %v2928
        %2938 = vmatpush.bf16.msra.mxu0 %v2927
        %2939 = vmatpush.bf16.msra.mxu0 %v2926
        %2940 = vmatpush.bf16.msra.mxu0 %v2925
        %2941 = vmatpush.bf16.msra.mxu0 %v2924
        %2942 = vmatpush.bf16.msra.mxu0 %v2923
        %2943 = vmatpush.bf16.msra.mxu0 %v2922
        %2944 = vmatpush.bf16.msra.mxu0 %v2921
        %2945 = vmatmul.bf16.gmra.mxu0 %v2824
        %v2946 = vpop.f32.mrf.mxu0
        %v2947 = vadd.f32 0.0, %v2946
        %v2948 = vpop.f32.mrf.mxu0
        %2949 = vmatmul.bf16.gmra.mxu0 %v2832
        %v2950 = vpop.f32.mrf.mxu0
        %v2951 = vadd.f32 0.0, %v2950
        %v2952 = vpop.f32.mrf.mxu0
        %2953 = vmatmul.bf16.gmra.mxu0 %v2840
        %v2954 = vpop.f32.mrf.mxu0
        %v2955 = vadd.f32 0.0, %v2954
        %v2956 = vpop.f32.mrf.mxu0
        %2957 = vmatmul.bf16.gmra.mxu0 %v2848
        %v2958 = vpop.f32.mrf.mxu0
        %v2959 = vadd.f32 0.0, %v2958
        %v2960 = vpop.f32.mrf.mxu0
        %2961 = vmatmul.bf16.gmra.mxu0 %v2856
        %v2962 = vpop.f32.mrf.mxu0
        %v2963 = vadd.f32 0.0, %v2962
        %v2964 = vpop.f32.mrf.mxu0
        %2965 = vmatmul.bf16.gmra.mxu0 %v2864
        %v2966 = vpop.f32.mrf.mxu0
        %v2967 = vadd.f32 0.0, %v2966
        %v2968 = vpop.f32.mrf.mxu0
        %2969 = vmatmul.bf16.gmra.mxu0 %v2872
        %v2970 = vpop.f32.mrf.mxu0
        %v2971 = vadd.f32 0.0, %v2970
        %v2972 = vpop.f32.mrf.mxu0
        %2973 = vmatmul.bf16.gmra.mxu0 %v2880
        %v2974 = vpop.f32.mrf.mxu0
        %v2975 = vadd.f32 0.0, %v2974
        %v2976 = vpop.f32.mrf.mxu0
        %2977 = vdwg.mxu0
        %v3002 = vunpack.c.l.b16 %v2737
        %v3003 = vunpack.c.l.b16 %v2738
        %v3004 = vunpack.c.l.b16 %v2739
        %v3005 = vunpack.c.l.b16 %v2740
        %v3006 = vunpack.c.l.b16 %v2741
        %v3007 = vunpack.c.l.b16 %v2742
        %v3008 = vunpack.c.l.b16 %v2743
        %v3009 = vunpack.c.l.b16 %v2744
        %v3010 = vunpack.c.l.b16 %v2745
        %v3011 = vunpack.c.l.b16 %v2746
        %v3012 = vunpack.c.l.b16 %v2747
        %v3013 = vunpack.c.l.b16 %v2748
        %v3014 = vunpack.c.l.b16 %v2749
        %v3015 = vunpack.c.l.b16 %v2750
        %v3016 = vunpack.c.l.b16 %v2751
        %v3017 = vunpack.c.l.b16 %v2752
        %v3018 = vpack.c.b16 %v3003, %v3002
        %v3019 = vpack.c.b16 %v3005, %v3004
        %v3020 = vpack.c.b16 %v3007, %v3006
        %v3021 = vpack.c.b16 %v3009, %v3008
        %v3022 = vpack.c.b16 %v3011, %v3010
        %v3023 = vpack.c.b16 %v3013, %v3012
        %v3024 = vpack.c.b16 %v3015, %v3014
        %v3025 = vpack.c.b16 %v3017, %v3016
        %3034 = vmatpush.bf16.msra.mxu0 %v3025
        %3035 = vmatpush.bf16.msra.mxu0 %v3024
        %3036 = vmatpush.bf16.msra.mxu0 %v3023
        %3037 = vmatpush.bf16.msra.mxu0 %v3022
        %3038 = vmatpush.bf16.msra.mxu0 %v3021
        %3039 = vmatpush.bf16.msra.mxu0 %v3020
        %3040 = vmatpush.bf16.msra.mxu0 %v3019
        %3041 = vmatpush.bf16.msra.mxu0 %v3018
        %3042 = vmatmul.bf16.gmra.mxu0 %v2804
        %v3043 = vpop.f32.mrf.mxu0
        %v3044 = vadd.f32 %v2947, %v3043
        %v3045 = vpop.f32.mrf.mxu0
        %3046 = vmatmul.bf16.gmra.mxu0 %v2805
        %v3047 = vpop.f32.mrf.mxu0
        %v3048 = vadd.f32 %v2951, %v3047
        %v3049 = vpop.f32.mrf.mxu0
        %3050 = vmatmul.bf16.gmra.mxu0 %v2806
        %v3051 = vpop.f32.mrf.mxu0
        %v3052 = vadd.f32 %v2955, %v3051
        %v3053 = vpop.f32.mrf.mxu0
        %3054 = vmatmul.bf16.gmra.mxu0 %v2807
        %v3055 = vpop.f32.mrf.mxu0
        %v3056 = vadd.f32 %v2959, %v3055
        %v3057 = vpop.f32.mrf.mxu0
        %3058 = vmatmul.bf16.gmra.mxu0 %v2808
        %v3059 = vpop.f32.mrf.mxu0
        %v3060 = vadd.f32 %v2963, %v3059
        %v3061 = vpop.f32.mrf.mxu0
        %3062 = vmatmul.bf16.gmra.mxu0 %v2809
        %v3063 = vpop.f32.mrf.mxu0
        %v3064 = vadd.f32 %v2967, %v3063
        %v3065 = vpop.f32.mrf.mxu0
        %3066 = vmatmul.bf16.gmra.mxu0 %v2810
        %v3067 = vpop.f32.mrf.mxu0
        %v3068 = vadd.f32 %v2971, %v3067
        %v3069 = vpop.f32.mrf.mxu0
        %3070 = vmatmul.bf16.gmra.mxu0 %v2811
        %v3071 = vpop.f32.mrf.mxu0
        %v3072 = vadd.f32 %v2975, %v3071
        %v3073 = vpop.f32.mrf.mxu0
        %3074 = vdwg.mxu0
        %s3075 = scalar_lea.vmem [#allocation8], 704
        %v3076 = vld [vmem:[%s3075] sm:$0xf]
        %v3077 = vld [vmem:[%s3075 + $0x4] sm:$0xf]
        %v3078 = vld [vmem:[%s3075 + $0x8] sm:$0xf]
        %v3079 = vld [vmem:[%s3075 + $0xc] sm:$0xf]
        %v3080 = vld [vmem:[%s3075 + $0x10] sm:$0xf]
        %v3081 = vld [vmem:[%s3075 + $0x14] sm:$0xf]
        %v3082 = vld [vmem:[%s3075 + $0x18] sm:$0xf]
        %v3083 = vld [vmem:[%s3075 + $0x1c] sm:$0xf]
        %v3084 = vld [vmem:[%s3075 + $0x20] sm:$0xf]
        %v3085 = vld [vmem:[%s3075 + $0x24] sm:$0xf]
        %v3086 = vld [vmem:[%s3075 + $0x28] sm:$0xf]
        %v3087 = vld [vmem:[%s3075 + $0x2c] sm:$0xf]
        %v3088 = vld [vmem:[%s3075 + $0x30] sm:$0xf]
        %v3089 = vld [vmem:[%s3075 + $0x34] sm:$0xf]
        %v3090 = vld [vmem:[%s3075 + $0x38] sm:$0xf]
        %v3091 = vld [vmem:[%s3075 + $0x3c] sm:$0xf]
        %v3092 = vrot.slane %v2804, 1
        %v3093 = vrot.slane %v2805, 1
        %v3094 = vsel %vm1103, %v3092, %v3093
        %v3095 = vrot.slane %v2806, 1
        %v3096 = vsel %vm1103, %v3093, %v3095
        %v3097 = vrot.slane %v2807, 1
        %v3098 = vsel %vm1103, %v3095, %v3097
        %v3099 = vrot.slane %v2808, 1
        %v3100 = vsel %vm1103, %v3097, %v3099
        %v3101 = vrot.slane %v2809, 1
        %v3102 = vsel %vm1103, %v3099, %v3101
        %v3103 = vrot.slane %v2810, 1
        %v3104 = vsel %vm1103, %v3101, %v3103
        %v3105 = vrot.slane %v2811, 1
        %v3106 = vsel %vm1103, %v3103, %v3105
        %v3107 = vrot.slane %v2812, 1
        %v3108 = vsel %vm1103, %v3105, %v3107
        %v3133 = vunpack.c.l.b16 %v3076
        %v3134 = vunpack.c.l.b16 %v3077
        %v3135 = vunpack.c.l.b16 %v3078
        %v3136 = vunpack.c.l.b16 %v3079
        %v3137 = vunpack.c.l.b16 %v3080
        %v3138 = vunpack.c.l.b16 %v3081
        %v3139 = vunpack.c.l.b16 %v3082
        %v3140 = vunpack.c.l.b16 %v3083
        %v3141 = vunpack.c.l.b16 %v3084
        %v3142 = vunpack.c.l.b16 %v3085
        %v3143 = vunpack.c.l.b16 %v3086
        %v3144 = vunpack.c.l.b16 %v3087
        %v3145 = vunpack.c.l.b16 %v3088
        %v3146 = vunpack.c.l.b16 %v3089
        %v3147 = vunpack.c.l.b16 %v3090
        %v3148 = vunpack.c.l.b16 %v3091
        %v3149 = vpack.c.b16 %v3134, %v3133
        %v3150 = vpack.c.b16 %v3136, %v3135
        %v3151 = vpack.c.b16 %v3138, %v3137
        %v3152 = vpack.c.b16 %v3140, %v3139
        %v3153 = vpack.c.b16 %v3142, %v3141
        %v3154 = vpack.c.b16 %v3144, %v3143
        %v3155 = vpack.c.b16 %v3146, %v3145
        %v3156 = vpack.c.b16 %v3148, %v3147
        %3165 = vmatpush.bf16.msra.mxu0 %v3156
        %3166 = vmatpush.bf16.msra.mxu0 %v3155
        %3167 = vmatpush.bf16.msra.mxu0 %v3154
        %3168 = vmatpush.bf16.msra.mxu0 %v3153
        %3169 = vmatpush.bf16.msra.mxu0 %v3152
        %3170 = vmatpush.bf16.msra.mxu0 %v3151
        %3171 = vmatpush.bf16.msra.mxu0 %v3150
        %3172 = vmatpush.bf16.msra.mxu0 %v3149
        %3173 = vmatmul.bf16.gmra.mxu0 %v3094
        %v3174 = vpop.f32.mrf.mxu0
        %v3175 = vadd.f32 0.0, %v3174
        %v3176 = vpop.f32.mrf.mxu0
        %3177 = vmatmul.bf16.gmra.mxu0 %v3096
        %v3178 = vpop.f32.mrf.mxu0
        %v3179 = vadd.f32 0.0, %v3178
        %v3180 = vpop.f32.mrf.mxu0
        %3181 = vmatmul.bf16.gmra.mxu0 %v3098
        %v3182 = vpop.f32.mrf.mxu0
        %v3183 = vadd.f32 0.0, %v3182
        %v3184 = vpop.f32.mrf.mxu0
        %3185 = vmatmul.bf16.gmra.mxu0 %v3100
        %v3186 = vpop.f32.mrf.mxu0
        %v3187 = vadd.f32 0.0, %v3186
        %v3188 = vpop.f32.mrf.mxu0
        %3189 = vmatmul.bf16.gmra.mxu0 %v3102
        %v3190 = vpop.f32.mrf.mxu0
        %v3191 = vadd.f32 0.0, %v3190
        %v3192 = vpop.f32.mrf.mxu0
        %3193 = vmatmul.bf16.gmra.mxu0 %v3104
        %v3194 = vpop.f32.mrf.mxu0
        %v3195 = vadd.f32 0.0, %v3194
        %v3196 = vpop.f32.mrf.mxu0
        %3197 = vmatmul.bf16.gmra.mxu0 %v3106
        %v3198 = vpop.f32.mrf.mxu0
        %v3199 = vadd.f32 0.0, %v3198
        %v3200 = vpop.f32.mrf.mxu0
        %3201 = vmatmul.bf16.gmra.mxu0 %v3108
        %v3202 = vpop.f32.mrf.mxu0
        %v3203 = vadd.f32 0.0, %v3202
        %v3204 = vpop.f32.mrf.mxu0
        %3205 = vdwg.mxu0
        %v3206 = vadd.f32 %v3044, %v3175
        %v3207 = vadd.f32 %v3048, %v3179
        %v3208 = vadd.f32 %v3052, %v3183
        %v3209 = vadd.f32 %v3056, %v3187
        %v3210 = vadd.f32 %v3060, %v3191
        %v3211 = vadd.f32 %v3064, %v3195
        %v3212 = vadd.f32 %v3068, %v3199
        %v3213 = vadd.f32 %v3072, %v3203
        %v3214 = vld [vmem:[#allocation10 + $0x3] sm:$0x1]
        %v3215 = vperm.slane %v3214, 0
        %v3216 = vadd.f32 %v3206, %v3215
        %v3217 = vadd.f32 %v3207, %v3215
        %v3218 = vadd.f32 %v3208, %v3215
        %v3219 = vadd.f32 %v3209, %v3215
        %v3220 = vadd.f32 %v3210, %v3215
        %v3221 = vadd.f32 %v3211, %v3215
        %v3222 = vadd.f32 %v3212, %v3215
        %v3223 = vadd.f32 %v3213, %v3215
        %v3224 = vmax.f32 %v3216, 0.0
        %v3225 = vmax.f32 %v3217, 0.0
        %v3226 = vmax.f32 %v3218, 0.0
        %v3227 = vmax.f32 %v3219, 0.0
        %v3228 = vmax.f32 %v3220, 0.0
        %v3229 = vmax.f32 %v3221, 0.0
        %v3230 = vmax.f32 %v3222, 0.0
        %v3231 = vmax.f32 %v3223, 0.0
        %vm3232 = vcmask 1043456
        %v3233 = vsel %vm3232, %v3224, -inf
        %v3234 = vrot.slane %v3233, 4
        %v3235 = vmax.f32 %v3233, %v3234
        %v3236 = vrot.slane %v3235, 2
        %v3237 = vmax.f32 %v3235, %v3236
        %v3238 = vrot.slane %v3237, 1
        %v3239 = vmax.f32 %v3237, %v3238
        %v3240 = vsel %vm3232, %v3225, -inf
        %v3241 = vrot.slane %v3240, 4
        %v3242 = vmax.f32 %v3240, %v3241
        %v3243 = vrot.slane %v3242, 2
        %v3244 = vmax.f32 %v3242, %v3243
        %v3245 = vrot.slane %v3244, 1
        %v3246 = vmax.f32 %v3244, %v3245
        %v3247 = vsel %vm3232, %v3226, -inf
        %v3248 = vrot.slane %v3247, 4
        %v3249 = vmax.f32 %v3247, %v3248
        %v3250 = vrot.slane %v3249, 2
        %v3251 = vmax.f32 %v3249, %v3250
        %v3252 = vrot.slane %v3251, 1
        %v3253 = vmax.f32 %v3251, %v3252
        %v3254 = vsel %vm3232, %v3227, -inf
        %v3255 = vrot.slane %v3254, 4
        %v3256 = vmax.f32 %v3254, %v3255
        %v3257 = vrot.slane %v3256, 2
        %v3258 = vmax.f32 %v3256, %v3257
        %v3259 = vrot.slane %v3258, 1
        %v3260 = vmax.f32 %v3258, %v3259
        %v3261 = vsel %vm3232, %v3228, -inf
        %v3262 = vrot.slane %v3261, 4
        %v3263 = vmax.f32 %v3261, %v3262
        %v3264 = vrot.slane %v3263, 2
        %v3265 = vmax.f32 %v3263, %v3264
        %v3266 = vrot.slane %v3265, 1
        %v3267 = vmax.f32 %v3265, %v3266
        %v3268 = vsel %vm3232, %v3229, -inf
        %v3269 = vrot.slane %v3268, 4
        %v3270 = vmax.f32 %v3268, %v3269
        %v3271 = vrot.slane %v3270, 2
        %v3272 = vmax.f32 %v3270, %v3271
        %v3273 = vrot.slane %v3272, 1
        %v3274 = vmax.f32 %v3272, %v3273
        %v3275 = vsel %vm3232, %v3230, -inf
        %v3276 = vrot.slane %v3275, 4
        %v3277 = vmax.f32 %v3275, %v3276
        %v3278 = vrot.slane %v3277, 2
        %v3279 = vmax.f32 %v3277, %v3278
        %v3280 = vrot.slane %v3279, 1
        %v3281 = vmax.f32 %v3279, %v3280
        %v3282 = vsel %vm3232, %v3231, -inf
        %v3283 = vrot.slane %v3282, 4
        %v3284 = vmax.f32 %v3282, %v3283
        %v3285 = vrot.slane %v3284, 2
        %v3286 = vmax.f32 %v3284, %v3285
        %v3287 = vrot.slane %v3286, 1
        %v3288 = vmax.f32 %v3286, %v3287
        %vm3289 = vcmask 1040384
        %v3290 = vsel %vm3289, %v3239, %v3246
        %vm3291 = vcmask 1041408
        %v3292 = vsel %vm3291, %v3290, %v3253
        %vm3293 = vcmask 1042432
        %v3294 = vsel %vm3293, %v3292, %v3260
        %v3295 = vsel %vm3232, %v3294, %v3267
        %vm3296 = vcmask 1044480
        %v3297 = vsel %vm3296, %v3295, %v3274
        %vm3298 = vcmask 1045504
        %v3299 = vsel %vm3298, %v3297, %v3281
        %vm3300 = vcmask 1046528
        %v3301 = vsel %vm3300, %v3299, %v3288
        %v3302 = vpack.c.bf16 %v3301, %v3301
        %v3303 = vld [vmem:[#allocation11] sm:$0xf]
        %v3304 = vld [vmem:[#allocation11 + $0x4] sm:$0xf]
        %v3305 = vld [vmem:[#allocation11 + $0x8] sm:$0xf]
        %v3306 = vld [vmem:[#allocation11 + $0xc] sm:$0xf]
        %v3307 = vld [vmem:[#allocation11 + $0x10] sm:$0xf]
        %v3308 = vld [vmem:[#allocation11 + $0x14] sm:$0xf]
        %v3309 = vld [vmem:[#allocation11 + $0x18] sm:$0xf]
        %v3310 = vld [vmem:[#allocation11 + $0x1c] sm:$0xf]
        %v3311 = vld [vmem:[#allocation11 + $0x20] sm:$0xf]
        %v3312 = vld [vmem:[#allocation11 + $0x24] sm:$0xf]
        %v3313 = vld [vmem:[#allocation11 + $0x28] sm:$0xf]
        %v3314 = vld [vmem:[#allocation11 + $0x2c] sm:$0xf]
        %v3315 = vld [vmem:[#allocation11 + $0x30] sm:$0xf]
        %v3316 = vld [vmem:[#allocation11 + $0x34] sm:$0xf]
        %v3317 = vld [vmem:[#allocation11 + $0x38] sm:$0xf]
        %v3318 = vld [vmem:[#allocation11 + $0x3c] sm:$0xf]
        %v3319 = vld [vmem:[%s5] sm:$0x1]
        %v3321 = vperm.slane %v3319, 0
        %v3339 = vunpack.c.l.b16 %v3303
        %v3340 = vunpack.c.l.b16 %v3304
        %v3341 = vunpack.c.l.b16 %v3305
        %v3342 = vunpack.c.l.b16 %v3306
        %v3343 = vunpack.c.l.b16 %v3307
        %v3344 = vunpack.c.l.b16 %v3308
        %v3345 = vunpack.c.l.b16 %v3309
        %v3346 = vunpack.c.l.b16 %v3310
        %v3347 = vunpack.c.l.b16 %v3311
        %v3348 = vunpack.c.l.b16 %v3312
        %v3349 = vunpack.c.l.b16 %v3313
        %v3350 = vunpack.c.l.b16 %v3314
        %v3351 = vunpack.c.l.b16 %v3315
        %v3352 = vunpack.c.l.b16 %v3316
        %v3353 = vunpack.c.l.b16 %v3317
        %v3354 = vunpack.c.l.b16 %v3318
        %v3355 = vpack.c.b16 %v3340, %v3339
        %v3356 = vpack.c.b16 %v3342, %v3341
        %v3357 = vpack.c.b16 %v3344, %v3343
        %v3358 = vpack.c.b16 %v3346, %v3345
        %v3359 = vpack.c.b16 %v3348, %v3347
        %v3360 = vpack.c.b16 %v3350, %v3349
        %v3361 = vpack.c.b16 %v3352, %v3351
        %v3362 = vpack.c.b16 %v3354, %v3353
        %3371 = vmatpush.bf16.msra.mxu0 %v3362
        %3372 = vmatpush.bf16.msra.mxu0 %v3361
        %3373 = vmatpush.bf16.msra.mxu0 %v3360
        %3374 = vmatpush.bf16.msra.mxu0 %v3359
        %3375 = vmatpush.bf16.msra.mxu0 %v3358
        %3376 = vmatpush.bf16.msra.mxu0 %v3357
        %3377 = vmatpush.bf16.msra.mxu0 %v3356
        %3378 = vmatpush.bf16.msra.mxu0 %v3355
        %3379 = vmatmul.bf16.gmra.mxu0 %v3302
        %v3380 = vpop.f32.mrf.mxu0
        %v3381 = vadd.f32 %v3321, %v3380
        %v3382 = vpop.f32.mrf.mxu0
        %3383 = vdwg.mxu0
        %v3384 = vtanh.pop %v3381
        %3385 = vst [vmem:[%s276] sm:$0xff] %v3384
        %s3386 = sand.u32 %s144, 1
        %s3387 = scalar_lea.sflag [#allocation7], %s3386
        %s3388 = sand.u32 %s144, 1
        %s3389 = smul.addr %s3388, 8
        %s3390 = scalar_lea.vmem [#allocation13], %s3389
        // Predicated region
        $region57: #{tpu_custom_call.1} parent=39 // pred_check
          %p3391 = pneg %p154
        $region58: #{tpu_custom_call.1} parent=39 // pred_check_branch
          %3393 = sbr.rel (%p3391) target = $region60
        $region59: #{tpu_custom_call.1} parent=39 // pred_region
          %3395 = vsyncadd %s3387, 0
          %s3396 = smul.addr %s31, 8
          %s3397 = scalar_lea.hbm %s6, %s3396
          %s3399 = sshll.u32 %s3390, 4
          %s3400 = int_to_ptr.vmem [resolvable:$true] %s3399
          %s3401 = sshll.u32 %s3397, 4
          %s3402 = int_to_ptr.hbm [resolvable:$true] %s3401
          %3404 = dma.vmem_to_hbm [thread:$0]  %s3400, 128, %s3402, %s3387
        $region60: #{tpu_custom_call.1} parent=39 // pred_fallthru
          _
      $region40: #{tpu_custom_call.1} parent=5 // pred_fallthru
        _
      %p3405 = scmp.le.s32.totalorder 2, %s26
      // Predicated region
      $region61: #{tpu_custom_call.1} parent=5 // pred_check
        %p3406 = pneg %p3405
      $region62: #{tpu_custom_call.1} parent=5 // pred_check_branch
        %3408 = sbr.rel (%p3406) target = $region64
      $region63: #{tpu_custom_call.1} parent=5 // pred_region
        %s3409 = ssub.s32 %s26, 2
        // Predicated region
        $region65: #{tpu_custom_call.1} parent=63 // pred_check
          %p3410 = pneg %p160
        $region66: #{tpu_custom_call.1} parent=63 // pred_check_branch
          %3412 = sbr.rel (%p3410) target = $region68
        $region67: #{tpu_custom_call.1} parent=63 // pred_region
          %s3413 = sand.u32 %s145, 1
          %s3414 = scalar_lea.sflag [#allocation7], %s3413
          %s3415 = sand.u32 %s145, 1
          %s3416 = smul.addr %s3415, 8
          %s3417 = scalar_lea.vmem [#allocation13], %s3416
          %3419 = dma.done %s3414, 128
        $region68: #{tpu_custom_call.1} parent=63 // pred_fallthru
          _
      $region64: #{tpu_custom_call.1} parent=5 // pred_fallthru
        _
    $region6: #{tpu_custom_call.1} parent=1 // loop_footer
      %s30 = sadd.s32 1, %s26
    $region7: #{tpu_custom_call.1} parent=1 // loop_footer_branch
      %25 = sbr.rel target = $region3
    $region8: #{tpu_custom_call.1} parent=1 // loop_exit
      _
    %3420 = vsyncpa [#allocation6], 1
    %s3421 = scalar_lea.sflag [#allocation6], 1
    %3422 = vsyncpa %s3421, 1
    %3423 = vsyncpa [#allocation9], 1
    %3424 = vsyncpa [#allocation12], 1
    %3425 = vsyncpa [#allocation7], 1
    %s3426 = scalar_lea.sflag [#allocation7], 1
    %3427 = vsyncpa %s3426, 1

</llo_original>
